<compile_context>
chip_gen: v7x
topology: tpu7x:2x2x1
jax: 0.10.0
libtpu: 0.0.40
codegen_flags: <defaults>
</compile_context>

<pallas_src>
import functools

import jax
import jax.numpy as jnp
from jax import lax
from jax.experimental import pallas as pl
from jax.experimental.pallas import tpu as pltpu


# --------------------------------------------------------------------------
# Per-generation tile / VMEM budget
# --------------------------------------------------------------------------
def _hw_tiles():
    try:
        vmem = int(pltpu.get_tpu_info().vmem_capacity_bytes)
    except Exception:
        vmem = 64 * 1024 * 1024                     # conservative (v7x-safe)
    if vmem >= 100 * 1024 * 1024:
        # v5e / v6e: 128 MiB physical VMEM -> big tiles, less weight re-stream
        return dict(vmem_limit=96 * 2**20, tm=1024, tm_mlp=512, tn=1024,
                    tf=512, tq=256, tkv=256)
    # v7x: 64 MiB VMEM per TensorCore -> smaller tiles, keep headroom
    return dict(vmem_limit=40 * 2**20, tm=512, tm_mlp=256, tn=512,
                tf=256, tq=128, tkv=128)


_T = _hw_tiles()
TM, TM_MLP, TN = _T["tm"], _T["tm_mlp"], _T["tn"]
TF, TQ, TKV = _T["tf"], _T["tq"], _T["tkv"]
VMEM_LIMIT = _T["vmem_limit"]


def _tile(total, target, align):
    """Largest legal block size <= target that divides `total`."""
    if total <= target:
        return total
    t = (min(target, total) // align) * align
    while t > 0:
        if total % t == 0:
            return t
        t -= align
    return total


# --------------------------------------------------------------------------
# Fused RMSNorm + matmul  (QKV projection, lm_head)
#   normalized activation cached in VMEM scratch at j==0, reused across j
# --------------------------------------------------------------------------
def _norm_matmul_kernel(x_ref, g_ref, w_ref, o_ref, xn_ref, *, eps):
    @pl.when(pl.program_id(1) == 0)
    def _():
        x = x_ref[...].astype(jnp.float32)                   # (tm, K)
        var = jnp.mean(x * x, axis=-1, keepdims=True)
        xn = x * lax.rsqrt(var + eps) * g_ref[...].astype(jnp.float32)
        xn_ref[...] = xn.astype(xn_ref.dtype)                # bf16 MXU operand

    o_ref[...] = jnp.dot(
        xn_ref[...], w_ref[...], preferred_element_type=jnp.float32
    ).astype(o_ref.dtype)


def norm_matmul(x, gamma, w, *, eps=1e-6, out_dtype=None):
    m, k = x.shape
    _, n = w.shape
    tm = _tile(m, TM, 8)
    tn = _tile(n, TN, 128)
    out_dtype = out_dtype or x.dtype
    return pl.pallas_call(
        functools.partial(_norm_matmul_kernel, eps=eps),
        out_shape=jax.ShapeDtypeStruct((m, n), out_dtype),
        grid=(m // tm, n // tn),
        in_specs=[
            pl.BlockSpec((tm, k), lambda i, j: (i, 0)),
            pl.BlockSpec((1, k), lambda i, j: (0, 0)),
            pl.BlockSpec((k, tn), lambda i, j: (0, j)),
        ],
        out_specs=pl.BlockSpec((tm, tn), lambda i, j: (i, j)),
        scratch_shapes=[pltpu.VMEM((tm, k), w.dtype)],
        compiler_params=pltpu.CompilerParams(
            dimension_semantics=("parallel", "arbitrary"),  # xn carried over j
            vmem_limit_bytes=VMEM_LIMIT),
    )(x, gamma.reshape(1, -1), w)


# --------------------------------------------------------------------------
# Tiled matmul with fused residual add  (attention output projection)
# --------------------------------------------------------------------------
def _matmul_res_kernel(x_ref, w_ref, r_ref, o_ref):
    acc = jnp.dot(x_ref[...], w_ref[...], preferred_element_type=jnp.float32)
    o_ref[...] = (r_ref[...].astype(jnp.float32) + acc).astype(o_ref.dtype)


def matmul_residual(x, w, res):
    m, k = x.shape
    _, n = w.shape
    tm = _tile(m, TM, 8)
    tn = _tile(n, TN, 128)
    return pl.pallas_call(
        _matmul_res_kernel,
        out_shape=jax.ShapeDtypeStruct((m, n), res.dtype),
        grid=(m // tm, n // tn),
        in_specs=[
            pl.BlockSpec((tm, k), lambda i, j: (i, 0)),
            pl.BlockSpec((k, tn), lambda i, j: (0, j)),
            pl.BlockSpec((tm, tn), lambda i, j: (i, j)),
        ],
        out_specs=pl.BlockSpec((tm, tn), lambda i, j: (i, j)),
        compiler_params=pltpu.CompilerParams(
            dimension_semantics=("parallel", "parallel"),
            vmem_limit_bytes=VMEM_LIMIT),
    )(x, w, res)


# --------------------------------------------------------------------------
# Fused RMSNorm + SwiGLU MLP + residual, tiled over d_ff with f32 accumulator
#   normalized activation cached in VMEM scratch at fi==0
# --------------------------------------------------------------------------
def _swiglu_kernel(x_ref, g_ref, wg_ref, wu_ref, wd_ref, o_ref,
                   acc_ref, xn_ref, *, eps):
    fi = pl.program_id(1)

    @pl.when(fi == 0)
    def _():
        acc_ref[...] = jnp.zeros_like(acc_ref)
        x = x_ref[...].astype(jnp.float32)                   # (tm, D)
        var = jnp.mean(x * x, axis=-1, keepdims=True)
        xn = x * lax.rsqrt(var + eps) * g_ref[...].astype(jnp.float32)
        xn_ref[...] = xn.astype(xn_ref.dtype)

    xn = xn_ref[...]
    g = jnp.dot(xn, wg_ref[...], preferred_element_type=jnp.float32)
    u = jnp.dot(xn, wu_ref[...], preferred_element_type=jnp.float32)
    h = (g * jax.nn.sigmoid(g)) * u                          # SiLU(gate) * up
    acc_ref[...] += jnp.dot(
        h.astype(wd_ref.dtype), wd_ref[...], preferred_element_type=jnp.float32)

    @pl.when(fi == pl.num_programs(1) - 1)
    def _():
        # residual add fused on the final d_ff step (residual == pre-norm x)
        o_ref[...] = (x_ref[...].astype(jnp.float32)
                      + acc_ref[...]).astype(o_ref.dtype)


def swiglu_residual(x, gamma, wg, wu, wd, *, eps=1e-6):
    m, d = x.shape
    f = wg.shape[1]
    tm = _tile(m, TM_MLP, 8)
    tf = _tile(f, TF, 128)
    return pl.pallas_call(
        functools.partial(_swiglu_kernel, eps=eps),
        out_shape=jax.ShapeDtypeStruct((m, d), x.dtype),
        grid=(m // tm, f // tf),
        in_specs=[
            pl.BlockSpec((tm, d), lambda i, fi: (i, 0)),
            pl.BlockSpec((1, d), lambda i, fi: (0, 0)),
            pl.BlockSpec((d, tf), lambda i, fi: (0, fi)),
            pl.BlockSpec((d, tf), lambda i, fi: (0, fi)),
            pl.BlockSpec((tf, d), lambda i, fi: (fi, 0)),
        ],
        out_specs=pl.BlockSpec((tm, d), lambda i, fi: (i, 0)),
        scratch_shapes=[pltpu.VMEM((tm, d), jnp.float32),
                        pltpu.VMEM((tm, d), wg.dtype)],
        compiler_params=pltpu.CompilerParams(
            dimension_semantics=("parallel", "arbitrary"),
            vmem_limit_bytes=VMEM_LIMIT),
    )(x, gamma.reshape(1, -1), wg, wu, wd)


# --------------------------------------------------------------------------
# Standalone RoPE kernel (applied once to K, outside the attention KV loop)
#   rotate_half(x) = roll(x, Dh/2) * sign   (XLU + VPU, no MXU)
# --------------------------------------------------------------------------
def _rotate_half(x, half):
    sign = jnp.where(
        lax.broadcasted_iota(jnp.int32, x.shape, x.ndim - 1) < half, -1.0, 1.0)
    return pltpu.roll(x, shift=half, axis=x.ndim - 1) * sign


def _rope_kernel(x_ref, cos_ref, sin_ref, o_ref, *, half):
    x = x_ref[0].astype(jnp.float32)                         # (H, t, Dh)
    xr = _rotate_half(x, half)
    o_ref[0] = (x * cos_ref[...][None]
                + xr * sin_ref[...][None]).astype(o_ref.dtype)


def apply_rope(x, cos, sin):
    """x: [B, H, S, Dh]; cos/sin: [S, Dh] (f32)."""
    b, h, s, dh = x.shape
    t = _tile(s, TQ, 8)
    return pl.pallas_call(
        functools.partial(_rope_kernel, half=dh // 2),
        out_shape=jax.ShapeDtypeStruct(x.shape, x.dtype),
        grid=(b, s // t),
        in_specs=[
            pl.BlockSpec((1, h, t, dh), lambda bi, si: (bi, 0, si, 0)),
            pl.BlockSpec((t, dh), lambda bi, si: (si, 0)),
            pl.BlockSpec((t, dh), lambda bi, si: (si, 0)),
        ],
        out_specs=pl.BlockSpec((1, h, t, dh), lambda bi, si: (bi, 0, si, 0)),
        compiler_params=pltpu.CompilerParams(
            dimension_semantics=("parallel", "parallel"),
            vmem_limit_bytes=VMEM_LIMIT),
    )(x, cos, sin)


# --------------------------------------------------------------------------
# Flash attention: heads batched, RoPE(Q) fused + cached, causal tile-skip
# --------------------------------------------------------------------------
def _flash_kernel(mask_ref, q_ref, k_ref, v_ref, cq_ref, sq_ref, o_ref,
                  q_sc, m_sc, l_sc, acc_sc, *, scale, half):
    qi = pl.program_id(1)
    ki = pl.program_id(2)
    nk = pl.num_programs(2)
    tq = q_ref.shape[2]
    tkv = k_ref.shape[2]

    @pl.when(ki == 0)
    def _():
        m_sc[...] = jnp.full_like(m_sc, -1e30)
        l_sc[...] = jnp.zeros_like(l_sc)
        acc_sc[...] = jnp.zeros_like(acc_sc)
        # RoPE(Q) * 1/sqrt(dh): computed ONCE per q-tile, cached as bf16 so the
        # score matmul runs as a native bf16 MXU op.
        q = q_ref[0].astype(jnp.float32)                     # (H, tq, Dh)
        qr = _rotate_half(q, half)
        q_rope = q * cq_ref[...][None] + qr * sq_ref[...][None]
        q_sc[...] = (q_rope * scale).astype(q_sc.dtype)

    # Skip KV tiles that are entirely above the causal diagonal.
    @pl.when(ki * tkv <= qi * tq + tq - 1)
    def _():
        k = k_ref[0]                                         # (H, tkv, Dh) bf16
        v = v_ref[0]
        s = jnp.einsum("hqd,hkd->hqk", q_sc[...], k,
                       preferred_element_type=jnp.float32)   # (H, tq, tkv)

        q_pos = qi * tq + lax.broadcasted_iota(jnp.int32, (tq, tkv), 0)
        k_pos = ki * tkv + lax.broadcasted_iota(jnp.int32, (tq, tkv), 1)
        causal = k_pos <= q_pos
        key_ok = mask_ref[0] > 0.0                           # (1, tkv)
        allowed = jnp.logical_and(causal, key_ok)            # (tq, tkv)
        s = jnp.where(allowed[None], s, -1e30)

        m_prev = m_sc[...]
        m_new = jnp.maximum(m_prev, jnp.max(s, axis=-1, keepdims=True))
        alpha = jnp.exp(m_prev - m_new)
        p = jnp.exp(s - m_new)
        l_sc[...] = alpha * l_sc[...] + jnp.sum(p, axis=-1, keepdims=True)
        acc_sc[...] = alpha * acc_sc[...] + jnp.einsum(
            "hqk,hkd->hqd", p.astype(v.dtype), v,
            preferred_element_type=jnp.float32)
        m_sc[...] = m_new

    @pl.when(ki == nk - 1)
    def _():
        # NOTE: fully-masked (padded) query rows degrade to a uniform softmax
        # over masked keys; harmless since those logits are never used.
        out = acc_sc[...] * pl.reciprocal(l_sc[...], approx=True)
        o_ref[0] = out.astype(o_ref.dtype)


def flash_attention(q, k_roped, v, attn_mask, cos, sin):
    """q: un-roped [B,H,S,Dh]; k_roped: RoPE already applied; mask: [B,S]."""
    b, h, s, dh = q.shape
    scale = 1.0 / (dh ** 0.5)
    tq = _tile(s, TQ, 8)
    tkv = _tile(s, TKV, 8)
    mask3 = attn_mask.astype(jnp.float32).reshape(b, 1, s)
    return pl.pallas_call(
        functools.partial(_flash_kernel, scale=scale, half=dh // 2),
        out_shape=jax.ShapeDtypeStruct((b, h, s, dh), q.dtype),
        grid=(b, s // tq, s // tkv),
        in_specs=[
            pl.BlockSpec((1, 1, tkv), lambda bi, qi, ki: (bi, 0, ki)),
            pl.BlockSpec((1, h, tq, dh), lambda bi, qi, ki: (bi, 0, qi, 0)),
            pl.BlockSpec((1, h, tkv, dh), lambda bi, qi, ki: (bi, 0, ki, 0)),
            pl.BlockSpec((1, h, tkv, dh), lambda bi, qi, ki: (bi, 0, ki, 0)),
            pl.BlockSpec((tq, dh), lambda bi, qi, ki: (qi, 0)),
            pl.BlockSpec((tq, dh), lambda bi, qi, ki: (qi, 0)),
        ],
        out_specs=pl.BlockSpec((1, h, tq, dh), lambda bi, qi, ki: (bi, 0, qi, 0)),
        scratch_shapes=[
            pltpu.VMEM((h, tq, dh), q.dtype),      # cached RoPE'd + scaled Q
            pltpu.VMEM((h, tq, 1), jnp.float32),   # running max
            pltpu.VMEM((h, tq, 1), jnp.float32),   # running denom
            pltpu.VMEM((h, tq, dh), jnp.float32),  # output accumulator
        ],
        compiler_params=pltpu.CompilerParams(
            dimension_semantics=("parallel", "parallel", "arbitrary"),
            vmem_limit_bytes=VMEM_LIMIT),
    )(mask3, q, k_roped, v, cos, sin)


# --------------------------------------------------------------------------
# RoPE tables (plain JAX, tiny)
# --------------------------------------------------------------------------
def rope_tables(s, dh, base=10000.0):
    inv_freq = 1.0 / (base ** (jnp.arange(0, dh, 2, dtype=jnp.float32) / dh))
    t = jnp.arange(s, dtype=jnp.float32)
    freqs = jnp.outer(t, inv_freq)
    emb = jnp.concatenate([freqs, freqs], axis=-1)            # (S, Dh)
    return jnp.cos(emb), jnp.sin(emb)


# --------------------------------------------------------------------------
# Parameters & forward
# --------------------------------------------------------------------------
def init_params(key, cfg, dtype=jnp.bfloat16):
    d, f, v = cfg["d_model"], cfg["d_ff"], cfg["vocab"]
    keys = jax.random.split(key, 2 + 5 * cfg["n_layers"])
    it = iter(keys)
    std = 0.02

    def w(k, shape):
        return (std * jax.random.normal(k, shape, jnp.float32)).astype(dtype)

    params = {
        "embed": w(next(it), (v, d)),
        "lm_head": w(next(it), (d, v)),
        "lnf": jnp.ones((d,), jnp.float32),
        "layers": [],
    }
    for _ in range(cfg["n_layers"]):
        params["layers"].append({
            "ln1": jnp.ones((d,), jnp.float32),
            "wqkv": w(next(it), (d, 3 * d)),     # fused [Wq | Wk | Wv]
            "wo": w(next(it), (d, d)),
            "ln2": jnp.ones((d,), jnp.float32),
            "wg": w(next(it), (d, f)),
            "wu": w(next(it), (d, f)),
            "wd": w(next(it), (f, d)),
        })
    return params


def forward(params, input_ids, attention_mask, *, cfg):
    """Equivalent of AdvancedModel.forward -> logits [B, S, vocab]."""
    b, s = input_ids.shape
    d = cfg["d_model"]
    nh = cfg["n_heads"]
    dh = d // nh

    h2 = jnp.take(params["embed"], input_ids, axis=0).reshape(b * s, d)
    cos, sin = rope_tables(s, dh)

    for layer in params["layers"]:
        # --- attention block: fused RMSNorm+QKV, RoPE+flash attn, fused Wo+res
        qkv = norm_matmul(h2, layer["ln1"], layer["wqkv"])        # [M, 3D]
        qkv = qkv.reshape(b, s, 3, nh, dh).transpose(2, 0, 3, 1, 4)
        q, k, v = qkv[0], qkv[1], qkv[2]                          # [B, H, S, Dh]
        k = apply_rope(k, cos, sin)              # RoPE(K) once, outside KV loop
        a = flash_attention(q, k, v, attention_mask, cos, sin)
        a2 = a.transpose(0, 2, 1, 3).reshape(b * s, d)
        h2 = matmul_residual(a2, layer["wo"], h2)

        # --- MLP block: fused RMSNorm + SwiGLU + residual
        h2 = swiglu_residual(h2, layer["ln2"], layer["wg"], layer["wu"],
                             layer["wd"])

    logits = norm_matmul(h2, params["lnf"], params["lm_head"],
                         out_dtype=jnp.float32)
    return logits.reshape(b, s, cfg["vocab"])


# --------------------------------------------------------------------------
if __name__ == "__main__":
    # small Llama-style config; head_dim = 128 matches the real model family
    cfg = dict(vocab=512, d_model=256, n_heads=2, n_layers=2, d_ff=512)
    B, S = 2, 8

    key = jax.random.PRNGKey(0)
    k_param, k_ids = jax.random.split(key)
    params = init_params(k_param, cfg)

    input_ids = jax.random.randint(k_ids, (B, S), 0, cfg["vocab"], dtype=jnp.int32)
    attention_mask = jnp.ones((B, S), jnp.int32)
    attention_mask = attention_mask.at[1, S - 2:].set(0)      # right padding, batch 1

    fwd = jax.jit(functools.partial(forward, cfg=cfg))
    logits = fwd(params, input_ids, attention_mask)
    logits = jax.block_until_ready(logits)

    assert logits.shape == (B, S, cfg["vocab"])
    assert bool(jnp.all(jnp.isfinite(logits)))
    print("KERNEL_OK")
</pallas_src>

<mosaic_0001>
module attributes {stable_mosaic.version = 11 : i64} {
  func.func @_norm_matmul_kernel(%arg0: i32, %arg1: i32, %arg2: memref<16x256xbf16, #tpu.memory_space<vmem>>, %arg3: memref<1x256xf32, #tpu.memory_space<vmem>>, %arg4: memref<256x384xbf16, #tpu.memory_space<vmem>>, %arg5: memref<16x384xbf16, #tpu.memory_space<vmem>>, %arg6: memref<16x256xbf16, #tpu.memory_space<vmem>>) attributes {dimension_semantics = [#tpu.dimension_semantics<parallel>, #tpu.dimension_semantics<arbitrary>], iteration_bounds = array<i64: 1, 2>, scalar_prefetch = 0 : i64, scratch_operands = 1 : i64, tpu.core_type = #tpu.core_type<tc>, window_params = [{transform_indices = @transform_0, window_bounds = array<i64: 16, 256>}, {pipeline_mode = #tpu.pipeline_mode<synchronous>, transform_indices = @transform_1, window_bounds = array<i64: 1, 256>}, {transform_indices = @transform_2, window_bounds = array<i64: 256, 384>}, {transform_indices = @transform_3, window_bounds = array<i64: 16, 384>}]} {
    %c0_i32 = arith.constant 0 : i32
    %0 = arith.cmpi eq, %arg1, %c0_i32 : i32
    %1 = arith.extui %0 : i1 to i32
    %c0_i32_0 = arith.constant 0 : i32
    %2 = arith.cmpi ne, %1, %c0_i32_0 : i32
    scf.if %2 {
      %c0_6 = arith.constant 0 : index
      %c0_7 = arith.constant 0 : index
      %8 = vector.load %arg2[%c0_6, %c0_7] : memref<16x256xbf16, #tpu.memory_space<vmem>>, vector<16x256xbf16>
      %9 = arith.extf %8 : vector<16x256xbf16> to vector<16x256xf32>
      %10 = arith.mulf %9, %9 : vector<16x256xf32>
      %cst_8 = arith.constant dense<0.000000e+00> : vector<16xf32>
      %11 = vector.multi_reduction <add>, %10, %cst_8 [1] : vector<16x256xf32> to vector<16xf32>
      %12 = vector.shape_cast %11 : vector<16xf32> to vector<16x1xf32>
      %cst_9 = arith.constant 2.560000e+02 : f32
      %13 = vector.broadcast %cst_9 : f32 to vector<16x1xf32>
      %14 = arith.divf %12, %13 : vector<16x1xf32>
      %cst_10 = arith.constant 9.99999997E-7 : f32
      %15 = vector.broadcast %cst_10 : f32 to vector<16x1xf32>
      %16 = arith.addf %14, %15 : vector<16x1xf32>
      %17 = math.rsqrt %16 : vector<16x1xf32>
      %18 = vector.broadcast %17 : vector<16x1xf32> to vector<16x256xf32>
      %19 = arith.mulf %9, %18 : vector<16x256xf32>
      %c0_11 = arith.constant 0 : index
      %c0_12 = arith.constant 0 : index
      %20 = vector.load %arg3[%c0_11, %c0_12] : memref<1x256xf32, #tpu.memory_space<vmem>>, vector<1x256xf32>
      %21 = vector.broadcast %20 : vector<1x256xf32> to vector<16x256xf32>
      %22 = arith.mulf %19, %21 : vector<16x256xf32>
      %23 = arith.truncf %22 : vector<16x256xf32> to vector<16x256xbf16>
      %c0_13 = arith.constant 0 : index
      %c0_14 = arith.constant 0 : index
      %24 = vector.load %arg6[%c0_13, %c0_14] : memref<16x256xbf16, #tpu.memory_space<vmem>>, vector<16x256xbf16>
      tpu.vector_store %arg6[%c0_13, %c0_14], %23 {strides = array<i32>} : memref<16x256xbf16, #tpu.memory_space<vmem>>, vector<16x256xbf16>,
    } else {
    }
    %c0 = arith.constant 0 : index
    %c0_1 = arith.constant 0 : index
    %3 = vector.load %arg6[%c0, %c0_1] : memref<16x256xbf16, #tpu.memory_space<vmem>>, vector<16x256xbf16>
    %c0_2 = arith.constant 0 : index
    %c0_3 = arith.constant 0 : index
    %4 = vector.load %arg4[%c0_2, %c0_3] : memref<256x384xbf16, #tpu.memory_space<vmem>>, vector<256x384xbf16>
    %cst = arith.constant dense<0.000000e+00> : vector<16x384xf32>
    %5 = tpu.matmul %3, %4, %cst {dimension_numbers = #tpu.dot_dimension_numbers<[1], [0], [0], [1], [0, 0, 1, 1], [], []>} : vector<16x256xbf16>, vector<256x384xbf16>, vector<16x384xf32> -> vector<16x384xf32>
    %6 = arith.truncf %5 : vector<16x384xf32> to vector<16x384xbf16>
    %c0_4 = arith.constant 0 : index
    %c0_5 = arith.constant 0 : index
    %7 = vector.load %arg5[%c0_4, %c0_5] : memref<16x384xbf16, #tpu.memory_space<vmem>>, vector<16x384xbf16>
    tpu.vector_store %arg5[%c0_4, %c0_5], %6 {strides = array<i32>} : memref<16x384xbf16, #tpu.memory_space<vmem>>, vector<16x384xbf16>,
    return
  }
  func.func @transform_0(%arg0: i32, %arg1: i32) -> (i32, i32) {
    %c0_i32 = arith.constant 0 : i32
    %c0_i32_0 = arith.constant 0 : i32
    return %arg0, %c0_i32 : i32, i32
  }
  func.func @transform_1(%arg0: i32, %arg1: i32) -> (i32, i32) {
    %c0_i32 = arith.constant 0 : i32
    %c0_i32_0 = arith.constant 0 : i32
    %c0_i32_1 = arith.constant 0 : i32
    return %c0_i32, %c0_i32_0 : i32, i32
  }
  func.func @transform_2(%arg0: i32, %arg1: i32) -> (i32, i32) {
    %c0_i32 = arith.constant 0 : i32
    %c0_i32_0 = arith.constant 0 : i32
    return %c0_i32, %arg1 : i32, i32
  }
  func.func @transform_3(%arg0: i32, %arg1: i32) -> (i32, i32) {
    %c0_i32 = arith.constant 0 : i32
    return %arg0, %arg1 : i32, i32
  }
}

module attributes {stable_mosaic.version = 11 : i64} {
  func.func @_rope_kernel(%arg0: i32, %arg1: i32, %arg2: memref<1x2x8x128xbf16, #tpu.memory_space<vmem>>, %arg3: memref<8x128xf32, #tpu.memory_space<vmem>>, %arg4: memref<8x128xf32, #tpu.memory_space<vmem>>, %arg5: memref<1x2x8x128xbf16, #tpu.memory_space<vmem>>) attributes {dimension_semantics = [#tpu.dimension_semantics<parallel>, #tpu.dimension_semantics<parallel>], iteration_bounds = array<i64: 2, 1>, scalar_prefetch = 0 : i64, scratch_operands = 0 : i64, tpu.core_type = #tpu.core_type<tc>, window_params = [{transform_indices = @transform_0, window_bounds = array<i64: 1, 2, 8, 128>}, {transform_indices = @transform_1, window_bounds = array<i64: 8, 128>}, {transform_indices = @transform_2, window_bounds = array<i64: 8, 128>}, {transform_indices = @transform_3, window_bounds = array<i64: 1, 2, 8, 128>}]} {
    %c0 = arith.constant 0 : index
    %c0_0 = arith.constant 0 : index
    %c0_1 = arith.constant 0 : index
    %c0_2 = arith.constant 0 : index
    %0 = vector.load %arg2[%c0, %c0_0, %c0_1, %c0_2] : memref<1x2x8x128xbf16, #tpu.memory_space<vmem>>, vector<1x2x8x128xbf16>
    %1 = vector.shape_cast %0 : vector<1x2x8x128xbf16> to vector<2x8x128xbf16>
    %2 = arith.extf %1 : vector<2x8x128xbf16> to vector<2x8x128xf32>
    %3 = tpu.iota {dimensions = array<i32: 2>} : vector<2x8x128xi32>
    %c64_i32 = arith.constant 64 : i32
    %4 = vector.broadcast %c64_i32 : i32 to vector<2x8x128xi32>
    %5 = arith.cmpi slt, %3, %4 : vector<2x8x128xi32>
    %cst = arith.constant -1.000000e+00 : f32
    %cst_3 = arith.constant 1.000000e+00 : f32
    %6 = vector.broadcast %cst : f32 to vector<2x8x128xf32>
    %7 = vector.broadcast %cst_3 : f32 to vector<2x8x128xf32>
    %8 = arith.select %5, %6, %7 : vector<2x8x128xi1>, vector<2x8x128xf32>
    %c64_i32_4 = arith.constant 64 : i32
    %9 = tpu.dynamic_rotate %2 by %c64_i32_4 dim 2 : vector<2x8x128xf32>, i32 -> vector<2x8x128xf32>
    %10 = arith.mulf %9, %8 : vector<2x8x128xf32>
    %c0_5 = arith.constant 0 : index
    %c0_6 = arith.constant 0 : index
    %11 = vector.load %arg3[%c0_5, %c0_6] : memref<8x128xf32, #tpu.memory_space<vmem>>, vector<8x128xf32>
    %12 = vector.shape_cast %11 : vector<8x128xf32> to vector<1x8x128xf32>
    %13 = vector.broadcast %12 : vector<1x8x128xf32> to vector<2x8x128xf32>
    %14 = arith.mulf %2, %13 : vector<2x8x128xf32>
    %c0_7 = arith.constant 0 : index
    %c0_8 = arith.constant 0 : index
    %15 = vector.load %arg4[%c0_7, %c0_8] : memref<8x128xf32, #tpu.memory_space<vmem>>, vector<8x128xf32>
    %16 = vector.shape_cast %15 : vector<8x128xf32> to vector<1x8x128xf32>
    %17 = vector.broadcast %16 : vector<1x8x128xf32> to vector<2x8x128xf32>
    %18 = arith.mulf %10, %17 : vector<2x8x128xf32>
    %19 = arith.addf %14, %18 : vector<2x8x128xf32>
    %20 = arith.truncf %19 : vector<2x8x128xf32> to vector<2x8x128xbf16>
    %c0_9 = arith.constant 0 : index
    %c0_10 = arith.constant 0 : index
    %c0_11 = arith.constant 0 : index
    %c0_12 = arith.constant 0 : index
    %21 = vector.load %arg5[%c0_9, %c0_10, %c0_11, %c0_12] : memref<1x2x8x128xbf16, #tpu.memory_space<vmem>>, vector<1x2x8x128xbf16>
    %22 = vector.shape_cast %21 : vector<1x2x8x128xbf16> to vector<2x8x128xbf16>
    %23 = vector.shape_cast %20 : vector<2x8x128xbf16> to vector<1x2x8x128xbf16>
    tpu.vector_store %arg5[%c0_9, %c0_10, %c0_11, %c0_12], %23 {strides = array<i32>} : memref<1x2x8x128xbf16, #tpu.memory_space<vmem>>, vector<1x2x8x128xbf16>,
    return
  }
  func.func @transform_0(%arg0: i32, %arg1: i32) -> (i32, i32, i32, i32) {
    %c0_i32 = arith.constant 0 : i32
    %c0_i32_0 = arith.constant 0 : i32
    %c0_i32_1 = arith.constant 0 : i32
    return %arg0, %c0_i32, %arg1, %c0_i32_0 : i32, i32, i32, i32
  }
  func.func @transform_1(%arg0: i32, %arg1: i32) -> (i32, i32) {
    %c0_i32 = arith.constant 0 : i32
    %c0_i32_0 = arith.constant 0 : i32
    return %arg1, %c0_i32 : i32, i32
  }
  func.func @transform_2(%arg0: i32, %arg1: i32) -> (i32, i32) {
    %c0_i32 = arith.constant 0 : i32
    %c0_i32_0 = arith.constant 0 : i32
    return %arg1, %c0_i32 : i32, i32
  }
  func.func @transform_3(%arg0: i32, %arg1: i32) -> (i32, i32, i32, i32) {
    %c0_i32 = arith.constant 0 : i32
    %c0_i32_0 = arith.constant 0 : i32
    %c0_i32_1 = arith.constant 0 : i32
    return %arg0, %c0_i32, %arg1, %c0_i32_0 : i32, i32, i32, i32
  }
}

module attributes {stable_mosaic.version = 11 : i64} {
  func.func @_matmul_res_kernel(%arg0: i32, %arg1: i32, %arg2: memref<16x256xbf16, #tpu.memory_space<vmem>>, %arg3: memref<256x256xbf16, #tpu.memory_space<vmem>>, %arg4: memref<16x256xbf16, #tpu.memory_space<vmem>>, %arg5: memref<16x256xbf16, #tpu.memory_space<vmem>>) attributes {dimension_semantics = [#tpu.dimension_semantics<parallel>, #tpu.dimension_semantics<parallel>], iteration_bounds = array<i64: 1, 1>, scalar_prefetch = 0 : i64, scratch_operands = 0 : i64, tpu.core_type = #tpu.core_type<tc>, window_params = [{transform_indices = @transform_0, window_bounds = array<i64: 16, 256>}, {transform_indices = @transform_1, window_bounds = array<i64: 256, 256>}, {transform_indices = @transform_2, window_bounds = array<i64: 16, 256>}, {transform_indices = @transform_3, window_bounds = array<i64: 16, 256>}]} {
    %c0 = arith.constant 0 : index
    %c0_0 = arith.constant 0 : index
    %0 = vector.load %arg2[%c0, %c0_0] : memref<16x256xbf16, #tpu.memory_space<vmem>>, vector<16x256xbf16>
    %c0_1 = arith.constant 0 : index
    %c0_2 = arith.constant 0 : index
    %1 = vector.load %arg3[%c0_1, %c0_2] : memref<256x256xbf16, #tpu.memory_space<vmem>>, vector<256x256xbf16>
    %cst = arith.constant dense<0.000000e+00> : vector<16x256xf32>
    %2 = tpu.matmul %0, %1, %cst {dimension_numbers = #tpu.dot_dimension_numbers<[1], [0], [0], [1], [0, 0, 1, 1], [], []>} : vector<16x256xbf16>, vector<256x256xbf16>, vector<16x256xf32> -> vector<16x256xf32>
    %c0_3 = arith.constant 0 : index
    %c0_4 = arith.constant 0 : index
    %3 = vector.load %arg4[%c0_3, %c0_4] : memref<16x256xbf16, #tpu.memory_space<vmem>>, vector<16x256xbf16>
    %4 = arith.extf %3 : vector<16x256xbf16> to vector<16x256xf32>
    %5 = arith.addf %4, %2 : vector<16x256xf32>
    %6 = arith.truncf %5 : vector<16x256xf32> to vector<16x256xbf16>
    %c0_5 = arith.constant 0 : index
    %c0_6 = arith.constant 0 : index
    %7 = vector.load %arg5[%c0_5, %c0_6] : memref<16x256xbf16, #tpu.memory_space<vmem>>, vector<16x256xbf16>
    tpu.vector_store %arg5[%c0_5, %c0_6], %6 {strides = array<i32>} : memref<16x256xbf16, #tpu.memory_space<vmem>>, vector<16x256xbf16>,
    return
  }
  func.func @transform_0(%arg0: i32, %arg1: i32) -> (i32, i32) {
    %c0_i32 = arith.constant 0 : i32
    %c0_i32_0 = arith.constant 0 : i32
    return %arg0, %c0_i32 : i32, i32
  }
  func.func @transform_1(%arg0: i32, %arg1: i32) -> (i32, i32) {
    %c0_i32 = arith.constant 0 : i32
    %c0_i32_0 = arith.constant 0 : i32
    return %c0_i32, %arg1 : i32, i32
  }
  func.func @transform_2(%arg0: i32, %arg1: i32) -> (i32, i32) {
    %c0_i32 = arith.constant 0 : i32
    return %arg0, %arg1 : i32, i32
  }
  func.func @transform_3(%arg0: i32, %arg1: i32) -> (i32, i32) {
    %c0_i32 = arith.constant 0 : i32
    return %arg0, %arg1 : i32, i32
  }
}

module attributes {stable_mosaic.version = 11 : i64} {
  func.func @_flash_kernel(%arg0: i32, %arg1: i32, %arg2: i32, %arg3: memref<1x1x8xf32, #tpu.memory_space<vmem>>, %arg4: memref<1x2x8x128xbf16, #tpu.memory_space<vmem>>, %arg5: memref<1x2x8x128xbf16, #tpu.memory_space<vmem>>, %arg6: memref<1x2x8x128xbf16, #tpu.memory_space<vmem>>, %arg7: memref<8x128xf32, #tpu.memory_space<vmem>>, %arg8: memref<8x128xf32, #tpu.memory_space<vmem>>, %arg9: memref<1x2x8x128xbf16, #tpu.memory_space<vmem>>, %arg10: memref<2x8x128xbf16, #tpu.memory_space<vmem>>, %arg11: memref<2x8x1xf32, #tpu.memory_space<vmem>>, %arg12: memref<2x8x1xf32, #tpu.memory_space<vmem>>, %arg13: memref<2x8x128xf32, #tpu.memory_space<vmem>>) attributes {dimension_semantics = [#tpu.dimension_semantics<parallel>, #tpu.dimension_semantics<parallel>, #tpu.dimension_semantics<arbitrary>], iteration_bounds = array<i64: 2, 1, 1>, scalar_prefetch = 0 : i64, scratch_operands = 4 : i64, tpu.core_type = #tpu.core_type<tc>, window_params = [{transform_indices = @transform_0, window_bounds = array<i64: 1, 1, 8>}, {transform_indices = @transform_1, window_bounds = array<i64: 1, 2, 8, 128>}, {transform_indices = @transform_2, window_bounds = array<i64: 1, 2, 8, 128>}, {transform_indices = @transform_3, window_bounds = array<i64: 1, 2, 8, 128>}, {transform_indices = @transform_4, window_bounds = array<i64: 8, 128>}, {transform_indices = @transform_5, window_bounds = array<i64: 8, 128>}, {transform_indices = @transform_6, window_bounds = array<i64: 1, 2, 8, 128>}]} {
    %c0_i32 = arith.constant 0 : i32
    %0 = arith.cmpi eq, %arg2, %c0_i32 : i32
    %1 = arith.extui %0 : i1 to i32
    %c0_i32_0 = arith.constant 0 : i32
    %2 = arith.cmpi ne, %1, %c0_i32_0 : i32
    scf.if %2 {
      %cst = arith.constant -1.000000e+30 : f32
      %13 = vector.broadcast %cst : f32 to vector<2x8x1xf32>
      %c0 = arith.constant 0 : index
      %c0_6 = arith.constant 0 : index
      %c0_7 = arith.constant 0 : index
      %14 = vector.load %arg11[%c0, %c0_6, %c0_7] : memref<2x8x1xf32, #tpu.memory_space<vmem>>, vector<2x8x1xf32>
      tpu.vector_store %arg11[%c0, %c0_6, %c0_7], %13 {strides = array<i32>} : memref<2x8x1xf32, #tpu.memory_space<vmem>>, vector<2x8x1xf32>,
      %cst_8 = arith.constant 0.000000e+00 : f32
      %15 = vector.broadcast %cst_8 : f32 to vector<2x8x1xf32>
      %c0_9 = arith.constant 0 : index
      %c0_10 = arith.constant 0 : index
      %c0_11 = arith.constant 0 : index
      %16 = vector.load %arg12[%c0_9, %c0_10, %c0_11] : memref<2x8x1xf32, #tpu.memory_space<vmem>>, vector<2x8x1xf32>
      tpu.vector_store %arg12[%c0_9, %c0_10, %c0_11], %15 {strides = array<i32>} : memref<2x8x1xf32, #tpu.memory_space<vmem>>, vector<2x8x1xf32>,
      %cst_12 = arith.constant 0.000000e+00 : f32
      %17 = vector.broadcast %cst_12 : f32 to vector<2x8x128xf32>
      %c0_13 = arith.constant 0 : index
      %c0_14 = arith.constant 0 : index
      %c0_15 = arith.constant 0 : index
      %18 = vector.load %arg13[%c0_13, %c0_14, %c0_15] : memref<2x8x128xf32, #tpu.memory_space<vmem>>, vector<2x8x128xf32>
      tpu.vector_store %arg13[%c0_13, %c0_14, %c0_15], %17 {strides = array<i32>} : memref<2x8x128xf32, #tpu.memory_space<vmem>>, vector<2x8x128xf32>,
      %c0_16 = arith.constant 0 : index
      %c0_17 = arith.constant 0 : index
      %c0_18 = arith.constant 0 : index
      %c0_19 = arith.constant 0 : index
      %19 = vector.load %arg4[%c0_16, %c0_17, %c0_18, %c0_19] : memref<1x2x8x128xbf16, #tpu.memory_space<vmem>>, vector<1x2x8x128xbf16>
      %20 = vector.shape_cast %19 : vector<1x2x8x128xbf16> to vector<2x8x128xbf16>
      %21 = arith.extf %20 : vector<2x8x128xbf16> to vector<2x8x128xf32>
      %22 = tpu.iota {dimensions = array<i32: 2>} : vector<2x8x128xi32>
      %c64_i32 = arith.constant 64 : i32
      %23 = vector.broadcast %c64_i32 : i32 to vector<2x8x128xi32>
      %24 = arith.cmpi slt, %22, %23 : vector<2x8x128xi32>
      %cst_20 = arith.constant -1.000000e+00 : f32
      %cst_21 = arith.constant 1.000000e+00 : f32
      %25 = vector.broadcast %cst_20 : f32 to vector<2x8x128xf32>
      %26 = vector.broadcast %cst_21 : f32 to vector<2x8x128xf32>
      %27 = arith.select %24, %25, %26 : vector<2x8x128xi1>, vector<2x8x128xf32>
      %c64_i32_22 = arith.constant 64 : i32
      %28 = tpu.dynamic_rotate %21 by %c64_i32_22 dim 2 : vector<2x8x128xf32>, i32 -> vector<2x8x128xf32>
      %29 = arith.mulf %28, %27 : vector<2x8x128xf32>
      %c0_23 = arith.constant 0 : index
      %c0_24 = arith.constant 0 : index
      %30 = vector.load %arg7[%c0_23, %c0_24] : memref<8x128xf32, #tpu.memory_space<vmem>>, vector<8x128xf32>
      %31 = vector.shape_cast %30 : vector<8x128xf32> to vector<1x8x128xf32>
      %32 = vector.broadcast %31 : vector<1x8x128xf32> to vector<2x8x128xf32>
      %33 = arith.mulf %21, %32 : vector<2x8x128xf32>
      %c0_25 = arith.constant 0 : index
      %c0_26 = arith.constant 0 : index
      %34 = vector.load %arg8[%c0_25, %c0_26] : memref<8x128xf32, #tpu.memory_space<vmem>>, vector<8x128xf32>
      %35 = vector.shape_cast %34 : vector<8x128xf32> to vector<1x8x128xf32>
      %36 = vector.broadcast %35 : vector<1x8x128xf32> to vector<2x8x128xf32>
      %37 = arith.mulf %29, %36 : vector<2x8x128xf32>
      %38 = arith.addf %33, %37 : vector<2x8x128xf32>
      %cst_27 = arith.constant 0.0883883461 : f32
      %39 = vector.broadcast %cst_27 : f32 to vector<2x8x128xf32>
      %40 = arith.mulf %38, %39 : vector<2x8x128xf32>
      %41 = arith.truncf %40 : vector<2x8x128xf32> to vector<2x8x128xbf16>
      %c0_28 = arith.constant 0 : index
      %c0_29 = arith.constant 0 : index
      %c0_30 = arith.constant 0 : index
      %42 = vector.load %arg10[%c0_28, %c0_29, %c0_30] : memref<2x8x128xbf16, #tpu.memory_space<vmem>>, vector<2x8x128xbf16>
      tpu.vector_store %arg10[%c0_28, %c0_29, %c0_30], %41 {strides = array<i32>} : memref<2x8x128xbf16, #tpu.memory_space<vmem>>, vector<2x8x128xbf16>,
    } else {
    }
    %c8_i32 = arith.constant 8 : i32
    %3 = arith.muli %arg2, %c8_i32 : i32
    %c8_i32_1 = arith.constant 8 : i32
    %4 = arith.muli %arg1, %c8_i32_1 : i32
    %c8_i32_2 = arith.constant 8 : i32
    %5 = arith.addi %4, %c8_i32_2 : i32
    %c1_i32 = arith.constant 1 : i32
    %6 = arith.subi %5, %c1_i32 : i32
    %7 = arith.cmpi sle, %3, %6 : i32
    %8 = arith.extui %7 : i1 to i32
    %c0_i32_3 = arith.constant 0 : i32
    %9 = arith.cmpi ne, %8, %c0_i32_3 : i32
    scf.if %9 {
      %c0 = arith.constant 0 : index
      %c0_6 = arith.constant 0 : index
      %c0_7 = arith.constant 0 : index
      %c0_8 = arith.constant 0 : index
      %13 = vector.load %arg5[%c0, %c0_6, %c0_7, %c0_8] : memref<1x2x8x128xbf16, #tpu.memory_space<vmem>>, vector<1x2x8x128xbf16>
      %14 = vector.shape_cast %13 : vector<1x2x8x128xbf16> to vector<2x8x128xbf16>
      %c0_9 = arith.constant 0 : index
      %c0_10 = arith.constant 0 : index
      %c0_11 = arith.constant 0 : index
      %c0_12 = arith.constant 0 : index
      %15 = vector.load %arg6[%c0_9, %c0_10, %c0_11, %c0_12] : memref<1x2x8x128xbf16, #tpu.memory_space<vmem>>, vector<1x2x8x128xbf16>
      %16 = vector.shape_cast %15 : vector<1x2x8x128xbf16> to vector<2x8x128xbf16>
      %c0_13 = arith.constant 0 : index
      %c0_14 = arith.constant 0 : index
      %c0_15 = arith.constant 0 : index
      %17 = vector.load %arg10[%c0_13, %c0_14, %c0_15] : memref<2x8x128xbf16, #tpu.memory_space<vmem>>, vector<2x8x128xbf16>
      "tpu.trace_start"() <{level = 10 : i32, message = "hqd,hkd->hqk"}> : () -> ()
      %cst = arith.constant dense<0.000000e+00> : vector<2x8x8xf32>
      %18 = tpu.matmul %17, %14, %cst {dimension_numbers = #tpu.dot_dimension_numbers<[2], [2], [1], [1], [0, 0, 0, 1, 1, 1], [0], [0]>} : vector<2x8x128xbf16>, vector<2x8x128xbf16>, vector<2x8x8xf32> -> vector<2x8x8xf32>
      "tpu.trace_stop"() : () -> ()
      %c8_i32_16 = arith.constant 8 : i32
      %19 = arith.muli %arg1, %c8_i32_16 : i32
      %20 = tpu.iota {dimensions = array<i32: 0>} : vector<8x8xi32>
      %21 = vector.broadcast %19 : i32 to vector<8x8xi32>
      %22 = arith.addi %21, %20 : vector<8x8xi32>
      %c8_i32_17 = arith.constant 8 : i32
      %23 = arith.muli %arg2, %c8_i32_17 : i32
      %24 = tpu.iota {dimensions = array<i32: 1>} : vector<8x8xi32>
      %25 = vector.broadcast %23 : i32 to vector<8x8xi32>
      %26 = arith.addi %25, %24 : vector<8x8xi32>
      %27 = arith.cmpi sle, %26, %22 : vector<8x8xi32>
      %c0_18 = arith.constant 0 : index
      %c0_19 = arith.constant 0 : index
      %c0_20 = arith.constant 0 : index
      %28 = vector.load %arg3[%c0_18, %c0_19, %c0_20] : memref<1x1x8xf32, #tpu.memory_space<vmem>>, vector<1x1x8xf32>
      %29 = vector.shape_cast %28 : vector<1x1x8xf32> to vector<1x8xf32>
      %cst_21 = arith.constant 0.000000e+00 : f32
      %30 = vector.broadcast %cst_21 : f32 to vector<1x8xf32>
      %31 = arith.cmpf ogt, %29, %30 : vector<1x8xf32>
      %32 = vector.broadcast %31 : vector<1x8xi1> to vector<8x8xi1>
      %33 = arith.andi %27, %32 : vector<8x8xi1>
      %34 = vector.shape_cast %33 : vector<8x8xi1> to vector<1x8x8xi1>
      %cst_22 = arith.constant -1.000000e+30 : f32
      %35 = vector.shape_cast %34 : vector<1x8x8xi1> to vector<1x8x8xi1>
      %36 = vector.broadcast %35 : vector<1x8x8xi1> to vector<2x8x8xi1>
      %37 = vector.broadcast %cst_22 : f32 to vector<2x8x8xf32>
      %38 = arith.select %36, %18, %37 : vector<2x8x8xi1>, vector<2x8x8xf32>
      %c0_23 = arith.constant 0 : index
      %c0_24 = arith.constant 0 : index
      %c0_25 = arith.constant 0 : index
      %39 = vector.load %arg11[%c0_23, %c0_24, %c0_25] : memref<2x8x1xf32, #tpu.memory_space<vmem>>, vector<2x8x1xf32>
      %cst_26 = arith.constant dense<0xFF800000> : vector<2x8xf32>
      %40 = vector.multi_reduction <maximumf>, %38, %cst_26 [2] : vector<2x8x8xf32> to vector<2x8xf32>
      %41 = vector.shape_cast %40 : vector<2x8xf32> to vector<2x8x1xf32>
      %42 = arith.maximumf %39, %41 : vector<2x8x1xf32>
      %43 = arith.subf %39, %42 : vector<2x8x1xf32>
      %44 = math.exp %43 : vector<2x8x1xf32>
      %45 = vector.broadcast %42 : vector<2x8x1xf32> to vector<2x8x8xf32>
      %46 = arith.subf %38, %45 : vector<2x8x8xf32>
      %47 = math.exp %46 : vector<2x8x8xf32>
      %c0_27 = arith.constant 0 : index
      %c0_28 = arith.constant 0 : index
      %c0_29 = arith.constant 0 : index
      %48 = vector.load %arg12[%c0_27, %c0_28, %c0_29] : memref<2x8x1xf32, #tpu.memory_space<vmem>>, vector<2x8x1xf32>
      %49 = arith.mulf %44, %48 : vector<2x8x1xf32>
      %cst_30 = arith.constant dense<0.000000e+00> : vector<2x8xf32>
      %50 = vector.multi_reduction <add>, %47, %cst_30 [2] : vector<2x8x8xf32> to vector<2x8xf32>
      %51 = vector.shape_cast %50 : vector<2x8xf32> to vector<2x8x1xf32>
      %52 = arith.addf %49, %51 : vector<2x8x1xf32>
      %c0_31 = arith.constant 0 : index
      %c0_32 = arith.constant 0 : index
      %c0_33 = arith.constant 0 : index
      %53 = vector.load %arg12[%c0_31, %c0_32, %c0_33] : memref<2x8x1xf32, #tpu.memory_space<vmem>>, vector<2x8x1xf32>
      tpu.vector_store %arg12[%c0_31, %c0_32, %c0_33], %52 {strides = array<i32>} : memref<2x8x1xf32, #tpu.memory_space<vmem>>, vector<2x8x1xf32>,
      %c0_34 = arith.constant 0 : index
      %c0_35 = arith.constant 0 : index
      %c0_36 = arith.constant 0 : index
      %54 = vector.load %arg13[%c0_34, %c0_35, %c0_36] : memref<2x8x128xf32, #tpu.memory_space<vmem>>, vector<2x8x128xf32>
      %55 = vector.broadcast %44 : vector<2x8x1xf32> to vector<2x8x128xf32>
      %56 = arith.mulf %55, %54 : vector<2x8x128xf32>
      %57 = arith.truncf %47 : vector<2x8x8xf32> to vector<2x8x8xbf16>
      "tpu.trace_start"() <{level = 10 : i32, message = "hqk,hkd->hqd"}> : () -> ()
      %cst_37 = arith.constant dense<0.000000e+00> : vector<2x8x128xf32>
      %58 = tpu.matmul %57, %16, %cst_37 {dimension_numbers = #tpu.dot_dimension_numbers<[2], [1], [1], [2], [0, 0, 0, 1, 1, 2], [0], [0]>} : vector<2x8x8xbf16>, vector<2x8x128xbf16>, vector<2x8x128xf32> -> vector<2x8x128xf32>
      "tpu.trace_stop"() : () -> ()
      %59 = arith.addf %56, %58 : vector<2x8x128xf32>
      %c0_38 = arith.constant 0 : index
      %c0_39 = arith.constant 0 : index
      %c0_40 = arith.constant 0 : index
      %60 = vector.load %arg13[%c0_38, %c0_39, %c0_40] : memref<2x8x128xf32, #tpu.memory_space<vmem>>, vector<2x8x128xf32>
      tpu.vector_store %arg13[%c0_38, %c0_39, %c0_40], %59 {strides = array<i32>} : memref<2x8x128xf32, #tpu.memory_space<vmem>>, vector<2x8x128xf32>,
      %c0_41 = arith.constant 0 : index
      %c0_42 = arith.constant 0 : index
      %c0_43 = arith.constant 0 : index
      %61 = vector.load %arg11[%c0_41, %c0_42, %c0_43] : memref<2x8x1xf32, #tpu.memory_space<vmem>>, vector<2x8x1xf32>
      tpu.vector_store %arg11[%c0_41, %c0_42, %c0_43], %42 {strides = array<i32>} : memref<2x8x1xf32, #tpu.memory_space<vmem>>, vector<2x8x1xf32>,
    } else {
    }
    %c0_i32_4 = arith.constant 0 : i32
    %10 = arith.cmpi eq, %arg2, %c0_i32_4 : i32
    %11 = arith.extui %10 : i1 to i32
    %c0_i32_5 = arith.constant 0 : i32
    %12 = arith.cmpi ne, %11, %c0_i32_5 : i32
    scf.if %12 {
      %c0 = arith.constant 0 : index
      %c0_6 = arith.constant 0 : index
      %c0_7 = arith.constant 0 : index
      %13 = vector.load %arg13[%c0, %c0_6, %c0_7] : memref<2x8x128xf32, #tpu.memory_space<vmem>>, vector<2x8x128xf32>
      %c0_8 = arith.constant 0 : index
      %c0_9 = arith.constant 0 : index
      %c0_10 = arith.constant 0 : index
      %14 = vector.load %arg12[%c0_8, %c0_9, %c0_10] : memref<2x8x1xf32, #tpu.memory_space<vmem>>, vector<2x8x1xf32>
      %15 = tpu.reciprocal %14 {approx = true} : vector<2x8x1xf32> -> vector<2x8x1xf32>
      %16 = vector.broadcast %15 : vector<2x8x1xf32> to vector<2x8x128xf32>
      %17 = arith.mulf %13, %16 : vector<2x8x128xf32>
      %18 = arith.truncf %17 : vector<2x8x128xf32> to vector<2x8x128xbf16>
      %c0_11 = arith.constant 0 : index
      %c0_12 = arith.constant 0 : index
      %c0_13 = arith.constant 0 : index
      %c0_14 = arith.constant 0 : index
      %19 = vector.load %arg9[%c0_11, %c0_12, %c0_13, %c0_14] : memref<1x2x8x128xbf16, #tpu.memory_space<vmem>>, vector<1x2x8x128xbf16>
      %20 = vector.shape_cast %19 : vector<1x2x8x128xbf16> to vector<2x8x128xbf16>
      %21 = vector.shape_cast %18 : vector<2x8x128xbf16> to vector<1x2x8x128xbf16>
      tpu.vector_store %arg9[%c0_11, %c0_12, %c0_13, %c0_14], %21 {strides = array<i32>} : memref<1x2x8x128xbf16, #tpu.memory_space<vmem>>, vector<1x2x8x128xbf16>,
    } else {
    }
    return
  }
  func.func @transform_0(%arg0: i32, %arg1: i32, %arg2: i32) -> (i32, i32, i32) {
    %c0_i32 = arith.constant 0 : i32
    %c0_i32_0 = arith.constant 0 : i32
    return %arg0, %c0_i32, %arg2 : i32, i32, i32
  }
  func.func @transform_1(%arg0: i32, %arg1: i32, %arg2: i32) -> (i32, i32, i32, i32) {
    %c0_i32 = arith.constant 0 : i32
    %c0_i32_0 = arith.constant 0 : i32
    %c0_i32_1 = arith.constant 0 : i32
    return %arg0, %c0_i32, %arg1, %c0_i32_0 : i32, i32, i32, i32
  }
  func.func @transform_2(%arg0: i32, %arg1: i32, %arg2: i32) -> (i32, i32, i32, i32) {
    %c0_i32 = arith.constant 0 : i32
    %c0_i32_0 = arith.constant 0 : i32
    %c0_i32_1 = arith.constant 0 : i32
    return %arg0, %c0_i32, %arg2, %c0_i32_0 : i32, i32, i32, i32
  }
  func.func @transform_3(%arg0: i32, %arg1: i32, %arg2: i32) -> (i32, i32, i32, i32) {
    %c0_i32 = arith.constant 0 : i32
    %c0_i32_0 = arith.constant 0 : i32
    %c0_i32_1 = arith.constant 0 : i32
    return %arg0, %c0_i32, %arg2, %c0_i32_0 : i32, i32, i32, i32
  }
  func.func @transform_4(%arg0: i32, %arg1: i32, %arg2: i32) -> (i32, i32) {
    %c0_i32 = arith.constant 0 : i32
    %c0_i32_0 = arith.constant 0 : i32
    return %arg1, %c0_i32 : i32, i32
  }
  func.func @transform_5(%arg0: i32, %arg1: i32, %arg2: i32) -> (i32, i32) {
    %c0_i32 = arith.constant 0 : i32
    %c0_i32_0 = arith.constant 0 : i32
    return %arg1, %c0_i32 : i32, i32
  }
  func.func @transform_6(%arg0: i32, %arg1: i32, %arg2: i32) -> (i32, i32, i32, i32) {
    %c0_i32 = arith.constant 0 : i32
    %c0_i32_0 = arith.constant 0 : i32
    %c0_i32_1 = arith.constant 0 : i32
    return %arg0, %c0_i32, %arg1, %c0_i32_0 : i32, i32, i32, i32
  }
}

module attributes {stable_mosaic.version = 11 : i64} {
  func.func @_norm_matmul_kernel(%arg0: i32, %arg1: i32, %arg2: memref<16x256xbf16, #tpu.memory_space<vmem>>, %arg3: memref<1x256xf32, #tpu.memory_space<vmem>>, %arg4: memref<256x384xbf16, #tpu.memory_space<vmem>>, %arg5: memref<16x384xbf16, #tpu.memory_space<vmem>>, %arg6: memref<16x256xbf16, #tpu.memory_space<vmem>>) attributes {dimension_semantics = [#tpu.dimension_semantics<parallel>, #tpu.dimension_semantics<arbitrary>], iteration_bounds = array<i64: 1, 2>, scalar_prefetch = 0 : i64, scratch_operands = 1 : i64, tpu.core_type = #tpu.core_type<tc>, window_params = [{transform_indices = @transform_0, window_bounds = array<i64: 16, 256>}, {pipeline_mode = #tpu.pipeline_mode<synchronous>, transform_indices = @transform_1, window_bounds = array<i64: 1, 256>}, {transform_indices = @transform_2, window_bounds = array<i64: 256, 384>}, {transform_indices = @transform_3, window_bounds = array<i64: 16, 384>}]} {
    %c0_i32 = arith.constant 0 : i32
    %0 = arith.cmpi eq, %arg1, %c0_i32 : i32
    %1 = arith.extui %0 : i1 to i32
    %c0_i32_0 = arith.constant 0 : i32
    %2 = arith.cmpi ne, %1, %c0_i32_0 : i32
    scf.if %2 {
      %c0_6 = arith.constant 0 : index
      %c0_7 = arith.constant 0 : index
      %8 = vector.load %arg2[%c0_6, %c0_7] : memref<16x256xbf16, #tpu.memory_space<vmem>>, vector<16x256xbf16>
      %9 = arith.extf %8 : vector<16x256xbf16> to vector<16x256xf32>
      %10 = arith.mulf %9, %9 : vector<16x256xf32>
      %cst_8 = arith.constant dense<0.000000e+00> : vector<16xf32>
      %11 = vector.multi_reduction <add>, %10, %cst_8 [1] : vector<16x256xf32> to vector<16xf32>
      %12 = vector.shape_cast %11 : vector<16xf32> to vector<16x1xf32>
      %cst_9 = arith.constant 2.560000e+02 : f32
      %13 = vector.broadcast %cst_9 : f32 to vector<16x1xf32>
      %14 = arith.divf %12, %13 : vector<16x1xf32>
      %cst_10 = arith.constant 9.99999997E-7 : f32
      %15 = vector.broadcast %cst_10 : f32 to vector<16x1xf32>
      %16 = arith.addf %14, %15 : vector<16x1xf32>
      %17 = math.rsqrt %16 : vector<16x1xf32>
      %18 = vector.broadcast %17 : vector<16x1xf32> to vector<16x256xf32>
      %19 = arith.mulf %9, %18 : vector<16x256xf32>
      %c0_11 = arith.constant 0 : index
      %c0_12 = arith.constant 0 : index
      %20 = vector.load %arg3[%c0_11, %c0_12] : memref<1x256xf32, #tpu.memory_space<vmem>>, vector<1x256xf32>
      %21 = vector.broadcast %20 : vector<1x256xf32> to vector<16x256xf32>
      %22 = arith.mulf %19, %21 : vector<16x256xf32>
      %23 = arith.truncf %22 : vector<16x256xf32> to vector<16x256xbf16>
      %c0_13 = arith.constant 0 : index
      %c0_14 = arith.constant 0 : index
      %24 = vector.load %arg6[%c0_13, %c0_14] : memref<16x256xbf16, #tpu.memory_space<vmem>>, vector<16x256xbf16>
      tpu.vector_store %arg6[%c0_13, %c0_14], %23 {strides = array<i32>} : memref<16x256xbf16, #tpu.memory_space<vmem>>, vector<16x256xbf16>,
    } else {
    }
    %c0 = arith.constant 0 : index
    %c0_1 = arith.constant 0 : index
    %3 = vector.load %arg6[%c0, %c0_1] : memref<16x256xbf16, #tpu.memory_space<vmem>>, vector<16x256xbf16>
    %c0_2 = arith.constant 0 : index
    %c0_3 = arith.constant 0 : index
    %4 = vector.load %arg4[%c0_2, %c0_3] : memref<256x384xbf16, #tpu.memory_space<vmem>>, vector<256x384xbf16>
    %cst = arith.constant dense<0.000000e+00> : vector<16x384xf32>
    %5 = tpu.matmul %3, %4, %cst {dimension_numbers = #tpu.dot_dimension_numbers<[1], [0], [0], [1], [0, 0, 1, 1], [], []>} : vector<16x256xbf16>, vector<256x384xbf16>, vector<16x384xf32> -> vector<16x384xf32>
    %6 = arith.truncf %5 : vector<16x384xf32> to vector<16x384xbf16>
    %c0_4 = arith.constant 0 : index
    %c0_5 = arith.constant 0 : index
    %7 = vector.load %arg5[%c0_4, %c0_5] : memref<16x384xbf16, #tpu.memory_space<vmem>>, vector<16x384xbf16>
    tpu.vector_store %arg5[%c0_4, %c0_5], %6 {strides = array<i32>} : memref<16x384xbf16, #tpu.memory_space<vmem>>, vector<16x384xbf16>,
    return
  }
  func.func @transform_0(%arg0: i32, %arg1: i32) -> (i32, i32) {
    %c0_i32 = arith.constant 0 : i32
    %c0_i32_0 = arith.constant 0 : i32
    return %arg0, %c0_i32 : i32, i32
  }
  func.func @transform_1(%arg0: i32, %arg1: i32) -> (i32, i32) {
    %c0_i32 = arith.constant 0 : i32
    %c0_i32_0 = arith.constant 0 : i32
    %c0_i32_1 = arith.constant 0 : i32
    return %c0_i32, %c0_i32_0 : i32, i32
  }
  func.func @transform_2(%arg0: i32, %arg1: i32) -> (i32, i32) {
    %c0_i32 = arith.constant 0 : i32
    %c0_i32_0 = arith.constant 0 : i32
    return %c0_i32, %arg1 : i32, i32
  }
  func.func @transform_3(%arg0: i32, %arg1: i32) -> (i32, i32) {
    %c0_i32 = arith.constant 0 : i32
    return %arg0, %arg1 : i32, i32
  }
}

module attributes {stable_mosaic.version = 11 : i64} {
  func.func @_swiglu_kernel(%arg0: i32, %arg1: i32, %arg2: memref<16x256xbf16, #tpu.memory_space<vmem>>, %arg3: memref<1x256xf32, #tpu.memory_space<vmem>>, %arg4: memref<256x256xbf16, #tpu.memory_space<vmem>>, %arg5: memref<256x256xbf16, #tpu.memory_space<vmem>>, %arg6: memref<256x256xbf16, #tpu.memory_space<vmem>>, %arg7: memref<16x256xbf16, #tpu.memory_space<vmem>>, %arg8: memref<16x256xf32, #tpu.memory_space<vmem>>, %arg9: memref<16x256xbf16, #tpu.memory_space<vmem>>) attributes {dimension_semantics = [#tpu.dimension_semantics<parallel>, #tpu.dimension_semantics<arbitrary>], iteration_bounds = array<i64: 1, 2>, scalar_prefetch = 0 : i64, scratch_operands = 2 : i64, tpu.core_type = #tpu.core_type<tc>, window_params = [{transform_indices = @transform_0, window_bounds = array<i64: 16, 256>}, {pipeline_mode = #tpu.pipeline_mode<synchronous>, transform_indices = @transform_1, window_bounds = array<i64: 1, 256>}, {transform_indices = @transform_2, window_bounds = array<i64: 256, 256>}, {transform_indices = @transform_3, window_bounds = array<i64: 256, 256>}, {transform_indices = @transform_4, window_bounds = array<i64: 256, 256>}, {transform_indices = @transform_5, window_bounds = array<i64: 16, 256>}]} {
    %c0_i32 = arith.constant 0 : i32
    %0 = arith.cmpi eq, %arg1, %c0_i32 : i32
    %1 = arith.extui %0 : i1 to i32
    %c0_i32_0 = arith.constant 0 : i32
    %2 = arith.cmpi ne, %1, %c0_i32_0 : i32
    scf.if %2 {
      %cst_16 = arith.constant 0.000000e+00 : f32
      %24 = vector.broadcast %cst_16 : f32 to vector<16x256xf32>
      %c0_17 = arith.constant 0 : index
      %c0_18 = arith.constant 0 : index
      %25 = vector.load %arg8[%c0_17, %c0_18] : memref<16x256xf32, #tpu.memory_space<vmem>>, vector<16x256xf32>
      tpu.vector_store %arg8[%c0_17, %c0_18], %24 {strides = array<i32>} : memref<16x256xf32, #tpu.memory_space<vmem>>, vector<16x256xf32>,
      %c0_19 = arith.constant 0 : index
      %c0_20 = arith.constant 0 : index
      %26 = vector.load %arg2[%c0_19, %c0_20] : memref<16x256xbf16, #tpu.memory_space<vmem>>, vector<16x256xbf16>
      %27 = arith.extf %26 : vector<16x256xbf16> to vector<16x256xf32>
      %28 = arith.mulf %27, %27 : vector<16x256xf32>
      %cst_21 = arith.constant dense<0.000000e+00> : vector<16xf32>
      %29 = vector.multi_reduction <add>, %28, %cst_21 [1] : vector<16x256xf32> to vector<16xf32>
      %30 = vector.shape_cast %29 : vector<16xf32> to vector<16x1xf32>
      %cst_22 = arith.constant 2.560000e+02 : f32
      %31 = vector.broadcast %cst_22 : f32 to vector<16x1xf32>
      %32 = arith.divf %30, %31 : vector<16x1xf32>
      %cst_23 = arith.constant 9.99999997E-7 : f32
      %33 = vector.broadcast %cst_23 : f32 to vector<16x1xf32>
      %34 = arith.addf %32, %33 : vector<16x1xf32>
      %35 = math.rsqrt %34 : vector<16x1xf32>
      %36 = vector.broadcast %35 : vector<16x1xf32> to vector<16x256xf32>
      %37 = arith.mulf %27, %36 : vector<16x256xf32>
      %c0_24 = arith.constant 0 : index
      %c0_25 = arith.constant 0 : index
      %38 = vector.load %arg3[%c0_24, %c0_25] : memref<1x256xf32, #tpu.memory_space<vmem>>, vector<1x256xf32>
      %39 = vector.broadcast %38 : vector<1x256xf32> to vector<16x256xf32>
      %40 = arith.mulf %37, %39 : vector<16x256xf32>
      %41 = arith.truncf %40 : vector<16x256xf32> to vector<16x256xbf16>
      %c0_26 = arith.constant 0 : index
      %c0_27 = arith.constant 0 : index
      %42 = vector.load %arg9[%c0_26, %c0_27] : memref<16x256xbf16, #tpu.memory_space<vmem>>, vector<16x256xbf16>
      tpu.vector_store %arg9[%c0_26, %c0_27], %41 {strides = array<i32>} : memref<16x256xbf16, #tpu.memory_space<vmem>>, vector<16x256xbf16>,
    } else {
    }
    %c0 = arith.constant 0 : index
    %c0_1 = arith.constant 0 : index
    %3 = vector.load %arg9[%c0, %c0_1] : memref<16x256xbf16, #tpu.memory_space<vmem>>, vector<16x256xbf16>
    %c0_2 = arith.constant 0 : index
    %c0_3 = arith.constant 0 : index
    %4 = vector.load %arg4[%c0_2, %c0_3] : memref<256x256xbf16, #tpu.memory_space<vmem>>, vector<256x256xbf16>
    %cst = arith.constant dense<0.000000e+00> : vector<16x256xf32>
    %5 = tpu.matmul %3, %4, %cst {dimension_numbers = #tpu.dot_dimension_numbers<[1], [0], [0], [1], [0, 0, 1, 1], [], []>} : vector<16x256xbf16>, vector<256x256xbf16>, vector<16x256xf32> -> vector<16x256xf32>
    %c0_4 = arith.constant 0 : index
    %c0_5 = arith.constant 0 : index
    %6 = vector.load %arg5[%c0_4, %c0_5] : memref<256x256xbf16, #tpu.memory_space<vmem>>, vector<256x256xbf16>
    %cst_6 = arith.constant dense<0.000000e+00> : vector<16x256xf32>
    %7 = tpu.matmul %3, %6, %cst_6 {dimension_numbers = #tpu.dot_dimension_numbers<[1], [0], [0], [1], [0, 0, 1, 1], [], []>} : vector<16x256xbf16>, vector<256x256xbf16>, vector<16x256xf32> -> vector<16x256xf32>
    %8 = arith.negf %5 : vector<16x256xf32>
    %9 = math.exp %8 : vector<16x256xf32>
    %cst_7 = arith.constant 1.000000e+00 : f32
    %10 = vector.broadcast %cst_7 : f32 to vector<16x256xf32>
    %11 = arith.addf %10, %9 : vector<16x256xf32>
    %12 = arith.divf %10, %11 : vector<16x256xf32>
    %13 = arith.mulf %5, %12 : vector<16x256xf32>
    %14 = arith.mulf %13, %7 : vector<16x256xf32>
    %c0_8 = arith.constant 0 : index
    %c0_9 = arith.constant 0 : index
    %15 = vector.load %arg8[%c0_8, %c0_9] : memref<16x256xf32, #tpu.memory_space<vmem>>, vector<16x256xf32>
    %16 = arith.truncf %14 : vector<16x256xf32> to vector<16x256xbf16>
    %c0_10 = arith.constant 0 : index
    %c0_11 = arith.constant 0 : index
    %17 = vector.load %arg6[%c0_10, %c0_11] : memref<256x256xbf16, #tpu.memory_space<vmem>>, vector<256x256xbf16>
    %cst_12 = arith.constant dense<0.000000e+00> : vector<16x256xf32>
    %18 = tpu.matmul %16, %17, %cst_12 {dimension_numbers = #tpu.dot_dimension_numbers<[1], [0], [0], [1], [0, 0, 1, 1], [], []>} : vector<16x256xbf16>, vector<256x256xbf16>, vector<16x256xf32> -> vector<16x256xf32>
    %19 = arith.addf %15, %18 : vector<16x256xf32>
    %c0_13 = arith.constant 0 : index
    %c0_14 = arith.constant 0 : index
    %20 = vector.load %arg8[%c0_13, %c0_14] : memref<16x256xf32, #tpu.memory_space<vmem>>, vector<16x256xf32>
    tpu.vector_store %arg8[%c0_13, %c0_14], %19 {strides = array<i32>} : memref<16x256xf32, #tpu.memory_space<vmem>>, vector<16x256xf32>,
    %c1_i32 = arith.constant 1 : i32
    %21 = arith.cmpi eq, %arg1, %c1_i32 : i32
    %22 = arith.extui %21 : i1 to i32
    %c0_i32_15 = arith.constant 0 : i32
    %23 = arith.cmpi ne, %22, %c0_i32_15 : i32
    scf.if %23 {
      %c0_16 = arith.constant 0 : index
      %c0_17 = arith.constant 0 : index
      %24 = vector.load %arg2[%c0_16, %c0_17] : memref<16x256xbf16, #tpu.memory_space<vmem>>, vector<16x256xbf16>
      %25 = arith.extf %24 : vector<16x256xbf16> to vector<16x256xf32>
      %c0_18 = arith.constant 0 : index
      %c0_19 = arith.constant 0 : index
      %26 = vector.load %arg8[%c0_18, %c0_19] : memref<16x256xf32, #tpu.memory_space<vmem>>, vector<16x256xf32>
      %27 = arith.addf %25, %26 : vector<16x256xf32>
      %28 = arith.truncf %27 : vector<16x256xf32> to vector<16x256xbf16>
      %c0_20 = arith.constant 0 : index
      %c0_21 = arith.constant 0 : index
      %29 = vector.load %arg7[%c0_20, %c0_21] : memref<16x256xbf16, #tpu.memory_space<vmem>>, vector<16x256xbf16>
      tpu.vector_store %arg7[%c0_20, %c0_21], %28 {strides = array<i32>} : memref<16x256xbf16, #tpu.memory_space<vmem>>, vector<16x256xbf16>,
    } else {
    }
    return
  }
  func.func @transform_0(%arg0: i32, %arg1: i32) -> (i32, i32) {
    %c0_i32 = arith.constant 0 : i32
    %c0_i32_0 = arith.constant 0 : i32
    return %arg0, %c0_i32 : i32, i32
  }
  func.func @transform_1(%arg0: i32, %arg1: i32) -> (i32, i32) {
    %c0_i32 = arith.constant 0 : i32
    %c0_i32_0 = arith.constant 0 : i32
    %c0_i32_1 = arith.constant 0 : i32
    return %c0_i32, %c0_i32_0 : i32, i32
  }
  func.func @transform_2(%arg0: i32, %arg1: i32) -> (i32, i32) {
    %c0_i32 = arith.constant 0 : i32
    %c0_i32_0 = arith.constant 0 : i32
    return %c0_i32, %arg1 : i32, i32
  }
  func.func @transform_3(%arg0: i32, %arg1: i32) -> (i32, i32) {
    %c0_i32 = arith.constant 0 : i32
    %c0_i32_0 = arith.constant 0 : i32
    return %c0_i32, %arg1 : i32, i32
  }
  func.func @transform_4(%arg0: i32, %arg1: i32) -> (i32, i32) {
    %c0_i32 = arith.constant 0 : i32
    %c0_i32_0 = arith.constant 0 : i32
    return %arg1, %c0_i32 : i32, i32
  }
  func.func @transform_5(%arg0: i32, %arg1: i32) -> (i32, i32) {
    %c0_i32 = arith.constant 0 : i32
    %c0_i32_0 = arith.constant 0 : i32
    return %arg0, %c0_i32 : i32, i32
  }
}

module attributes {stable_mosaic.version = 11 : i64} {
  func.func @_matmul_res_kernel(%arg0: i32, %arg1: i32, %arg2: memref<16x256xbf16, #tpu.memory_space<vmem>>, %arg3: memref<256x256xbf16, #tpu.memory_space<vmem>>, %arg4: memref<16x256xbf16, #tpu.memory_space<vmem>>, %arg5: memref<16x256xbf16, #tpu.memory_space<vmem>>) attributes {dimension_semantics = [#tpu.dimension_semantics<parallel>, #tpu.dimension_semantics<parallel>], iteration_bounds = array<i64: 1, 1>, scalar_prefetch = 0 : i64, scratch_operands = 0 : i64, tpu.core_type = #tpu.core_type<tc>, window_params = [{transform_indices = @transform_0, window_bounds = array<i64: 16, 256>}, {transform_indices = @transform_1, window_bounds = array<i64: 256, 256>}, {transform_indices = @transform_2, window_bounds = array<i64: 16, 256>}, {transform_indices = @transform_3, window_bounds = array<i64: 16, 256>}]} {
    %c0 = arith.constant 0 : index
    %c0_0 = arith.constant 0 : index
    %0 = vector.load %arg2[%c0, %c0_0] : memref<16x256xbf16, #tpu.memory_space<vmem>>, vector<16x256xbf16>
    %c0_1 = arith.constant 0 : index
    %c0_2 = arith.constant 0 : index
    %1 = vector.load %arg3[%c0_1, %c0_2] : memref<256x256xbf16, #tpu.memory_space<vmem>>, vector<256x256xbf16>
    %cst = arith.constant dense<0.000000e+00> : vector<16x256xf32>
    %2 = tpu.matmul %0, %1, %cst {dimension_numbers = #tpu.dot_dimension_numbers<[1], [0], [0], [1], [0, 0, 1, 1], [], []>} : vector<16x256xbf16>, vector<256x256xbf16>, vector<16x256xf32> -> vector<16x256xf32>
    %c0_3 = arith.constant 0 : index
    %c0_4 = arith.constant 0 : index
    %3 = vector.load %arg4[%c0_3, %c0_4] : memref<16x256xbf16, #tpu.memory_space<vmem>>, vector<16x256xbf16>
    %4 = arith.extf %3 : vector<16x256xbf16> to vector<16x256xf32>
    %5 = arith.addf %4, %2 : vector<16x256xf32>
    %6 = arith.truncf %5 : vector<16x256xf32> to vector<16x256xbf16>
    %c0_5 = arith.constant 0 : index
    %c0_6 = arith.constant 0 : index
    %7 = vector.load %arg5[%c0_5, %c0_6] : memref<16x256xbf16, #tpu.memory_space<vmem>>, vector<16x256xbf16>
    tpu.vector_store %arg5[%c0_5, %c0_6], %6 {strides = array<i32>} : memref<16x256xbf16, #tpu.memory_space<vmem>>, vector<16x256xbf16>,
    return
  }
  func.func @transform_0(%arg0: i32, %arg1: i32) -> (i32, i32) {
    %c0_i32 = arith.constant 0 : i32
    %c0_i32_0 = arith.constant 0 : i32
    return %arg0, %c0_i32 : i32, i32
  }
  func.func @transform_1(%arg0: i32, %arg1: i32) -> (i32, i32) {
    %c0_i32 = arith.constant 0 : i32
    %c0_i32_0 = arith.constant 0 : i32
    return %c0_i32, %arg1 : i32, i32
  }
  func.func @transform_2(%arg0: i32, %arg1: i32) -> (i32, i32) {
    %c0_i32 = arith.constant 0 : i32
    return %arg0, %arg1 : i32, i32
  }
  func.func @transform_3(%arg0: i32, %arg1: i32) -> (i32, i32) {
    %c0_i32 = arith.constant 0 : i32
    return %arg0, %arg1 : i32, i32
  }
}

module attributes {stable_mosaic.version = 11 : i64} {
  func.func @_norm_matmul_kernel(%arg0: i32, %arg1: i32, %arg2: memref<16x256xbf16, #tpu.memory_space<vmem>>, %arg3: memref<1x256xf32, #tpu.memory_space<vmem>>, %arg4: memref<256x512xbf16, #tpu.memory_space<vmem>>, %arg5: memref<16x512xf32, #tpu.memory_space<vmem>>, %arg6: memref<16x256xbf16, #tpu.memory_space<vmem>>) attributes {dimension_semantics = [#tpu.dimension_semantics<parallel>, #tpu.dimension_semantics<arbitrary>], iteration_bounds = array<i64: 1, 1>, scalar_prefetch = 0 : i64, scratch_operands = 1 : i64, tpu.core_type = #tpu.core_type<tc>, window_params = [{transform_indices = @transform_0, window_bounds = array<i64: 16, 256>}, {pipeline_mode = #tpu.pipeline_mode<synchronous>, transform_indices = @transform_1, window_bounds = array<i64: 1, 256>}, {transform_indices = @transform_2, window_bounds = array<i64: 256, 512>}, {transform_indices = @transform_3, window_bounds = array<i64: 16, 512>}]} {
    %c0_i32 = arith.constant 0 : i32
    %0 = arith.cmpi eq, %arg1, %c0_i32 : i32
    %1 = arith.extui %0 : i1 to i32
    %c0_i32_0 = arith.constant 0 : i32
    %2 = arith.cmpi ne, %1, %c0_i32_0 : i32
    scf.if %2 {
      %c0_6 = arith.constant 0 : index
      %c0_7 = arith.constant 0 : index
      %7 = vector.load %arg2[%c0_6, %c0_7] : memref<16x256xbf16, #tpu.memory_space<vmem>>, vector<16x256xbf16>
      %8 = arith.extf %7 : vector<16x256xbf16> to vector<16x256xf32>
      %9 = arith.mulf %8, %8 : vector<16x256xf32>
      %cst_8 = arith.constant dense<0.000000e+00> : vector<16xf32>
      %10 = vector.multi_reduction <add>, %9, %cst_8 [1] : vector<16x256xf32> to vector<16xf32>
      %11 = vector.shape_cast %10 : vector<16xf32> to vector<16x1xf32>
      %cst_9 = arith.constant 2.560000e+02 : f32
      %12 = vector.broadcast %cst_9 : f32 to vector<16x1xf32>
      %13 = arith.divf %11, %12 : vector<16x1xf32>
      %cst_10 = arith.constant 9.99999997E-7 : f32
      %14 = vector.broadcast %cst_10 : f32 to vector<16x1xf32>
      %15 = arith.addf %13, %14 : vector<16x1xf32>
      %16 = math.rsqrt %15 : vector<16x1xf32>
      %17 = vector.broadcast %16 : vector<16x1xf32> to vector<16x256xf32>
      %18 = arith.mulf %8, %17 : vector<16x256xf32>
      %c0_11 = arith.constant 0 : index
      %c0_12 = arith.constant 0 : index
      %19 = vector.load %arg3[%c0_11, %c0_12] : memref<1x256xf32, #tpu.memory_space<vmem>>, vector<1x256xf32>
      %20 = vector.broadcast %19 : vector<1x256xf32> to vector<16x256xf32>
      %21 = arith.mulf %18, %20 : vector<16x256xf32>
      %22 = arith.truncf %21 : vector<16x256xf32> to vector<16x256xbf16>
      %c0_13 = arith.constant 0 : index
      %c0_14 = arith.constant 0 : index
      %23 = vector.load %arg6[%c0_13, %c0_14] : memref<16x256xbf16, #tpu.memory_space<vmem>>, vector<16x256xbf16>
      tpu.vector_store %arg6[%c0_13, %c0_14], %22 {strides = array<i32>} : memref<16x256xbf16, #tpu.memory_space<vmem>>, vector<16x256xbf16>,
    } else {
    }
    %c0 = arith.constant 0 : index
    %c0_1 = arith.constant 0 : index
    %3 = vector.load %arg6[%c0, %c0_1] : memref<16x256xbf16, #tpu.memory_space<vmem>>, vector<16x256xbf16>
    %c0_2 = arith.constant 0 : index
    %c0_3 = arith.constant 0 : index
    %4 = vector.load %arg4[%c0_2, %c0_3] : memref<256x512xbf16, #tpu.memory_space<vmem>>, vector<256x512xbf16>
    %cst = arith.constant dense<0.000000e+00> : vector<16x512xf32>
    %5 = tpu.matmul %3, %4, %cst {dimension_numbers = #tpu.dot_dimension_numbers<[1], [0], [0], [1], [0, 0, 1, 1], [], []>} : vector<16x256xbf16>, vector<256x512xbf16>, vector<16x512xf32> -> vector<16x512xf32>
    %c0_4 = arith.constant 0 : index
    %c0_5 = arith.constant 0 : index
    %6 = vector.load %arg5[%c0_4, %c0_5] : memref<16x512xf32, #tpu.memory_space<vmem>>, vector<16x512xf32>
    tpu.vector_store %arg5[%c0_4, %c0_5], %5 {strides = array<i32>} : memref<16x512xf32, #tpu.memory_space<vmem>>, vector<16x512xf32>,
    return
  }
  func.func @transform_0(%arg0: i32, %arg1: i32) -> (i32, i32) {
    %c0_i32 = arith.constant 0 : i32
    %c0_i32_0 = arith.constant 0 : i32
    return %arg0, %c0_i32 : i32, i32
  }
  func.func @transform_1(%arg0: i32, %arg1: i32) -> (i32, i32) {
    %c0_i32 = arith.constant 0 : i32
    %c0_i32_0 = arith.constant 0 : i32
    %c0_i32_1 = arith.constant 0 : i32
    return %c0_i32, %c0_i32_0 : i32, i32
  }
  func.func @transform_2(%arg0: i32, %arg1: i32) -> (i32, i32) {
    %c0_i32 = arith.constant 0 : i32
    %c0_i32_0 = arith.constant 0 : i32
    return %c0_i32, %arg1 : i32, i32
  }
  func.func @transform_3(%arg0: i32, %arg1: i32) -> (i32, i32) {
    %c0_i32 = arith.constant 0 : i32
    return %arg0, %arg1 : i32, i32
  }
}

</mosaic_0001>

<llo_original>
// kernel: forward.12
$region0: #{forward.12}
  #allocation0 [shape = 'u32[]', space=smem, size = 0x4, offset = 0x4, fixed_abs, tag = 'smem constant byte address 0x4 - core index']
  #allocation1 [shape = 'u32[144,128]{1,0:T(1,128)}', space=vmem, size = 0x12000, scoped, tag = 'internal scratch']
  %s0 = inlined_call_operand.vmem [shape: bf16[2,2,8,128], index: 0, kind: input, shape index: {}]
  %s1 = inlined_call_operand.vmem [shape: f32[8,128], index: 1, kind: input, shape index: {}]
  %s2 = inlined_call_operand.vmem [shape: f32[8,128], index: 2, kind: input, shape index: {}]
  %s3 = inlined_call_operand.vmem [shape: bf16[2,2,8,128], index: 3, kind: output, shape index: {}]
  %s4 = sld [smem:[#allocation0]]
  $region45: #{forward.12} parent=0
    _
  %s6 = ssub.s32 1, %s4
  %s7 = scalar_select 0, %s6, %s4
  loop: start=0, step=1, limit=4
  $region2: #{forward.12} parent=0 // loop_pre_header
    _
  $region3: #{forward.12} parent=0 // loop_header
    %s9 = sphi 0, %s13
    %p10 = scmp.ge.s32.totalorder %s9, 4
    %s16 = sphi 0, %s28
    %s17 = sphi 0, %s24
    %s18 = sphi 0, %s16
    %s19 = sphi 0, %s17
    %s20 = sphi 0, %s18
    %s21 = sphi 0, %s19
    %s33 = sphi 0, %s35
    %s36 = sphi 0, %s33
    %s37 = sphi 0, %s36
    %s53 = sphi 0, %s37
    %s59 = sphi 0, %s61
    %s62 = sphi 0, %s59
    %s63 = sphi 0, %s62
    %s79 = sphi 0, %s63
    %s85 = sphi 0, %s87
    %s88 = sphi 0, %s85
    %s89 = sphi 0, %s88
    %s105 = sphi 0, %s89
    %s113 = sphi 0, %s115
    %s116 = sphi 0, %s113
    %s117 = sphi 0, %s116
    %s133 = sphi 0, %s117
  $region4: #{forward.12} parent=0 // loop_header_branch
    %12 = sbr.rel (%p10) target = $region8
  $region5: #{forward.12} parent=0 // loop_body
    %s14 = ssub.s32 %s9, 1
    %s15 = ssub.s32 %s9, 2
    %s22 = sadd.s32 1, %s17
    %p23 = scmp.ge.s32.totalorder %s22, 1
    %s24 = scalar_select %p23, 0, %s22
    %s25 = sadd.s32 1, %s16
    %s26 = scalar_select %p23, %s25, %s16
    %p27 = scmp.ge.s32.totalorder %s26, 2
    %s28 = scalar_select %p27, 0, %s26
    %s29 = ssub.s32 %s16, %s28
    %s30 = ssub.s32 %s17, %s24
    %s31 = sor.u32 %s29, %s30
    %p32 = scmp.eq.s32.totalorder %s31, 0
    %s34 = sadd.s32 %s33, 1
    %s35 = scalar_select %p32, %s33, %s34
    %p38 = pneg %p32
    %p39 = scmp.eq.s32.totalorder %s9, 1
    %p40 = por %p38, %p39
    %p41 = scmp.ne.s32.totalorder %s33, %s36
    %p42 = scmp.eq.s32.totalorder %s9, 0
    %p43 = por %p41, %p42
    %p44 = scmp.ne.s32.totalorder %s33, %s36
    %p45 = scmp.eq.s32.totalorder %s14, 1
    %p46 = por %p44, %p45
    %p47 = scmp.ne.s32.totalorder %s36, %s37
    %p48 = scmp.eq.s32.totalorder %s14, 0
    %p49 = por %p47, %p48
    %p50 = scmp.ne.s32.totalorder %s36, %s37
    %p51 = scmp.eq.s32.totalorder %s15, 1
    %p52 = por %p50, %p51
    %p54 = scmp.ne.s32.totalorder %s37, %s53
    %p55 = scmp.eq.s32.totalorder %s15, 0
    %p56 = por %p54, %p55
    %s57 = ssub.s32 %s17, %s24
    %p58 = scmp.eq.s32.totalorder %s57, 0
    %s60 = sadd.s32 %s59, 1
    %s61 = scalar_select %p58, %s59, %s60
    %p64 = pneg %p58
    %p65 = scmp.eq.s32.totalorder %s9, 1
    %p66 = por %p64, %p65
    %p67 = scmp.ne.s32.totalorder %s59, %s62
    %p68 = scmp.eq.s32.totalorder %s9, 0
    %p69 = por %p67, %p68
    %p70 = scmp.ne.s32.totalorder %s59, %s62
    %p71 = scmp.eq.s32.totalorder %s14, 1
    %p72 = por %p70, %p71
    %p73 = scmp.ne.s32.totalorder %s62, %s63
    %p74 = scmp.eq.s32.totalorder %s14, 0
    %p75 = por %p73, %p74
    %p76 = scmp.ne.s32.totalorder %s62, %s63
    %p77 = scmp.eq.s32.totalorder %s15, 1
    %p78 = por %p76, %p77
    %p80 = scmp.ne.s32.totalorder %s63, %s79
    %p81 = scmp.eq.s32.totalorder %s15, 0
    %p82 = por %p80, %p81
    %s83 = ssub.s32 %s17, %s24
    %p84 = scmp.eq.s32.totalorder %s83, 0
    %s86 = sadd.s32 %s85, 1
    %s87 = scalar_select %p84, %s85, %s86
    %p90 = pneg %p84
    %p91 = scmp.eq.s32.totalorder %s9, 1
    %p92 = por %p90, %p91
    %p93 = scmp.ne.s32.totalorder %s85, %s88
    %p94 = scmp.eq.s32.totalorder %s9, 0
    %p95 = por %p93, %p94
    %p96 = scmp.ne.s32.totalorder %s85, %s88
    %p97 = scmp.eq.s32.totalorder %s14, 1
    %p98 = por %p96, %p97
    %p99 = scmp.ne.s32.totalorder %s88, %s89
    %p100 = scmp.eq.s32.totalorder %s14, 0
    %p101 = por %p99, %p100
    %p102 = scmp.ne.s32.totalorder %s88, %s89
    %p103 = scmp.eq.s32.totalorder %s15, 1
    %p104 = por %p102, %p103
    %p106 = scmp.ne.s32.totalorder %s89, %s105
    %p107 = scmp.eq.s32.totalorder %s15, 0
    %p108 = por %p106, %p107
    %s109 = ssub.s32 %s16, %s28
    %s110 = ssub.s32 %s17, %s24
    %s111 = sor.u32 %s109, %s110
    %p112 = scmp.eq.s32.totalorder %s111, 0
    %s114 = sadd.s32 %s113, 1
    %s115 = scalar_select %p112, %s113, %s114
    %p118 = pneg %p112
    %p119 = scmp.eq.s32.totalorder %s9, 1
    %p120 = por %p118, %p119
    %p121 = scmp.ne.s32.totalorder %s113, %s116
    %p122 = scmp.eq.s32.totalorder %s9, 0
    %p123 = por %p121, %p122
    %p124 = scmp.ne.s32.totalorder %s113, %s116
    %p125 = scmp.eq.s32.totalorder %s14, 1
    %p126 = por %p124, %p125
    %p127 = scmp.ne.s32.totalorder %s116, %s117
    %p128 = scmp.eq.s32.totalorder %s14, 0
    %p129 = por %p127, %p128
    %p130 = scmp.ne.s32.totalorder %s116, %s117
    %p131 = scmp.eq.s32.totalorder %s15, 1
    %p132 = por %p130, %p131
    %p134 = scmp.ne.s32.totalorder %s117, %s133
    %p135 = scmp.eq.s32.totalorder %s15, 0
    %p136 = por %p134, %p135
    %p137 = scmp.le.s32.totalorder 1, %s9
    %p138 = scmp.lt.s32.totalorder %s9, 3
    %p139 = pnand %p137, %p138
    %p140 = pneg %p139
    // Predicated region
    $region9: #{forward.12} parent=5 // pred_check
      _
    $region10: #{forward.12} parent=5 // pred_check_branch
      %142 = sbr.rel (%p139) target = $region12
    $region11: #{forward.12} parent=5 // pred_region
      %s143 = ssub.s32 %s9, 1
      // Predicated region
      $region13: #{forward.12} parent=11 // pred_check
        %p144 = pneg %p75
      $region14: #{forward.12} parent=11 // pred_check_branch
        %146 = sbr.rel (%p144) target = $region16
      $region15: #{forward.12} parent=11 // pred_region
        %p147 = scmp.lt.s32.totalorder %s19, 0
        %s148 = scalar_select %p147, %s19, 0
        %s149 = smul.addr %s148, 8
        %s150 = scalar_lea.vmem %s1, %s149
      $region16: #{forward.12} parent=11 // pred_fallthru
        _
      // Predicated region
      $region17: #{forward.12} parent=11 // pred_check
        %p151 = pneg %p101
      $region18: #{forward.12} parent=11 // pred_check_branch
        %153 = sbr.rel (%p151) target = $region20
      $region19: #{forward.12} parent=11 // pred_region
        %p154 = scmp.lt.s32.totalorder %s19, 0
        %s155 = scalar_select %p154, %s19, 0
        %s156 = smul.addr %s155, 8
        %s157 = scalar_lea.vmem %s2, %s156
      $region20: #{forward.12} parent=11 // pred_fallthru
        _
    $region12: #{forward.12} parent=5 // pred_fallthru
      _
    %p158 = scmp.lt.s32.totalorder %s9, 2
    // Predicated region
    $region21: #{forward.12} parent=5 // pred_check
      %p159 = pneg %p158
    $region22: #{forward.12} parent=5 // pred_check_branch
      %161 = sbr.rel (%p159) target = $region24
    $region23: #{forward.12} parent=5 // pred_region
      // Predicated region
      $region25: #{forward.12} parent=23 // pred_check
        %p162 = pneg %p43
      $region26: #{forward.12} parent=23 // pred_check_branch
        %164 = sbr.rel (%p162) target = $region28
      $region27: #{forward.12} parent=23 // pred_region
        %p165 = scmp.lt.s32.totalorder %s16, 1
        %s166 = scalar_select %p165, %s16, 1
        %p167 = scmp.lt.s32.totalorder %s17, 0
        %s168 = scalar_select %p167, %s17, 0
        %s169 = smul.addr %s166, 2
        %s170 = sadd.s32 %s168, %s169
        %s171 = smul.addr %s170, 4
        %s172 = scalar_lea.vmem %s0, %s171
      $region28: #{forward.12} parent=23 // pred_fallthru
        _
    $region24: #{forward.12} parent=5 // pred_fallthru
      _
    %p173 = scmp.le.s32.totalorder 1, %s9
    %p174 = scmp.lt.s32.totalorder %s9, 3
    %p175 = pnand %p173, %p174
    %p176 = pneg %p175
    // Predicated region
    $region29: #{forward.12} parent=5 // pred_check
      _
    $region30: #{forward.12} parent=5 // pred_check_branch
      %178 = sbr.rel (%p175) target = $region32
    $region31: #{forward.12} parent=5 // pred_region
      %s179 = ssub.s32 %s9, 1
      %p180 = scmp.lt.s32.totalorder %s18, 1
      %s181 = scalar_select %p180, %s18, 1
      %p182 = scmp.lt.s32.totalorder %s19, 0
      %s183 = scalar_select %p182, %s19, 0
      %s184 = smul.addr %s181, 2
      %s185 = sadd.s32 %s183, %s184
      %s186 = smul.addr %s185, 4
      %s187 = scalar_lea.vmem %s0, %s186
      %p188 = pneg %p49
      %p189 = pneg %p46
      %p190 = scmp.lt.s32.totalorder %s19, 0
      %s191 = scalar_select %p190, %s19, 0
      %s192 = smul.addr %s191, 8
      %s193 = scalar_lea.vmem %s1, %s192
      %p194 = pneg %p75
      %p195 = pneg %p72
      %p196 = scmp.lt.s32.totalorder %s19, 0
      %s197 = scalar_select %p196, %s19, 0
      %s198 = smul.addr %s197, 8
      %s199 = scalar_lea.vmem %s2, %s198
      %p200 = pneg %p101
      %p201 = pneg %p98
      %p202 = pneg %p129
      %p203 = pneg %p126
      %p204 = scmp.lt.s32.totalorder %s18, 1
      %s205 = scalar_select %p204, %s18, 1
      %p206 = scmp.lt.s32.totalorder %s19, 0
      %s207 = scalar_select %p206, %s19, 0
      %s208 = smul.addr %s205, 2
      %s209 = sadd.s32 %s207, %s208
      %s210 = smul.addr %s209, 4
      %s211 = scalar_lea.vmem %s3, %s210
      %p212 = scmp.lt.s32.totalorder %s18, 1
      %s213 = scalar_select %p212, %s18, 1
      %p214 = scmp.lt.s32.totalorder %s19, 0
      %s215 = scalar_select %p214, %s19, 0
      %s216 = smul.addr %s213, 2
      %s217 = sadd.s32 %s215, %s216
      %s218 = smul.addr %s217, 4
      %s219 = scalar_lea.vmem %s0, %s218
      %p220 = scmp.lt.s32.totalorder %s19, 0
      %s221 = scalar_select %p220, %s19, 0
      %s222 = smul.addr %s221, 8
      %s223 = scalar_lea.vmem %s1, %s222
      %p224 = scmp.lt.s32.totalorder %s19, 0
      %s225 = scalar_select %p224, %s19, 0
      %s226 = smul.addr %s225, 8
      %s227 = scalar_lea.vmem %s2, %s226
      %p228 = scmp.lt.s32.totalorder %s18, 1
      %s229 = scalar_select %p228, %s18, 1
      %p230 = scmp.lt.s32.totalorder %s19, 0
      %s231 = scalar_select %p230, %s19, 0
      %s232 = smul.addr %s229, 2
      %s233 = sadd.s32 %s231, %s232
      %s234 = smul.addr %s233, 4
      %s235 = scalar_lea.vmem %s3, %s234
      %v236 = vld [vmem:[%s219] sm:$0xf]
      %v237 = vld [vmem:[%s219 + $0x4] sm:$0xf]
      %v238 = vunpack.c.l.bf16 %v236
      %v239 = vunpack.c.l.bf16 %v237
      %v240 = vlaneseq
      %v241 = vand.u32 %v240, 127
      %vm242 = vcmp.lt.s32.totalorder %v241, 64
      %v243 = vsel %vm242, -1.0, 1.0
      %244 = vrot.lane.b32.xlu0 %v238, 64
      %v245 = vpop.permute.xlu0 %244
      %246 = vrot.lane.b32.xlu0 %v239, 64
      %v247 = vpop.permute.xlu0 %246
      %v248 = vmul.f32 %v245, %v243
      %v249 = vmul.f32 %v247, %v243
      %v250 = vld [vmem:[%s223] sm:$0xff]
      %v251 = vmul.f32 %v238, %v250
      %v252 = vmul.f32 %v239, %v250
      %v253 = vld [vmem:[%s227] sm:$0xff]
      %v254 = vmul.f32 %v248, %v253
      %v255 = vmul.f32 %v249, %v253
      %v256 = vadd.f32 %v251, %v254
      %v257 = vadd.f32 %v252, %v255
      %v258 = vpack.c.bf16 %v256, %v256
      %v259 = vpack.c.bf16 %v257, %v257
      %260 = vst [vmem:[%s235] sm:$0xf] %v258
      %261 = vst [vmem:[%s235 + $0x4] sm:$0xf] %v259
      %p262 = scmp.lt.s32.totalorder %s18, 1
      %s263 = scalar_select %p262, %s18, 1
      %p264 = scmp.lt.s32.totalorder %s19, 0
      %s265 = scalar_select %p264, %s19, 0
      %s266 = smul.addr %s263, 2
      %s267 = sadd.s32 %s265, %s266
      %s268 = smul.addr %s267, 4
      %s269 = scalar_lea.vmem %s3, %s268
      // Predicated region
      $region33: #{forward.12} parent=31 // pred_check
        %p270 = pneg %p126
      $region34: #{forward.12} parent=31 // pred_check_branch
        %272 = sbr.rel (%p270) target = $region36
      $region35: #{forward.12} parent=31 // pred_region
        _
      $region36: #{forward.12} parent=31 // pred_fallthru
        _
    $region32: #{forward.12} parent=5 // pred_fallthru
      _
    %p273 = scmp.le.s32.totalorder 2, %s9
    // Predicated region
    $region37: #{forward.12} parent=5 // pred_check
      %p274 = pneg %p273
    $region38: #{forward.12} parent=5 // pred_check_branch
      %276 = sbr.rel (%p274) target = $region40
    $region39: #{forward.12} parent=5 // pred_region
      %s277 = ssub.s32 %s9, 2
      // Predicated region
      $region41: #{forward.12} parent=39 // pred_check
        %p278 = pneg %p132
      $region42: #{forward.12} parent=39 // pred_check_branch
        %280 = sbr.rel (%p278) target = $region44
      $region43: #{forward.12} parent=39 // pred_region
        %p281 = scmp.lt.s32.totalorder %s20, 1
        %s282 = scalar_select %p281, %s20, 1
        %p283 = scmp.lt.s32.totalorder %s21, 0
        %s284 = scalar_select %p283, %s21, 0
        %s285 = smul.addr %s282, 2
        %s286 = sadd.s32 %s284, %s285
        %s287 = smul.addr %s286, 4
        %s288 = scalar_lea.vmem %s3, %s287
      $region44: #{forward.12} parent=39 // pred_fallthru
        _
    $region40: #{forward.12} parent=5 // pred_fallthru
      _
  $region6: #{forward.12} parent=0 // loop_footer
    %s13 = sadd.s32 1, %s9
  $region7: #{forward.12} parent=0 // loop_footer_branch
    %8 = sbr.rel target = $region3
  $region8: #{forward.12} parent=0 // loop_exit
    _

// kernel: forward.14
$region0: #{forward.14}
  #allocation0 [shape = 'u32[]', space=smem, size = 0x4, offset = 0x4, fixed_abs, tag = 'smem constant byte address 0x4 - core index']
  #allocation1 [shape = 'u32[144,128]{1,0:T(1,128)}', space=vmem, size = 0x12000, scoped, tag = 'internal scratch']
  %s0 = inlined_call_operand.vmem [shape: bf16[16,256], index: 0, kind: input, shape index: {}]
  %s1 = inlined_call_operand.hbm [shape: bf16[256,256], index: 1, kind: input, shape index: {}]
  %s2 = inlined_call_operand.vmem [shape: bf16[16,256], index: 2, kind: input, shape index: {}]
  %s3 = inlined_call_operand.vmem [shape: bf16[16,256], index: 3, kind: output, shape index: {}]
  %s4 = sld [smem:[#allocation0]]
  $region26: #{forward.14} parent=0
    _
  %s6 = ssub.s32 1, %s4
  %s7 = scalar_select 0, %s6, %s4
  $region1: #{forward.14} parent=0
    #allocation2 [shape = 'u8[131072]{0}', space=vmem, size = 0x20000, scoped, tag = 'input window, operand 1, single buffered']
    #allocation3 [shape = 's32[1]{0}', space=sflag, size = 0x4, scoped, tag = 'scoped memory for forward.14']
    %8 = vsyncpa [#allocation3], 0
    // Predicated region
    $region2: #{forward.14} parent=1 // pred_check
      _
    $region3: #{forward.14} parent=1 // pred_check_branch
      %10 = sbr.rel (0) target = $region5
    $region4: #{forward.14} parent=1 // pred_region
      _
    $region5: #{forward.14} parent=1 // pred_fallthru
      _
    // Predicated region
    $region6: #{forward.14} parent=1 // pred_check
      _
    $region7: #{forward.14} parent=1 // pred_check_branch
      %12 = sbr.rel (0) target = $region9
    $region8: #{forward.14} parent=1 // pred_region
      %s14 = ssub.s32 4096, 4096
      %15 = vsyncadd [#allocation3], %s14
      %s16 = sshll.u32 [#allocation2], 4
      %s17 = int_to_ptr.vmem [resolvable:$true] %s16
      %22 = dma.hbm_to_vmem [thread:$0]  %s1, 4096, %s17, [#allocation3], 128, 128, 8
    $region9: #{forward.14} parent=1 // pred_fallthru
      _
    // Predicated region
    $region10: #{forward.14} parent=1 // pred_check
      _
    $region11: #{forward.14} parent=1 // pred_check_branch
      %24 = sbr.rel (0) target = $region13
    $region12: #{forward.14} parent=1 // pred_region
      _
    $region13: #{forward.14} parent=1 // pred_fallthru
      _
    // Predicated region
    $region14: #{forward.14} parent=1 // pred_check
      _
    $region15: #{forward.14} parent=1 // pred_check_branch
      %26 = sbr.rel (0) target = $region17
    $region16: #{forward.14} parent=1 // pred_region
      %27 = dma.done [#allocation3], 4096
    $region17: #{forward.14} parent=1 // pred_fallthru
      _
    %v28 = vld [vmem:[%s0] sm:$0xff]
    %v29 = vld [vmem:[%s0 + $0x8] sm:$0xff]
    %v30 = vld [vmem:[#allocation2] sm:$0xff]
    %v31 = vld [vmem:[#allocation2 + $0x8] sm:$0xff]
    %v32 = vld [vmem:[#allocation2 + $0x10] sm:$0xff]
    %v33 = vld [vmem:[#allocation2 + $0x18] sm:$0xff]
    %v34 = vld [vmem:[#allocation2 + $0x20] sm:$0xff]
    %v35 = vld [vmem:[#allocation2 + $0x28] sm:$0xff]
    %v36 = vld [vmem:[#allocation2 + $0x30] sm:$0xff]
    %v37 = vld [vmem:[#allocation2 + $0x38] sm:$0xff]
    %v38 = vld [vmem:[#allocation2 + $0x40] sm:$0xff]
    %v39 = vld [vmem:[#allocation2 + $0x48] sm:$0xff]
    %v40 = vld [vmem:[#allocation2 + $0x50] sm:$0xff]
    %v41 = vld [vmem:[#allocation2 + $0x58] sm:$0xff]
    %v42 = vld [vmem:[#allocation2 + $0x60] sm:$0xff]
    %v43 = vld [vmem:[#allocation2 + $0x68] sm:$0xff]
    %v44 = vld [vmem:[#allocation2 + $0x70] sm:$0xff]
    %v45 = vld [vmem:[#allocation2 + $0x78] sm:$0xff]
    %v46 = vld [vmem:[#allocation2 + $0x80] sm:$0xff]
    %v47 = vld [vmem:[#allocation2 + $0x88] sm:$0xff]
    %v48 = vld [vmem:[#allocation2 + $0x90] sm:$0xff]
    %v49 = vld [vmem:[#allocation2 + $0x98] sm:$0xff]
    %v50 = vld [vmem:[#allocation2 + $0xa0] sm:$0xff]
    %v51 = vld [vmem:[#allocation2 + $0xa8] sm:$0xff]
    %v52 = vld [vmem:[#allocation2 + $0xb0] sm:$0xff]
    %v53 = vld [vmem:[#allocation2 + $0xb8] sm:$0xff]
    %v54 = vld [vmem:[#allocation2 + $0xc0] sm:$0xff]
    %v55 = vld [vmem:[#allocation2 + $0xc8] sm:$0xff]
    %v56 = vld [vmem:[#allocation2 + $0xd0] sm:$0xff]
    %v57 = vld [vmem:[#allocation2 + $0xd8] sm:$0xff]
    %v58 = vld [vmem:[#allocation2 + $0xe0] sm:$0xff]
    %v59 = vld [vmem:[#allocation2 + $0xe8] sm:$0xff]
    %v60 = vld [vmem:[#allocation2 + $0xf0] sm:$0xff]
    %v61 = vld [vmem:[#allocation2 + $0xf8] sm:$0xff]
    %v64 = vunpack.c.l.b16 %v28
    %v65 = vunpack.c.h.b16 %v28
    %v66 = vunpack.c.l.b16 %v29
    %v67 = vunpack.c.h.b16 %v29
    %v68 = vpack.c.b16 %v66, %v64
    %v69 = vpack.c.b16 %v67, %v65
    %v104 = vunpack.c.l.b16 %v30
    %v105 = vunpack.c.h.b16 %v30
    %v106 = vunpack.c.l.b16 %v31
    %v107 = vunpack.c.h.b16 %v31
    %v108 = vunpack.c.l.b16 %v32
    %v109 = vunpack.c.h.b16 %v32
    %v110 = vunpack.c.l.b16 %v33
    %v111 = vunpack.c.h.b16 %v33
    %v112 = vunpack.c.l.b16 %v34
    %v113 = vunpack.c.h.b16 %v34
    %v114 = vunpack.c.l.b16 %v35
    %v115 = vunpack.c.h.b16 %v35
    %v116 = vunpack.c.l.b16 %v36
    %v117 = vunpack.c.h.b16 %v36
    %v118 = vunpack.c.l.b16 %v37
    %v119 = vunpack.c.h.b16 %v37
    %v120 = vunpack.c.l.b16 %v38
    %v121 = vunpack.c.h.b16 %v38
    %v122 = vunpack.c.l.b16 %v39
    %v123 = vunpack.c.h.b16 %v39
    %v124 = vunpack.c.l.b16 %v40
    %v125 = vunpack.c.h.b16 %v40
    %v126 = vunpack.c.l.b16 %v41
    %v127 = vunpack.c.h.b16 %v41
    %v128 = vunpack.c.l.b16 %v42
    %v129 = vunpack.c.h.b16 %v42
    %v130 = vunpack.c.l.b16 %v43
    %v131 = vunpack.c.h.b16 %v43
    %v132 = vunpack.c.l.b16 %v44
    %v133 = vunpack.c.h.b16 %v44
    %v134 = vunpack.c.l.b16 %v45
    %v135 = vunpack.c.h.b16 %v45
    %v136 = vunpack.c.l.b16 %v46
    %v137 = vunpack.c.h.b16 %v46
    %v138 = vunpack.c.l.b16 %v47
    %v139 = vunpack.c.h.b16 %v47
    %v140 = vunpack.c.l.b16 %v48
    %v141 = vunpack.c.h.b16 %v48
    %v142 = vunpack.c.l.b16 %v49
    %v143 = vunpack.c.h.b16 %v49
    %v144 = vunpack.c.l.b16 %v50
    %v145 = vunpack.c.h.b16 %v50
    %v146 = vunpack.c.l.b16 %v51
    %v147 = vunpack.c.h.b16 %v51
    %v148 = vunpack.c.l.b16 %v52
    %v149 = vunpack.c.h.b16 %v52
    %v150 = vunpack.c.l.b16 %v53
    %v151 = vunpack.c.h.b16 %v53
    %v152 = vunpack.c.l.b16 %v54
    %v153 = vunpack.c.h.b16 %v54
    %v154 = vunpack.c.l.b16 %v55
    %v155 = vunpack.c.h.b16 %v55
    %v156 = vunpack.c.l.b16 %v56
    %v157 = vunpack.c.h.b16 %v56
    %v158 = vunpack.c.l.b16 %v57
    %v159 = vunpack.c.h.b16 %v57
    %v160 = vunpack.c.l.b16 %v58
    %v161 = vunpack.c.h.b16 %v58
    %v162 = vunpack.c.l.b16 %v59
    %v163 = vunpack.c.h.b16 %v59
    %v164 = vunpack.c.l.b16 %v60
    %v165 = vunpack.c.h.b16 %v60
    %v166 = vunpack.c.l.b16 %v61
    %v167 = vunpack.c.h.b16 %v61
    %v168 = vpack.c.b16 %v106, %v104
    %v169 = vpack.c.b16 %v107, %v105
    %v170 = vpack.c.b16 %v110, %v108
    %v171 = vpack.c.b16 %v111, %v109
    %v172 = vpack.c.b16 %v114, %v112
    %v173 = vpack.c.b16 %v115, %v113
    %v174 = vpack.c.b16 %v118, %v116
    %v175 = vpack.c.b16 %v119, %v117
    %v176 = vpack.c.b16 %v122, %v120
    %v177 = vpack.c.b16 %v123, %v121
    %v178 = vpack.c.b16 %v126, %v124
    %v179 = vpack.c.b16 %v127, %v125
    %v180 = vpack.c.b16 %v130, %v128
    %v181 = vpack.c.b16 %v131, %v129
    %v182 = vpack.c.b16 %v134, %v132
    %v183 = vpack.c.b16 %v135, %v133
    %v184 = vpack.c.b16 %v138, %v136
    %v185 = vpack.c.b16 %v139, %v137
    %v186 = vpack.c.b16 %v142, %v140
    %v187 = vpack.c.b16 %v143, %v141
    %v188 = vpack.c.b16 %v146, %v144
    %v189 = vpack.c.b16 %v147, %v145
    %v190 = vpack.c.b16 %v150, %v148
    %v191 = vpack.c.b16 %v151, %v149
    %v192 = vpack.c.b16 %v154, %v152
    %v193 = vpack.c.b16 %v155, %v153
    %v194 = vpack.c.b16 %v158, %v156
    %v195 = vpack.c.b16 %v159, %v157
    %v196 = vpack.c.b16 %v162, %v160
    %v197 = vpack.c.b16 %v163, %v161
    %v198 = vpack.c.b16 %v166, %v164
    %v199 = vpack.c.b16 %v167, %v165
    %232 = vmatprep.subr.bf16.mxu0 %v169
    %233 = vmatpush1.bf16.msra.mxu0 %v168
    %234 = vmatprep.subr.bf16.mxu0 %v171
    %235 = vmatpush1.bf16.msra.mxu0 %v170
    %236 = vmatprep.subr.bf16.mxu0 %v173
    %237 = vmatpush1.bf16.msra.mxu0 %v172
    %238 = vmatprep.subr.bf16.mxu0 %v175
    %239 = vmatpush1.bf16.msra.mxu0 %v174
    %240 = vmatprep.subr.bf16.mxu0 %v177
    %241 = vmatpush1.bf16.msra.mxu0 %v176
    %242 = vmatprep.subr.bf16.mxu0 %v179
    %243 = vmatpush1.bf16.msra.mxu0 %v178
    %244 = vmatprep.subr.bf16.mxu0 %v181
    %245 = vmatpush1.bf16.msra.mxu0 %v180
    %246 = vmatprep.subr.bf16.mxu0 %v183
    %247 = vmatpush1.bf16.msra.mxu0 %v182
    %248 = vmatprep.subr.bf16.mxu0 %v185
    %249 = vmatpush1.bf16.msra.mxu0 %v184
    %250 = vmatprep.subr.bf16.mxu0 %v187
    %251 = vmatpush1.bf16.msra.mxu0 %v186
    %252 = vmatprep.subr.bf16.mxu0 %v189
    %253 = vmatpush1.bf16.msra.mxu0 %v188
    %254 = vmatprep.subr.bf16.mxu0 %v191
    %255 = vmatpush1.bf16.msra.mxu0 %v190
    %256 = vmatprep.subr.bf16.mxu0 %v193
    %257 = vmatpush1.bf16.msra.mxu0 %v192
    %258 = vmatprep.subr.bf16.mxu0 %v195
    %259 = vmatpush1.bf16.msra.mxu0 %v194
    %260 = vmatprep.subr.bf16.mxu0 %v197
    %261 = vmatpush1.bf16.msra.mxu0 %v196
    %262 = vmatprep.subr.bf16.mxu0 %v199
    %263 = vmatpush1.bf16.msra.mxu0 %v198
    %264 = vmatprep.mubr.bf16.mxu0 %v69
    %265 = vmatmul.mubr.bf16.gmra.mrb[0].mxu0 %v68
    %v266 = vpop.f32.mrb[0].mxu0
    %v267 = vadd.f32 0.0, %v266
    %v268 = vpop.f32.mrb[0].mxu0
    %v269 = vadd.f32 0.0, %v268
    %v270 = vpop.f32.mrb[0].mxu0
    %v271 = vadd.f32 0.0, %v270
    %v272 = vpop.f32.mrb[0].mxu0
    %v273 = vadd.f32 0.0, %v272
    %274 = vdwg.mxu0
    %v275 = vld [vmem:[%s2] sm:$0xff]
    %v276 = vld [vmem:[%s2 + $0x8] sm:$0xff]
    %v277 = vunpack.c.l.bf16 %v275
    %v278 = vunpack.c.h.bf16 %v275
    %v279 = vunpack.c.l.bf16 %v276
    %v280 = vunpack.c.h.bf16 %v276
    %v281 = vadd.f32 %v277, %v267
    %v282 = vadd.f32 %v278, %v269
    %v283 = vadd.f32 %v279, %v271
    %v284 = vadd.f32 %v280, %v273
    %v285 = vpack.c.bf16 %v283, %v281
    %v286 = vpack.c.bf16 %v284, %v282
    %v289 = vunpack.c.l.b16 %v285
    %v290 = vunpack.c.l.b16 %v286
    %v291 = vunpack.c.h.b16 %v285
    %v292 = vunpack.c.h.b16 %v286
    %v293 = vpack.c.b16 %v290, %v289
    %v294 = vpack.c.b16 %v292, %v291
    %297 = vst [vmem:[%s3] sm:$0xff] %v293
    %298 = vst [vmem:[%s3 + $0x8] sm:$0xff] %v294
    // Predicated region
    $region18: #{forward.14} parent=1 // pred_check
      _
    $region19: #{forward.14} parent=1 // pred_check_branch
      %300 = sbr.rel (0) target = $region21
    $region20: #{forward.14} parent=1 // pred_region
      _
    $region21: #{forward.14} parent=1 // pred_fallthru
      _
    // Predicated region
    $region22: #{forward.14} parent=1 // pred_check
      _
    $region23: #{forward.14} parent=1 // pred_check_branch
      %302 = sbr.rel (0) target = $region25
    $region24: #{forward.14} parent=1 // pred_region
      _
    $region25: #{forward.14} parent=1 // pred_fallthru
      _
    %303 = vsyncpa [#allocation3], 1

// kernel: forward.11
$region0: #{forward.11}
  #allocation0 [shape = 'u32[]', space=smem, size = 0x4, offset = 0x4, fixed_abs, tag = 'smem constant byte address 0x4 - core index']
  #allocation1 [shape = 'u32[144,128]{1,0:T(1,128)}', space=vmem, size = 0x12000, scoped, tag = 'internal scratch']
  #allocation2 [shape = 'bf16[16,256]{1,0:T(16,128)(2,1)}', space=vmem, size = 0x2000, scoped, tag = 'scratch operand']
  %s0 = inlined_call_operand.vmem [shape: bf16[16,256], index: 0, kind: input, shape index: {}]
  %s1 = inlined_call_operand.vmem [shape: f32[1,256], index: 1, kind: input, shape index: {}]
  %s2 = inlined_call_operand.hbm [shape: bf16[256,768], index: 2, kind: input, shape index: {}]
  %s3 = inlined_call_operand.vmem [shape: bf16[16,768], index: 3, kind: output, shape index: {}]
  %s4 = sld [smem:[#allocation0]]
  $region75: #{forward.11} parent=0
    _
  %s6 = ssub.s32 1, %s4
  %s7 = scalar_select 0, %s6, %s4
  $region1: #{forward.11} parent=0
    #allocation3 [shape = 'u8[393216]{0}', space=vmem, size = 0x60000, scoped, tag = 'input window, operand 2']
    #allocation4 [shape = 's32[2]{0}', space=sflag, size = 0x8, scoped, tag = 'scoped memory for forward.11']
    #allocation5 [shape = 'u8[24576]{0}', space=vmem, size = 0x6000, scoped, tag = 'output window, operand 0']
    %8 = vsyncpa [#allocation4], 0
    %s9 = scalar_lea.sflag [#allocation4], 1
    %10 = vsyncpa %s9, 0
    loop: start=0, step=1, limit=4
    $region2: #{forward.11} parent=1 // loop_pre_header
      _
    $region3: #{forward.11} parent=1 // loop_header
      %s12 = sphi 0, %s16
      %p13 = scmp.ge.s32.totalorder %s12, 4
      %s19 = sphi 0, %s31
      %s20 = sphi 0, %s27
      %s21 = sphi 0, %s19
      %s22 = sphi 0, %s20
      %s23 = sphi 0, %s21
      %s24 = sphi 0, %s22
      %s34 = sphi 0, %s36
      %s37 = sphi 0, %s34
      %s38 = sphi 0, %s37
      %s54 = sphi 0, %s38
      %s58 = sphi 0, %s58
      %s60 = sphi 0, %s58
      %s61 = sphi 0, %s60
      %s75 = sphi 0, %s61
      %s81 = sphi 0, %s83
      %s84 = sphi 0, %s81
      %s85 = sphi 0, %s84
      %s101 = sphi 0, %s85
      %s109 = sphi 0, %s111
      %s112 = sphi 0, %s109
      %s113 = sphi 0, %s112
      %s129 = sphi 0, %s113
    $region4: #{forward.11} parent=1 // loop_header_branch
      %15 = sbr.rel (%p13) target = $region8
    $region5: #{forward.11} parent=1 // loop_body
      %s17 = ssub.s32 %s12, 1
      %s18 = ssub.s32 %s12, 2
      %s25 = sadd.s32 1, %s20
      %p26 = scmp.ge.s32.totalorder %s25, 2
      %s27 = scalar_select %p26, 0, %s25
      %s28 = sadd.s32 1, %s19
      %s29 = scalar_select %p26, %s28, %s19
      %p30 = scmp.ge.s32.totalorder %s29, 1
      %s31 = scalar_select %p30, 0, %s29
      %s32 = ssub.s32 %s19, %s31
      %p33 = scmp.eq.s32.totalorder %s32, 0
      %s35 = sadd.s32 %s34, 1
      %s36 = scalar_select %p33, %s34, %s35
      %p39 = pneg %p33
      %p40 = scmp.eq.s32.totalorder %s12, 1
      %p41 = por %p39, %p40
      %p42 = scmp.ne.s32.totalorder %s34, %s37
      %p43 = scmp.eq.s32.totalorder %s12, 0
      %p44 = por %p42, %p43
      %p45 = scmp.ne.s32.totalorder %s34, %s37
      %p46 = scmp.eq.s32.totalorder %s17, 1
      %p47 = por %p45, %p46
      %p48 = scmp.ne.s32.totalorder %s37, %s38
      %p49 = scmp.eq.s32.totalorder %s17, 0
      %p50 = por %p48, %p49
      %p51 = scmp.ne.s32.totalorder %s37, %s38
      %p52 = scmp.eq.s32.totalorder %s18, 1
      %p53 = por %p51, %p52
      %p55 = scmp.ne.s32.totalorder %s38, %s54
      %p56 = scmp.eq.s32.totalorder %s18, 0
      %p57 = por %p55, %p56
      %s59 = sadd.s32 %s58, 1
      %p62 = scmp.eq.s32.totalorder %s12, 1
      %p63 = scmp.ne.s32.totalorder %s58, %s60
      %p64 = scmp.eq.s32.totalorder %s12, 0
      %p65 = por %p63, %p64
      %p66 = scmp.ne.s32.totalorder %s58, %s60
      %p67 = scmp.eq.s32.totalorder %s17, 1
      %p68 = por %p66, %p67
      %p69 = scmp.ne.s32.totalorder %s60, %s61
      %p70 = scmp.eq.s32.totalorder %s17, 0
      %p71 = por %p69, %p70
      %p72 = scmp.ne.s32.totalorder %s60, %s61
      %p73 = scmp.eq.s32.totalorder %s18, 1
      %p74 = por %p72, %p73
      %p76 = scmp.ne.s32.totalorder %s61, %s75
      %p77 = scmp.eq.s32.totalorder %s18, 0
      %p78 = por %p76, %p77
      %s79 = ssub.s32 %s20, %s27
      %p80 = scmp.eq.s32.totalorder %s79, 0
      %s82 = sadd.s32 %s81, 1
      %s83 = scalar_select %p80, %s81, %s82
      %p86 = pneg %p80
      %p87 = scmp.eq.s32.totalorder %s12, 1
      %p88 = por %p86, %p87
      %p89 = scmp.ne.s32.totalorder %s81, %s84
      %p90 = scmp.eq.s32.totalorder %s12, 0
      %p91 = por %p89, %p90
      %p92 = scmp.ne.s32.totalorder %s81, %s84
      %p93 = scmp.eq.s32.totalorder %s17, 1
      %p94 = por %p92, %p93
      %p95 = scmp.ne.s32.totalorder %s84, %s85
      %p96 = scmp.eq.s32.totalorder %s17, 0
      %p97 = por %p95, %p96
      %p98 = scmp.ne.s32.totalorder %s84, %s85
      %p99 = scmp.eq.s32.totalorder %s18, 1
      %p100 = por %p98, %p99
      %p102 = scmp.ne.s32.totalorder %s85, %s101
      %p103 = scmp.eq.s32.totalorder %s18, 0
      %p104 = por %p102, %p103
      %s105 = ssub.s32 %s19, %s31
      %s106 = ssub.s32 %s20, %s27
      %s107 = sor.u32 %s105, %s106
      %p108 = scmp.eq.s32.totalorder %s107, 0
      %s110 = sadd.s32 %s109, 1
      %s111 = scalar_select %p108, %s109, %s110
      %p114 = pneg %p108
      %p115 = scmp.eq.s32.totalorder %s12, 1
      %p116 = por %p114, %p115
      %p117 = scmp.ne.s32.totalorder %s109, %s112
      %p118 = scmp.eq.s32.totalorder %s12, 0
      %p119 = por %p117, %p118
      %p120 = scmp.ne.s32.totalorder %s109, %s112
      %p121 = scmp.eq.s32.totalorder %s17, 1
      %p122 = por %p120, %p121
      %p123 = scmp.ne.s32.totalorder %s112, %s113
      %p124 = scmp.eq.s32.totalorder %s17, 0
      %p125 = por %p123, %p124
      %p126 = scmp.ne.s32.totalorder %s112, %s113
      %p127 = scmp.eq.s32.totalorder %s18, 1
      %p128 = por %p126, %p127
      %p130 = scmp.ne.s32.totalorder %s113, %s129
      %p131 = scmp.eq.s32.totalorder %s18, 0
      %p132 = por %p130, %p131
      %p133 = scmp.le.s32.totalorder 1, %s12
      %p134 = scmp.lt.s32.totalorder %s12, 3
      %p135 = pnand %p133, %p134
      %p136 = pneg %p135
      // Predicated region
      $region9: #{forward.11} parent=5 // pred_check
        _
      $region10: #{forward.11} parent=5 // pred_check_branch
        %138 = sbr.rel (%p135) target = $region12
      $region11: #{forward.11} parent=5 // pred_region
        %s139 = ssub.s32 %s12, 1
        // Predicated region
        $region13: #{forward.11} parent=11 // pred_check
          %p140 = pneg %p50
        $region14: #{forward.11} parent=11 // pred_check_branch
          %142 = sbr.rel (%p140) target = $region16
        $region15: #{forward.11} parent=11 // pred_region
          %s143 = smul.u32 2, %s21
          %p144 = scmp.lt.s32.totalorder %s143, 1
          %s145 = scalar_select %p144, %s143, 1
          %s146 = smul.addr %s145, 2
          %s147 = smul.addr %s146, 4
          %s148 = scalar_lea.vmem %s0, %s147
          %s149 = smul.u32 2, %s21
        $region16: #{forward.11} parent=11 // pred_fallthru
          _
        // Predicated region
        $region17: #{forward.11} parent=11 // pred_check
          %p150 = pneg %p71
        $region18: #{forward.11} parent=11 // pred_check_branch
          %152 = sbr.rel (%p150) target = $region20
        $region19: #{forward.11} parent=11 // pred_region
          _
        $region20: #{forward.11} parent=11 // pred_fallthru
          _
      $region12: #{forward.11} parent=5 // pred_fallthru
        _
      %p153 = scmp.lt.s32.totalorder %s12, 2
      // Predicated region
      $region21: #{forward.11} parent=5 // pred_check
        %p154 = pneg %p153
      $region22: #{forward.11} parent=5 // pred_check_branch
        %156 = sbr.rel (%p154) target = $region24
      $region23: #{forward.11} parent=5 // pred_region
        // Predicated region
        $region25: #{forward.11} parent=23 // pred_check
          %p157 = pneg %p91
        $region26: #{forward.11} parent=23 // pred_check_branch
          %159 = sbr.rel (%p157) target = $region28
        $region27: #{forward.11} parent=23 // pred_region
          %s160 = sand.u32 %s81, 1
          %s161 = scalar_lea.sflag [#allocation4], %s160
          %s162 = sand.u32 %s81, 1
          %s163 = smul.addr %s162, 384
          %s164 = scalar_lea.vmem [#allocation3], %s163
          %s165 = smul.u32 3, %s20
          %s167 = ssub.s32 6144, 6144
          %168 = vsyncadd %s161, %s167
          %s169 = smul.addr %s165, 64
          %s170 = scalar_lea.hbm %s2, %s169
          %s171 = sshll.u32 %s164, 4
          %s172 = int_to_ptr.vmem [resolvable:$true] %s171
          %177 = dma.hbm_to_vmem [thread:$0]  %s170, 6144, %s172, %s161, 384, 192, 12
        $region28: #{forward.11} parent=23 // pred_fallthru
          _
      $region24: #{forward.11} parent=5 // pred_fallthru
        _
      %p178 = scmp.le.s32.totalorder 1, %s12
      %p179 = scmp.lt.s32.totalorder %s12, 3
      %p180 = pnand %p178, %p179
      %p181 = pneg %p180
      // Predicated region
      $region29: #{forward.11} parent=5 // pred_check
        _
      $region30: #{forward.11} parent=5 // pred_check_branch
        %183 = sbr.rel (%p180) target = $region32
      $region31: #{forward.11} parent=5 // pred_region
        %s184 = ssub.s32 %s12, 1
        %s185 = sand.u32 %s84, 1
        %s186 = scalar_lea.sflag [#allocation4], %s185
        %s187 = sand.u32 %s84, 1
        %s188 = smul.addr %s187, 384
        %s189 = scalar_lea.vmem [#allocation3], %s188
        // Predicated region
        $region33: #{forward.11} parent=31 // pred_check
          %p190 = pneg %p97
        $region34: #{forward.11} parent=31 // pred_check_branch
          %192 = sbr.rel (%p190) target = $region36
        $region35: #{forward.11} parent=31 // pred_region
          %193 = dma.done %s186, 6144
        $region36: #{forward.11} parent=31 // pred_fallthru
          _
        %s194 = smul.u32 2, %s21
        %p195 = scmp.lt.s32.totalorder %s194, 1
        %s196 = scalar_select %p195, %s194, 1
        %s197 = smul.addr %s196, 2
        %s198 = smul.addr %s197, 4
        %s199 = scalar_lea.vmem %s0, %s198
        %p200 = pneg %p50
        %p201 = pneg %p47
        %p202 = pneg %p71
        %p203 = pneg %p68
        %s204 = sand.u32 %s84, 1
        %s205 = scalar_lea.sflag [#allocation4], %s204
        %s206 = sand.u32 %s84, 1
        %s207 = smul.addr %s206, 384
        %s208 = scalar_lea.vmem [#allocation3], %s207
        %p209 = pneg %p97
        %p210 = pneg %p94
        %p211 = pneg %p125
        %p212 = pneg %p122
        %s213 = sand.u32 %s112, 1
        %s214 = sand.u32 %s112, 1
        %s215 = smul.addr %s214, 24
        %s216 = scalar_lea.vmem [#allocation5], %s215
        %s217 = smul.u32 2, %s21
        %p218 = scmp.lt.s32.totalorder %s217, 1
        %s219 = scalar_select %p218, %s217, 1
        %s220 = smul.addr %s219, 2
        %s221 = smul.addr %s220, 4
        %s222 = scalar_lea.vmem %s0, %s221
        %s223 = smul.u32 2, %s21
        %s224 = smul.u32 3, %s22
        %s225 = smul.u32 2, %s21
        %s226 = smul.u32 3, %s22
        %p228 = scmp.eq.s32.totalorder %s22, 0
        // Predicated region
        $region37: #{forward.11} parent=31 // pred_check
          %p229 = pneg %p228
        $region38: #{forward.11} parent=31 // pred_check_branch
          %231 = sbr.rel (%p229) target = $region40
        $region39: #{forward.11} parent=31 // pred_region
          %v232 = vld [vmem:[%s222] sm:$0xff]
          %v233 = vld [vmem:[%s222 + $0x8] sm:$0xff]
          %v234 = vunpack.c.l.bf16 %v232
          %v235 = vunpack.c.h.bf16 %v232
          %v236 = vunpack.c.l.bf16 %v233
          %v237 = vunpack.c.h.bf16 %v233
          %v238 = vmul.f32 %v234, %v234
          %v239 = vmul.f32 %v235, %v235
          %v240 = vmul.f32 %v236, %v236
          %v241 = vmul.f32 %v237, %v237
          %v242 = vadd.f32 %v238, %v239
          %243 = vadd.xlane.f32.xlu0 %v242
          %v244 = vpop.xlane.xlu0 %243
          %v245 = vadd.f32 %v240, %v241
          %246 = vadd.xlane.f32.xlu0 %v245
          %v247 = vpop.xlane.xlu0 %246
          %v248 = vrcp.pop 256.0
          %v249 = vmul.f32 %v244, %v248
          %v250 = vmul.f32 %v247, %v248
          %v251 = vadd.f32 %v249, 1e-06
          %v252 = vadd.f32 %v250, 1e-06
          %v253 = vrsqrt.pop %v251
          %v254 = vrsqrt.pop %v252
          %v255 = vmul.f32 %v234, %v253
          %v256 = vmul.f32 %v235, %v253
          %v257 = vmul.f32 %v236, %v254
          %v258 = vmul.f32 %v237, %v254
          %v259 = vld [vmem:[%s1] sm:$0x3]
          %v261 = vlaneseq
          %v262 = vshrl.u32 %v261, 7
          %v263 = vsub.s32 0, %v262
          %v264 = vrot.slane %v259, %v263
          %v265 = vlaneseq
          %v266 = vshrl.u32 %v265, 7
          %v267 = vsub.s32 1, %v266
          %v268 = vrot.slane %v259, %v267
          %v271 = vmul.f32 %v255, %v264
          %v272 = vmul.f32 %v256, %v268
          %v273 = vmul.f32 %v257, %v264
          %v274 = vmul.f32 %v258, %v268
          %v275 = vpack.c.bf16 %v273, %v271
          %v276 = vpack.c.bf16 %v274, %v272
          %277 = vst [vmem:[#allocation2] sm:$0xff] %v275
          %278 = vst [vmem:[#allocation2 + $0x8] sm:$0xff] %v276
        $region40: #{forward.11} parent=31 // pred_fallthru
          _
        %v279 = vld [vmem:[#allocation2] sm:$0xff]
        %v280 = vld [vmem:[#allocation2 + $0x8] sm:$0xff]
        %v281 = vld [vmem:[%s189] sm:$0xff]
        %v282 = vld [vmem:[%s189 + $0x8] sm:$0xf]
        %v283 = vld [vmem:[%s189 + $0xc] sm:$0xff]
        %v284 = vld [vmem:[%s189 + $0x14] sm:$0xf]
        %v285 = vld [vmem:[%s189 + $0x18] sm:$0xff]
        %v286 = vld [vmem:[%s189 + $0x20] sm:$0xf]
        %v287 = vld [vmem:[%s189 + $0x24] sm:$0xff]
        %v288 = vld [vmem:[%s189 + $0x2c] sm:$0xf]
        %v289 = vld [vmem:[%s189 + $0x30] sm:$0xff]
        %v290 = vld [vmem:[%s189 + $0x38] sm:$0xf]
        %v291 = vld [vmem:[%s189 + $0x3c] sm:$0xff]
        %v292 = vld [vmem:[%s189 + $0x44] sm:$0xf]
        %v293 = vld [vmem:[%s189 + $0x48] sm:$0xff]
        %v294 = vld [vmem:[%s189 + $0x50] sm:$0xf]
        %v295 = vld [vmem:[%s189 + $0x54] sm:$0xff]
        %v296 = vld [vmem:[%s189 + $0x5c] sm:$0xf]
        %v297 = vld [vmem:[%s189 + $0x60] sm:$0xff]
        %v298 = vld [vmem:[%s189 + $0x68] sm:$0xf]
        %v299 = vld [vmem:[%s189 + $0x6c] sm:$0xff]
        %v300 = vld [vmem:[%s189 + $0x74] sm:$0xf]
        %v301 = vld [vmem:[%s189 + $0x78] sm:$0xff]
        %v302 = vld [vmem:[%s189 + $0x80] sm:$0xf]
        %v303 = vld [vmem:[%s189 + $0x84] sm:$0xff]
        %v304 = vld [vmem:[%s189 + $0x8c] sm:$0xf]
        %v305 = vld [vmem:[%s189 + $0x90] sm:$0xff]
        %v306 = vld [vmem:[%s189 + $0x98] sm:$0xf]
        %v307 = vld [vmem:[%s189 + $0x9c] sm:$0xff]
        %v308 = vld [vmem:[%s189 + $0xa4] sm:$0xf]
        %v309 = vld [vmem:[%s189 + $0xa8] sm:$0xff]
        %v310 = vld [vmem:[%s189 + $0xb0] sm:$0xf]
        %v311 = vld [vmem:[%s189 + $0xb4] sm:$0xff]
        %v312 = vld [vmem:[%s189 + $0xbc] sm:$0xf]
        %v313 = vld [vmem:[%s189 + $0xc0] sm:$0xff]
        %v314 = vld [vmem:[%s189 + $0xc8] sm:$0xf]
        %v315 = vld [vmem:[%s189 + $0xcc] sm:$0xff]
        %v316 = vld [vmem:[%s189 + $0xd4] sm:$0xf]
        %v317 = vld [vmem:[%s189 + $0xd8] sm:$0xff]
        %v318 = vld [vmem:[%s189 + $0xe0] sm:$0xf]
        %v319 = vld [vmem:[%s189 + $0xe4] sm:$0xff]
        %v320 = vld [vmem:[%s189 + $0xec] sm:$0xf]
        %v321 = vld [vmem:[%s189 + $0xf0] sm:$0xff]
        %v322 = vld [vmem:[%s189 + $0xf8] sm:$0xf]
        %v323 = vld [vmem:[%s189 + $0xfc] sm:$0xff]
        %v324 = vld [vmem:[%s189 + $0x104] sm:$0xf]
        %v325 = vld [vmem:[%s189 + $0x108] sm:$0xff]
        %v326 = vld [vmem:[%s189 + $0x110] sm:$0xf]
        %v327 = vld [vmem:[%s189 + $0x114] sm:$0xff]
        %v328 = vld [vmem:[%s189 + $0x11c] sm:$0xf]
        %v329 = vld [vmem:[%s189 + $0x120] sm:$0xff]
        %v330 = vld [vmem:[%s189 + $0x128] sm:$0xf]
        %v331 = vld [vmem:[%s189 + $0x12c] sm:$0xff]
        %v332 = vld [vmem:[%s189 + $0x134] sm:$0xf]
        %v333 = vld [vmem:[%s189 + $0x138] sm:$0xff]
        %v334 = vld [vmem:[%s189 + $0x140] sm:$0xf]
        %v335 = vld [vmem:[%s189 + $0x144] sm:$0xff]
        %v336 = vld [vmem:[%s189 + $0x14c] sm:$0xf]
        %v337 = vld [vmem:[%s189 + $0x150] sm:$0xff]
        %v338 = vld [vmem:[%s189 + $0x158] sm:$0xf]
        %v339 = vld [vmem:[%s189 + $0x15c] sm:$0xff]
        %v340 = vld [vmem:[%s189 + $0x164] sm:$0xf]
        %v341 = vld [vmem:[%s189 + $0x168] sm:$0xff]
        %v342 = vld [vmem:[%s189 + $0x170] sm:$0xf]
        %v343 = vld [vmem:[%s189 + $0x174] sm:$0xff]
        %v344 = vld [vmem:[%s189 + $0x17c] sm:$0xf]
        %v409 = vunpack.c.l.b16 %v281
        %v410 = vunpack.c.h.b16 %v281
        %v411 = vunpack.c.l.b16 %v282
        %v412 = vunpack.c.l.b16 %v283
        %v413 = vunpack.c.h.b16 %v283
        %v414 = vunpack.c.l.b16 %v284
        %v415 = vunpack.c.l.b16 %v285
        %v416 = vunpack.c.h.b16 %v285
        %v417 = vunpack.c.l.b16 %v286
        %v418 = vunpack.c.l.b16 %v287
        %v419 = vunpack.c.h.b16 %v287
        %v420 = vunpack.c.l.b16 %v288
        %v421 = vunpack.c.l.b16 %v289
        %v422 = vunpack.c.h.b16 %v289
        %v423 = vunpack.c.l.b16 %v290
        %v424 = vunpack.c.l.b16 %v291
        %v425 = vunpack.c.h.b16 %v291
        %v426 = vunpack.c.l.b16 %v292
        %v427 = vunpack.c.l.b16 %v293
        %v428 = vunpack.c.h.b16 %v293
        %v429 = vunpack.c.l.b16 %v294
        %v430 = vunpack.c.l.b16 %v295
        %v431 = vunpack.c.h.b16 %v295
        %v432 = vunpack.c.l.b16 %v296
        %v433 = vunpack.c.l.b16 %v297
        %v434 = vunpack.c.h.b16 %v297
        %v435 = vunpack.c.l.b16 %v298
        %v436 = vunpack.c.l.b16 %v299
        %v437 = vunpack.c.h.b16 %v299
        %v438 = vunpack.c.l.b16 %v300
        %v439 = vunpack.c.l.b16 %v301
        %v440 = vunpack.c.h.b16 %v301
        %v441 = vunpack.c.l.b16 %v302
        %v442 = vunpack.c.l.b16 %v303
        %v443 = vunpack.c.h.b16 %v303
        %v444 = vunpack.c.l.b16 %v304
        %v445 = vunpack.c.l.b16 %v305
        %v446 = vunpack.c.h.b16 %v305
        %v447 = vunpack.c.l.b16 %v306
        %v448 = vunpack.c.l.b16 %v307
        %v449 = vunpack.c.h.b16 %v307
        %v450 = vunpack.c.l.b16 %v308
        %v451 = vunpack.c.l.b16 %v309
        %v452 = vunpack.c.h.b16 %v309
        %v453 = vunpack.c.l.b16 %v310
        %v454 = vunpack.c.l.b16 %v311
        %v455 = vunpack.c.h.b16 %v311
        %v456 = vunpack.c.l.b16 %v312
        %v457 = vunpack.c.l.b16 %v313
        %v458 = vunpack.c.h.b16 %v313
        %v459 = vunpack.c.l.b16 %v314
        %v460 = vunpack.c.l.b16 %v315
        %v461 = vunpack.c.h.b16 %v315
        %v462 = vunpack.c.l.b16 %v316
        %v463 = vunpack.c.l.b16 %v317
        %v464 = vunpack.c.h.b16 %v317
        %v465 = vunpack.c.l.b16 %v318
        %v466 = vunpack.c.l.b16 %v319
        %v467 = vunpack.c.h.b16 %v319
        %v468 = vunpack.c.l.b16 %v320
        %v469 = vunpack.c.l.b16 %v321
        %v470 = vunpack.c.h.b16 %v321
        %v471 = vunpack.c.l.b16 %v322
        %v472 = vunpack.c.l.b16 %v323
        %v473 = vunpack.c.h.b16 %v323
        %v474 = vunpack.c.l.b16 %v324
        %v475 = vunpack.c.l.b16 %v325
        %v476 = vunpack.c.h.b16 %v325
        %v477 = vunpack.c.l.b16 %v326
        %v478 = vunpack.c.l.b16 %v327
        %v479 = vunpack.c.h.b16 %v327
        %v480 = vunpack.c.l.b16 %v328
        %v481 = vunpack.c.l.b16 %v329
        %v482 = vunpack.c.h.b16 %v329
        %v483 = vunpack.c.l.b16 %v330
        %v484 = vunpack.c.l.b16 %v331
        %v485 = vunpack.c.h.b16 %v331
        %v486 = vunpack.c.l.b16 %v332
        %v487 = vunpack.c.l.b16 %v333
        %v488 = vunpack.c.h.b16 %v333
        %v489 = vunpack.c.l.b16 %v334
        %v490 = vunpack.c.l.b16 %v335
        %v491 = vunpack.c.h.b16 %v335
        %v492 = vunpack.c.l.b16 %v336
        %v493 = vunpack.c.l.b16 %v337
        %v494 = vunpack.c.h.b16 %v337
        %v495 = vunpack.c.l.b16 %v338
        %v496 = vunpack.c.l.b16 %v339
        %v497 = vunpack.c.h.b16 %v339
        %v498 = vunpack.c.l.b16 %v340
        %v499 = vunpack.c.l.b16 %v341
        %v500 = vunpack.c.h.b16 %v341
        %v501 = vunpack.c.l.b16 %v342
        %v502 = vunpack.c.l.b16 %v343
        %v503 = vunpack.c.h.b16 %v343
        %v504 = vunpack.c.l.b16 %v344
        %v505 = vpack.c.b16 %v412, %v409
        %v506 = vpack.c.b16 %v413, %v410
        %v507 = vpack.c.b16 %v414, %v411
        %v508 = vpack.c.b16 %v418, %v415
        %v509 = vpack.c.b16 %v419, %v416
        %v510 = vpack.c.b16 %v420, %v417
        %v511 = vpack.c.b16 %v424, %v421
        %v512 = vpack.c.b16 %v425, %v422
        %v513 = vpack.c.b16 %v426, %v423
        %v514 = vpack.c.b16 %v430, %v427
        %v515 = vpack.c.b16 %v431, %v428
        %v516 = vpack.c.b16 %v432, %v429
        %v517 = vpack.c.b16 %v436, %v433
        %v518 = vpack.c.b16 %v437, %v434
        %v519 = vpack.c.b16 %v438, %v435
        %v520 = vpack.c.b16 %v442, %v439
        %v521 = vpack.c.b16 %v443, %v440
        %v522 = vpack.c.b16 %v444, %v441
        %v523 = vpack.c.b16 %v448, %v445
        %v524 = vpack.c.b16 %v449, %v446
        %v525 = vpack.c.b16 %v450, %v447
        %v526 = vpack.c.b16 %v454, %v451
        %v527 = vpack.c.b16 %v455, %v452
        %v528 = vpack.c.b16 %v456, %v453
        %v529 = vpack.c.b16 %v460, %v457
        %v530 = vpack.c.b16 %v461, %v458
        %v531 = vpack.c.b16 %v462, %v459
        %v532 = vpack.c.b16 %v466, %v463
        %v533 = vpack.c.b16 %v467, %v464
        %v534 = vpack.c.b16 %v468, %v465
        %v535 = vpack.c.b16 %v472, %v469
        %v536 = vpack.c.b16 %v473, %v470
        %v537 = vpack.c.b16 %v474, %v471
        %v538 = vpack.c.b16 %v478, %v475
        %v539 = vpack.c.b16 %v479, %v476
        %v540 = vpack.c.b16 %v480, %v477
        %v541 = vpack.c.b16 %v484, %v481
        %v542 = vpack.c.b16 %v485, %v482
        %v543 = vpack.c.b16 %v486, %v483
        %v544 = vpack.c.b16 %v490, %v487
        %v545 = vpack.c.b16 %v491, %v488
        %v546 = vpack.c.b16 %v492, %v489
        %v547 = vpack.c.b16 %v496, %v493
        %v548 = vpack.c.b16 %v497, %v494
        %v549 = vpack.c.b16 %v498, %v495
        %v550 = vpack.c.b16 %v502, %v499
        %v551 = vpack.c.b16 %v503, %v500
        %v552 = vpack.c.b16 %v504, %v501
        %601 = vmatprep.subr.bf16.mxu0 %v506
        %602 = vmatpush1.bf16.msra.mxu0 %v505
        %603 = vmatprep.subr.bf16.mxu0 %v509
        %604 = vmatpush1.bf16.msra.mxu0 %v508
        %605 = vmatprep.subr.bf16.mxu0 %v512
        %606 = vmatpush1.bf16.msra.mxu0 %v511
        %607 = vmatprep.subr.bf16.mxu0 %v515
        %608 = vmatpush1.bf16.msra.mxu0 %v514
        %609 = vmatprep.subr.bf16.mxu0 %v518
        %610 = vmatpush1.bf16.msra.mxu0 %v517
        %611 = vmatprep.subr.bf16.mxu0 %v521
        %612 = vmatpush1.bf16.msra.mxu0 %v520
        %613 = vmatprep.subr.bf16.mxu0 %v524
        %614 = vmatpush1.bf16.msra.mxu0 %v523
        %615 = vmatprep.subr.bf16.mxu0 %v527
        %616 = vmatpush1.bf16.msra.mxu0 %v526
        %617 = vmatprep.subr.bf16.mxu0 %v530
        %618 = vmatpush1.bf16.msra.mxu0 %v529
        %619 = vmatprep.subr.bf16.mxu0 %v533
        %620 = vmatpush1.bf16.msra.mxu0 %v532
        %621 = vmatprep.subr.bf16.mxu0 %v536
        %622 = vmatpush1.bf16.msra.mxu0 %v535
        %623 = vmatprep.subr.bf16.mxu0 %v539
        %624 = vmatpush1.bf16.msra.mxu0 %v538
        %625 = vmatprep.subr.bf16.mxu0 %v542
        %626 = vmatpush1.bf16.msra.mxu0 %v541
        %627 = vmatprep.subr.bf16.mxu0 %v545
        %628 = vmatpush1.bf16.msra.mxu0 %v544
        %629 = vmatprep.subr.bf16.mxu0 %v548
        %630 = vmatpush1.bf16.msra.mxu0 %v547
        %631 = vmatprep.subr.bf16.mxu0 %v551
        %632 = vmatpush1.bf16.msra.mxu0 %v550
        %633 = vmatprep.mubr.bf16.mxu0 %v280
        %634 = vmatmul.mubr.bf16.gmra.mrb[0].mxu0 %v279
        %v635 = vpop.f32.mrb[0].mxu0
        %v636 = vadd.f32 0.0, %v635
        %v637 = vpop.f32.mrb[0].mxu0
        %v638 = vadd.f32 0.0, %v637
        %v639 = vpop.f32.mrb[0].mxu0
        %v640 = vadd.f32 0.0, %v639
        %v641 = vpop.f32.mrb[0].mxu0
        %v642 = vadd.f32 0.0, %v641
        %643 = vdwg.mxu0
        %644 = vmatprep.subr.bf16.mxu0 0
        %645 = vmatpush1.bf16.msra.mxu0 %v507
        %646 = vmatprep.subr.bf16.mxu0 0
        %647 = vmatpush1.bf16.msra.mxu0 %v510
        %648 = vmatprep.subr.bf16.mxu0 0
        %649 = vmatpush1.bf16.msra.mxu0 %v513
        %650 = vmatprep.subr.bf16.mxu0 0
        %651 = vmatpush1.bf16.msra.mxu0 %v516
        %652 = vmatprep.subr.bf16.mxu0 0
        %653 = vmatpush1.bf16.msra.mxu0 %v519
        %654 = vmatprep.subr.bf16.mxu0 0
        %655 = vmatpush1.bf16.msra.mxu0 %v522
        %656 = vmatprep.subr.bf16.mxu0 0
        %657 = vmatpush1.bf16.msra.mxu0 %v525
        %658 = vmatprep.subr.bf16.mxu0 0
        %659 = vmatpush1.bf16.msra.mxu0 %v528
        %660 = vmatprep.subr.bf16.mxu0 0
        %661 = vmatpush1.bf16.msra.mxu0 %v531
        %662 = vmatprep.subr.bf16.mxu0 0
        %663 = vmatpush1.bf16.msra.mxu0 %v534
        %664 = vmatprep.subr.bf16.mxu0 0
        %665 = vmatpush1.bf16.msra.mxu0 %v537
        %666 = vmatprep.subr.bf16.mxu0 0
        %667 = vmatpush1.bf16.msra.mxu0 %v540
        %668 = vmatprep.subr.bf16.mxu0 0
        %669 = vmatpush1.bf16.msra.mxu0 %v543
        %670 = vmatprep.subr.bf16.mxu0 0
        %671 = vmatpush1.bf16.msra.mxu0 %v546
        %672 = vmatprep.subr.bf16.mxu0 0
        %673 = vmatpush1.bf16.msra.mxu0 %v549
        %674 = vmatprep.subr.bf16.mxu0 0
        %675 = vmatpush1.bf16.msra.mxu0 %v552
        %676 = vmatprep.mubr.bf16.mxu0 %v280
        %677 = vmatmul.mubr.bf16.gmra.mrb[0].mxu0 %v279
        %v678 = vpop.f32.mrb[0].mxu0
        %v679 = vadd.f32 0.0, %v678
        %v680 = vpop.f32.mrb[0].mxu0
        %v681 = vpop.f32.mrb[0].mxu0
        %v682 = vadd.f32 0.0, %v681
        %v683 = vpop.f32.mrb[0].mxu0
        %684 = vdwg.mxu0
        %v685 = vpack.c.bf16 %v640, %v636
        %v686 = vpack.c.bf16 %v642, %v638
        %v687 = vpack.c.bf16 %v682, %v679
        %v691 = vunpack.c.l.b16 %v685
        %v692 = vunpack.c.l.b16 %v686
        %v693 = vunpack.c.l.b16 %v687
        %v694 = vunpack.c.h.b16 %v685
        %v695 = vunpack.c.h.b16 %v686
        %v696 = vunpack.c.h.b16 %v687
        %v697 = vpack.c.b16 %v692, %v691
        %v698 = vpack.c.b16 %v693, %v693
        %v699 = vpack.c.b16 %v695, %v694
        %v700 = vpack.c.b16 %v696, %v696
        %705 = vst [vmem:[%s216] sm:$0xff] %v697
        %706 = vst [vmem:[%s216 + $0x8] sm:$0xf] %v698
        %707 = vst [vmem:[%s216 + $0xc] sm:$0xff] %v699
        %708 = vst [vmem:[%s216 + $0x14] sm:$0xf] %v700
        %s709 = sand.u32 %s112, 1
        %s710 = sand.u32 %s112, 1
        %s711 = smul.addr %s710, 24
        %s712 = scalar_lea.vmem [#allocation5], %s711
        // Predicated region
        $region41: #{forward.11} parent=31 // pred_check
          %p713 = pneg %p122
        $region42: #{forward.11} parent=31 // pred_check_branch
          %715 = sbr.rel (%p713) target = $region44
        $region43: #{forward.11} parent=31 // pred_region
          %s716 = smul.u32 2, %s21
          %s717 = smul.u32 3, %s22
          %s718 = smul.addr %s716, 6
          %s719 = sadd.s32 %s717, %s718
          %s720 = smul.addr %s719, 4
          %s721 = scalar_lea.vmem %s3, %s720
          // Predicated region
          $region45: #{forward.11} parent=43 // pred_check
            _
          $region46: #{forward.11} parent=43 // pred_check_branch
            %723 = sbr.rel (0) target = $region48
          $region47: #{forward.11} parent=43 // pred_region
            // Predicated region
            $region49: #{forward.11} parent=47 // pred_check
              _
            $region50: #{forward.11} parent=47 // pred_check_branch
              %725 = sbr.rel (0) target = $region52
            $region51: #{forward.11} parent=47 // pred_region
              %s726 = scalar_lea.vmem %s712, 8 [#allocation5]
              %s727 = scalar_lea.vmem %s721, 8
              loop: start=0, step=1, limit=1
              $region53: #{forward.11} parent=51 // loop_pre_header
                _
              $region54: #{forward.11} parent=51 // loop_header
                %s729 = sphi 0, %s733
                %p730 = scmp.ge.s32.totalorder %s729, 1
                %s734 = sphi %s712, %s712
                %s735 = sphi %s721, %s721
              $region55: #{forward.11} parent=51 // loop_header_branch
                %732 = sbr.rel (%p730) target = $region59
              $region56: #{forward.11} parent=51 // loop_body
                %v736 = vld [vmem:[%s734] sm:$0xff]
                %737 = vst [vmem:[%s735] sm:$0xff] %v736
                %v738 = vld [vmem:[%s734 + $0xc] sm:$0xff]
                %739 = vst [vmem:[%s735 + $0x18] sm:$0xff] %v738
              $region57: #{forward.11} parent=51 // loop_footer
                %s733 = sadd.s32 1, %s729
              $region58: #{forward.11} parent=51 // loop_footer_branch
                %728 = sbr.rel target = $region54
              $region59: #{forward.11} parent=51 // loop_exit
                _
              loop: start=0, step=1, limit=1
              $region60: #{forward.11} parent=51 // loop_pre_header
                _
              $region61: #{forward.11} parent=51 // loop_header
                %s742 = sphi 0, %s746
                %p743 = scmp.ge.s32.totalorder %s742, 1
                %s747 = sphi %s726, %s726
                %s748 = sphi %s727, %s727
              $region62: #{forward.11} parent=51 // loop_header_branch
                %745 = sbr.rel (%p743) target = $region66
              $region63: #{forward.11} parent=51 // loop_body
                %v749 = vld [vmem:[%s747] sm:$0xf]
                %750 = vst [vmem:[%s748] sm:$0xf] %v749
                %v751 = vld [vmem:[%s747 + $0xc] sm:$0xf]
                %752 = vst [vmem:[%s748 + $0x18] sm:$0xf] %v751
              $region64: #{forward.11} parent=51 // loop_footer
                %s746 = sadd.s32 1, %s742
              $region65: #{forward.11} parent=51 // loop_footer_branch
                %741 = sbr.rel target = $region61
              $region66: #{forward.11} parent=51 // loop_exit
                _
            $region52: #{forward.11} parent=47 // pred_fallthru
              _
          $region48: #{forward.11} parent=43 // pred_fallthru
            _
          %753 = vnop
        $region44: #{forward.11} parent=31 // pred_fallthru
          _
      $region32: #{forward.11} parent=5 // pred_fallthru
        _
      %p754 = scmp.le.s32.totalorder 2, %s12
      // Predicated region
      $region67: #{forward.11} parent=5 // pred_check
        %p755 = pneg %p754
      $region68: #{forward.11} parent=5 // pred_check_branch
        %757 = sbr.rel (%p755) target = $region70
      $region69: #{forward.11} parent=5 // pred_region
        %s758 = ssub.s32 %s12, 2
        // Predicated region
        $region71: #{forward.11} parent=69 // pred_check
          %p759 = pneg %p128
        $region72: #{forward.11} parent=69 // pred_check_branch
          %761 = sbr.rel (%p759) target = $region74
        $region73: #{forward.11} parent=69 // pred_region
          %s762 = sand.u32 %s113, 1
          %s763 = sand.u32 %s113, 1
          %s764 = smul.addr %s763, 24
          %s765 = scalar_lea.vmem [#allocation5], %s764
        $region74: #{forward.11} parent=69 // pred_fallthru
          _
      $region70: #{forward.11} parent=5 // pred_fallthru
        _
    $region6: #{forward.11} parent=1 // loop_footer
      %s16 = sadd.s32 1, %s12
    $region7: #{forward.11} parent=1 // loop_footer_branch
      %11 = sbr.rel target = $region3
    $region8: #{forward.11} parent=1 // loop_exit
      _
    %766 = vsyncpa [#allocation4], 1
    %s767 = scalar_lea.sflag [#allocation4], 1
    %768 = vsyncpa %s767, 1

// kernel: forward.13
$region0: #{forward.13}
  #allocation0 [shape = 'u32[]', space=smem, size = 0x4, offset = 0x4, fixed_abs, tag = 'smem constant byte address 0x4 - core index']
  #allocation1 [shape = 'u32[144,128]{1,0:T(1,128)}', space=vmem, size = 0x12000, scoped, tag = 'internal scratch']
  #allocation2 [shape = 'bf16[2,8,128]{2,1,0:T(8,128)(2,1)}', space=vmem, size = 0x1000, scoped, tag = 'scratch operand']
  #allocation3 [shape = 'f32[2,8,1]{2,1,0:T(8,128)}', space=vmem, size = 0x2000, scoped, tag = 'scratch operand']
  #allocation4 [shape = 'f32[2,8,1]{2,1,0:T(8,128)}', space=vmem, size = 0x2000, scoped, tag = 'scratch operand']
  #allocation5 [shape = 'f32[2,8,128]{2,1,0:T(8,128)}', space=vmem, size = 0x2000, scoped, tag = 'scratch operand']
  %s0 = inlined_call_operand.vmem [shape: f32[2,1,8], index: 0, kind: input, shape index: {}]
  %s1 = inlined_call_operand.vmem [shape: bf16[2,2,8,128], index: 1, kind: input, shape index: {}]
  %s2 = inlined_call_operand.vmem [shape: bf16[2,2,8,128], index: 2, kind: input, shape index: {}]
  %s3 = inlined_call_operand.vmem [shape: bf16[2,2,8,128], index: 3, kind: input, shape index: {}]
  %s4 = inlined_call_operand.vmem [shape: f32[8,128], index: 4, kind: input, shape index: {}]
  %s5 = inlined_call_operand.vmem [shape: f32[8,128], index: 5, kind: input, shape index: {}]
  %s6 = inlined_call_operand.vmem [shape: bf16[2,2,8,128], index: 6, kind: output, shape index: {}]
  %s7 = sld [smem:[#allocation0]]
  $region69: #{forward.13} parent=0
    _
  %s9 = ssub.s32 1, %s7
  %s10 = scalar_select 0, %s9, %s7
  loop: start=0, step=1, limit=4
  $region2: #{forward.13} parent=0 // loop_pre_header
    _
  $region3: #{forward.13} parent=0 // loop_header
    %s12 = sphi 0, %s16
    %p13 = scmp.ge.s32.totalorder %s12, 4
    %s19 = sphi 0, %s38
    %s20 = sphi 0, %s34
    %s21 = sphi 0, %s30
    %s22 = sphi 0, %s19
    %s23 = sphi 0, %s20
    %s24 = sphi 0, %s21
    %s25 = sphi 0, %s22
    %s26 = sphi 0, %s23
    %s27 = sphi 0, %s24
    %s43 = sphi 0, %s45
    %s46 = sphi 0, %s43
    %s47 = sphi 0, %s46
    %s63 = sphi 0, %s47
    %s71 = sphi 0, %s73
    %s74 = sphi 0, %s71
    %s75 = sphi 0, %s74
    %s91 = sphi 0, %s75
    %s99 = sphi 0, %s101
    %s102 = sphi 0, %s99
    %s103 = sphi 0, %s102
    %s119 = sphi 0, %s103
    %s127 = sphi 0, %s129
    %s130 = sphi 0, %s127
    %s131 = sphi 0, %s130
    %s147 = sphi 0, %s131
    %s153 = sphi 0, %s155
    %s156 = sphi 0, %s153
    %s157 = sphi 0, %s156
    %s173 = sphi 0, %s157
    %s179 = sphi 0, %s181
    %s182 = sphi 0, %s179
    %s183 = sphi 0, %s182
    %s199 = sphi 0, %s183
    %s207 = sphi 0, %s209
    %s210 = sphi 0, %s207
    %s211 = sphi 0, %s210
    %s227 = sphi 0, %s211
  $region4: #{forward.13} parent=0 // loop_header_branch
    %15 = sbr.rel (%p13) target = $region8
  $region5: #{forward.13} parent=0 // loop_body
    %s17 = ssub.s32 %s12, 1
    %s18 = ssub.s32 %s12, 2
    %s28 = sadd.s32 1, %s21
    %p29 = scmp.ge.s32.totalorder %s28, 1
    %s30 = scalar_select %p29, 0, %s28
    %s31 = sadd.s32 1, %s20
    %s32 = scalar_select %p29, %s31, %s20
    %p33 = scmp.ge.s32.totalorder %s32, 1
    %s34 = scalar_select %p33, 0, %s32
    %s35 = sadd.s32 1, %s19
    %s36 = scalar_select %p33, %s35, %s19
    %p37 = scmp.ge.s32.totalorder %s36, 2
    %s38 = scalar_select %p37, 0, %s36
    %s39 = ssub.s32 %s19, %s38
    %s40 = ssub.s32 %s21, %s30
    %s41 = sor.u32 %s39, %s40
    %p42 = scmp.eq.s32.totalorder %s41, 0
    %s44 = sadd.s32 %s43, 1
    %s45 = scalar_select %p42, %s43, %s44
    %p48 = pneg %p42
    %p49 = scmp.eq.s32.totalorder %s12, 1
    %p50 = por %p48, %p49
    %p51 = scmp.ne.s32.totalorder %s43, %s46
    %p52 = scmp.eq.s32.totalorder %s12, 0
    %p53 = por %p51, %p52
    %p54 = scmp.ne.s32.totalorder %s43, %s46
    %p55 = scmp.eq.s32.totalorder %s17, 1
    %p56 = por %p54, %p55
    %p57 = scmp.ne.s32.totalorder %s46, %s47
    %p58 = scmp.eq.s32.totalorder %s17, 0
    %p59 = por %p57, %p58
    %p60 = scmp.ne.s32.totalorder %s46, %s47
    %p61 = scmp.eq.s32.totalorder %s18, 1
    %p62 = por %p60, %p61
    %p64 = scmp.ne.s32.totalorder %s47, %s63
    %p65 = scmp.eq.s32.totalorder %s18, 0
    %p66 = por %p64, %p65
    %s67 = ssub.s32 %s19, %s38
    %s68 = ssub.s32 %s20, %s34
    %s69 = sor.u32 %s67, %s68
    %p70 = scmp.eq.s32.totalorder %s69, 0
    %s72 = sadd.s32 %s71, 1
    %s73 = scalar_select %p70, %s71, %s72
    %p76 = pneg %p70
    %p77 = scmp.eq.s32.totalorder %s12, 1
    %p78 = por %p76, %p77
    %p79 = scmp.ne.s32.totalorder %s71, %s74
    %p80 = scmp.eq.s32.totalorder %s12, 0
    %p81 = por %p79, %p80
    %p82 = scmp.ne.s32.totalorder %s71, %s74
    %p83 = scmp.eq.s32.totalorder %s17, 1
    %p84 = por %p82, %p83
    %p85 = scmp.ne.s32.totalorder %s74, %s75
    %p86 = scmp.eq.s32.totalorder %s17, 0
    %p87 = por %p85, %p86
    %p88 = scmp.ne.s32.totalorder %s74, %s75
    %p89 = scmp.eq.s32.totalorder %s18, 1
    %p90 = por %p88, %p89
    %p92 = scmp.ne.s32.totalorder %s75, %s91
    %p93 = scmp.eq.s32.totalorder %s18, 0
    %p94 = por %p92, %p93
    %s95 = ssub.s32 %s19, %s38
    %s96 = ssub.s32 %s21, %s30
    %s97 = sor.u32 %s95, %s96
    %p98 = scmp.eq.s32.totalorder %s97, 0
    %s100 = sadd.s32 %s99, 1
    %s101 = scalar_select %p98, %s99, %s100
    %p104 = pneg %p98
    %p105 = scmp.eq.s32.totalorder %s12, 1
    %p106 = por %p104, %p105
    %p107 = scmp.ne.s32.totalorder %s99, %s102
    %p108 = scmp.eq.s32.totalorder %s12, 0
    %p109 = por %p107, %p108
    %p110 = scmp.ne.s32.totalorder %s99, %s102
    %p111 = scmp.eq.s32.totalorder %s17, 1
    %p112 = por %p110, %p111
    %p113 = scmp.ne.s32.totalorder %s102, %s103
    %p114 = scmp.eq.s32.totalorder %s17, 0
    %p115 = por %p113, %p114
    %p116 = scmp.ne.s32.totalorder %s102, %s103
    %p117 = scmp.eq.s32.totalorder %s18, 1
    %p118 = por %p116, %p117
    %p120 = scmp.ne.s32.totalorder %s103, %s119
    %p121 = scmp.eq.s32.totalorder %s18, 0
    %p122 = por %p120, %p121
    %s123 = ssub.s32 %s19, %s38
    %s124 = ssub.s32 %s21, %s30
    %s125 = sor.u32 %s123, %s124
    %p126 = scmp.eq.s32.totalorder %s125, 0
    %s128 = sadd.s32 %s127, 1
    %s129 = scalar_select %p126, %s127, %s128
    %p132 = pneg %p126
    %p133 = scmp.eq.s32.totalorder %s12, 1
    %p134 = por %p132, %p133
    %p135 = scmp.ne.s32.totalorder %s127, %s130
    %p136 = scmp.eq.s32.totalorder %s12, 0
    %p137 = por %p135, %p136
    %p138 = scmp.ne.s32.totalorder %s127, %s130
    %p139 = scmp.eq.s32.totalorder %s17, 1
    %p140 = por %p138, %p139
    %p141 = scmp.ne.s32.totalorder %s130, %s131
    %p142 = scmp.eq.s32.totalorder %s17, 0
    %p143 = por %p141, %p142
    %p144 = scmp.ne.s32.totalorder %s130, %s131
    %p145 = scmp.eq.s32.totalorder %s18, 1
    %p146 = por %p144, %p145
    %p148 = scmp.ne.s32.totalorder %s131, %s147
    %p149 = scmp.eq.s32.totalorder %s18, 0
    %p150 = por %p148, %p149
    %s151 = ssub.s32 %s20, %s34
    %p152 = scmp.eq.s32.totalorder %s151, 0
    %s154 = sadd.s32 %s153, 1
    %s155 = scalar_select %p152, %s153, %s154
    %p158 = pneg %p152
    %p159 = scmp.eq.s32.totalorder %s12, 1
    %p160 = por %p158, %p159
    %p161 = scmp.ne.s32.totalorder %s153, %s156
    %p162 = scmp.eq.s32.totalorder %s12, 0
    %p163 = por %p161, %p162
    %p164 = scmp.ne.s32.totalorder %s153, %s156
    %p165 = scmp.eq.s32.totalorder %s17, 1
    %p166 = por %p164, %p165
    %p167 = scmp.ne.s32.totalorder %s156, %s157
    %p168 = scmp.eq.s32.totalorder %s17, 0
    %p169 = por %p167, %p168
    %p170 = scmp.ne.s32.totalorder %s156, %s157
    %p171 = scmp.eq.s32.totalorder %s18, 1
    %p172 = por %p170, %p171
    %p174 = scmp.ne.s32.totalorder %s157, %s173
    %p175 = scmp.eq.s32.totalorder %s18, 0
    %p176 = por %p174, %p175
    %s177 = ssub.s32 %s20, %s34
    %p178 = scmp.eq.s32.totalorder %s177, 0
    %s180 = sadd.s32 %s179, 1
    %s181 = scalar_select %p178, %s179, %s180
    %p184 = pneg %p178
    %p185 = scmp.eq.s32.totalorder %s12, 1
    %p186 = por %p184, %p185
    %p187 = scmp.ne.s32.totalorder %s179, %s182
    %p188 = scmp.eq.s32.totalorder %s12, 0
    %p189 = por %p187, %p188
    %p190 = scmp.ne.s32.totalorder %s179, %s182
    %p191 = scmp.eq.s32.totalorder %s17, 1
    %p192 = por %p190, %p191
    %p193 = scmp.ne.s32.totalorder %s182, %s183
    %p194 = scmp.eq.s32.totalorder %s17, 0
    %p195 = por %p193, %p194
    %p196 = scmp.ne.s32.totalorder %s182, %s183
    %p197 = scmp.eq.s32.totalorder %s18, 1
    %p198 = por %p196, %p197
    %p200 = scmp.ne.s32.totalorder %s183, %s199
    %p201 = scmp.eq.s32.totalorder %s18, 0
    %p202 = por %p200, %p201
    %s203 = ssub.s32 %s19, %s38
    %s204 = ssub.s32 %s20, %s34
    %s205 = sor.u32 %s203, %s204
    %p206 = scmp.eq.s32.totalorder %s205, 0
    %s208 = sadd.s32 %s207, 1
    %s209 = scalar_select %p206, %s207, %s208
    %p212 = pneg %p206
    %p213 = scmp.eq.s32.totalorder %s12, 1
    %p214 = por %p212, %p213
    %p215 = scmp.ne.s32.totalorder %s207, %s210
    %p216 = scmp.eq.s32.totalorder %s12, 0
    %p217 = por %p215, %p216
    %p218 = scmp.ne.s32.totalorder %s207, %s210
    %p219 = scmp.eq.s32.totalorder %s17, 1
    %p220 = por %p218, %p219
    %p221 = scmp.ne.s32.totalorder %s210, %s211
    %p222 = scmp.eq.s32.totalorder %s17, 0
    %p223 = por %p221, %p222
    %p224 = scmp.ne.s32.totalorder %s210, %s211
    %p225 = scmp.eq.s32.totalorder %s18, 1
    %p226 = por %p224, %p225
    %p228 = scmp.ne.s32.totalorder %s211, %s227
    %p229 = scmp.eq.s32.totalorder %s18, 0
    %p230 = por %p228, %p229
    %p231 = scmp.le.s32.totalorder 1, %s12
    %p232 = scmp.lt.s32.totalorder %s12, 3
    %p233 = pnand %p231, %p232
    %p234 = pneg %p233
    // Predicated region
    $region9: #{forward.13} parent=5 // pred_check
      _
    $region10: #{forward.13} parent=5 // pred_check_branch
      %236 = sbr.rel (%p233) target = $region12
    $region11: #{forward.13} parent=5 // pred_region
      %s237 = ssub.s32 %s12, 1
      // Predicated region
      $region13: #{forward.13} parent=11 // pred_check
        %p238 = pneg %p169
      $region14: #{forward.13} parent=11 // pred_check_branch
        %240 = sbr.rel (%p238) target = $region16
      $region15: #{forward.13} parent=11 // pred_region
        %p241 = scmp.lt.s32.totalorder %s23, 0
        %s242 = scalar_select %p241, %s23, 0
        %s243 = smul.addr %s242, 8
        %s244 = scalar_lea.vmem %s4, %s243
      $region16: #{forward.13} parent=11 // pred_fallthru
        _
      // Predicated region
      $region17: #{forward.13} parent=11 // pred_check
        %p245 = pneg %p195
      $region18: #{forward.13} parent=11 // pred_check_branch
        %247 = sbr.rel (%p245) target = $region20
      $region19: #{forward.13} parent=11 // pred_region
        %p248 = scmp.lt.s32.totalorder %s23, 0
        %s249 = scalar_select %p248, %s23, 0
        %s250 = smul.addr %s249, 8
        %s251 = scalar_lea.vmem %s5, %s250
      $region20: #{forward.13} parent=11 // pred_fallthru
        _
    $region12: #{forward.13} parent=5 // pred_fallthru
      _
    %p252 = scmp.lt.s32.totalorder %s12, 2
    // Predicated region
    $region21: #{forward.13} parent=5 // pred_check
      %p253 = pneg %p252
    $region22: #{forward.13} parent=5 // pred_check_branch
      %255 = sbr.rel (%p253) target = $region24
    $region23: #{forward.13} parent=5 // pred_region
      // Predicated region
      $region25: #{forward.13} parent=23 // pred_check
        %p256 = pneg %p53
      $region26: #{forward.13} parent=23 // pred_check_branch
        %258 = sbr.rel (%p256) target = $region28
      $region27: #{forward.13} parent=23 // pred_region
        %p259 = scmp.lt.s32.totalorder %s19, 1
        %s260 = scalar_select %p259, %s19, 1
        %p261 = scmp.lt.s32.totalorder %s21, 0
        %s262 = scalar_select %p261, %s21, 0
        %s263 = sadd.s32 %s262, %s260
        %s264 = scalar_lea.vmem %s0, %s263
      $region28: #{forward.13} parent=23 // pred_fallthru
        _
      // Predicated region
      $region29: #{forward.13} parent=23 // pred_check
        %p265 = pneg %p81
      $region30: #{forward.13} parent=23 // pred_check_branch
        %267 = sbr.rel (%p265) target = $region32
      $region31: #{forward.13} parent=23 // pred_region
        %p268 = scmp.lt.s32.totalorder %s19, 1
        %s269 = scalar_select %p268, %s19, 1
        %p270 = scmp.lt.s32.totalorder %s20, 0
        %s271 = scalar_select %p270, %s20, 0
        %s272 = smul.addr %s269, 2
        %s273 = sadd.s32 %s271, %s272
        %s274 = smul.addr %s273, 4
        %s275 = scalar_lea.vmem %s1, %s274
      $region32: #{forward.13} parent=23 // pred_fallthru
        _
      // Predicated region
      $region33: #{forward.13} parent=23 // pred_check
        %p276 = pneg %p109
      $region34: #{forward.13} parent=23 // pred_check_branch
        %278 = sbr.rel (%p276) target = $region36
      $region35: #{forward.13} parent=23 // pred_region
        %p279 = scmp.lt.s32.totalorder %s19, 1
        %s280 = scalar_select %p279, %s19, 1
        %p281 = scmp.lt.s32.totalorder %s21, 0
        %s282 = scalar_select %p281, %s21, 0
        %s283 = smul.addr %s280, 2
        %s284 = sadd.s32 %s282, %s283
        %s285 = smul.addr %s284, 4
        %s286 = scalar_lea.vmem %s2, %s285
      $region36: #{forward.13} parent=23 // pred_fallthru
        _
      // Predicated region
      $region37: #{forward.13} parent=23 // pred_check
        %p287 = pneg %p137
      $region38: #{forward.13} parent=23 // pred_check_branch
        %289 = sbr.rel (%p287) target = $region40
      $region39: #{forward.13} parent=23 // pred_region
        %p290 = scmp.lt.s32.totalorder %s19, 1
        %s291 = scalar_select %p290, %s19, 1
        %p292 = scmp.lt.s32.totalorder %s21, 0
        %s293 = scalar_select %p292, %s21, 0
        %s294 = smul.addr %s291, 2
        %s295 = sadd.s32 %s293, %s294
        %s296 = smul.addr %s295, 4
        %s297 = scalar_lea.vmem %s3, %s296
      $region40: #{forward.13} parent=23 // pred_fallthru
        _
    $region24: #{forward.13} parent=5 // pred_fallthru
      _
    %p298 = scmp.le.s32.totalorder 1, %s12
    %p299 = scmp.lt.s32.totalorder %s12, 3
    %p300 = pnand %p298, %p299
    %p301 = pneg %p300
    // Predicated region
    $region41: #{forward.13} parent=5 // pred_check
      _
    $region42: #{forward.13} parent=5 // pred_check_branch
      %303 = sbr.rel (%p300) target = $region44
    $region43: #{forward.13} parent=5 // pred_region
      %s304 = ssub.s32 %s12, 1
      %p305 = scmp.lt.s32.totalorder %s22, 1
      %s306 = scalar_select %p305, %s22, 1
      %p307 = scmp.lt.s32.totalorder %s24, 0
      %s308 = scalar_select %p307, %s24, 0
      %s309 = sadd.s32 %s308, %s306
      %s310 = scalar_lea.vmem %s0, %s309
      %p311 = pneg %p59
      %p312 = pneg %p56
      %p313 = scmp.lt.s32.totalorder %s22, 1
      %s314 = scalar_select %p313, %s22, 1
      %p315 = scmp.lt.s32.totalorder %s23, 0
      %s316 = scalar_select %p315, %s23, 0
      %s317 = smul.addr %s314, 2
      %s318 = sadd.s32 %s316, %s317
      %s319 = smul.addr %s318, 4
      %s320 = scalar_lea.vmem %s1, %s319
      %p321 = pneg %p87
      %p322 = pneg %p84
      %p323 = scmp.lt.s32.totalorder %s22, 1
      %s324 = scalar_select %p323, %s22, 1
      %p325 = scmp.lt.s32.totalorder %s24, 0
      %s326 = scalar_select %p325, %s24, 0
      %s327 = smul.addr %s324, 2
      %s328 = sadd.s32 %s326, %s327
      %s329 = smul.addr %s328, 4
      %s330 = scalar_lea.vmem %s2, %s329
      %p331 = pneg %p115
      %p332 = pneg %p112
      %p333 = scmp.lt.s32.totalorder %s22, 1
      %s334 = scalar_select %p333, %s22, 1
      %p335 = scmp.lt.s32.totalorder %s24, 0
      %s336 = scalar_select %p335, %s24, 0
      %s337 = smul.addr %s334, 2
      %s338 = sadd.s32 %s336, %s337
      %s339 = smul.addr %s338, 4
      %s340 = scalar_lea.vmem %s3, %s339
      %p341 = pneg %p143
      %p342 = pneg %p140
      %p343 = scmp.lt.s32.totalorder %s23, 0
      %s344 = scalar_select %p343, %s23, 0
      %s345 = smul.addr %s344, 8
      %s346 = scalar_lea.vmem %s4, %s345
      %p347 = pneg %p169
      %p348 = pneg %p166
      %p349 = scmp.lt.s32.totalorder %s23, 0
      %s350 = scalar_select %p349, %s23, 0
      %s351 = smul.addr %s350, 8
      %s352 = scalar_lea.vmem %s5, %s351
      %p353 = pneg %p195
      %p354 = pneg %p192
      %p355 = pneg %p223
      %p356 = pneg %p220
      %p357 = scmp.lt.s32.totalorder %s22, 1
      %s358 = scalar_select %p357, %s22, 1
      %p359 = scmp.lt.s32.totalorder %s23, 0
      %s360 = scalar_select %p359, %s23, 0
      %s361 = smul.addr %s358, 2
      %s362 = sadd.s32 %s360, %s361
      %s363 = smul.addr %s362, 4
      %s364 = scalar_lea.vmem %s6, %s363
      %p365 = scmp.lt.s32.totalorder %s22, 1
      %s366 = scalar_select %p365, %s22, 1
      %p367 = scmp.lt.s32.totalorder %s24, 0
      %s368 = scalar_select %p367, %s24, 0
      %s369 = sadd.s32 %s368, %s366
      %s370 = scalar_lea.vmem %s0, %s369
      %p371 = scmp.lt.s32.totalorder %s22, 1
      %s372 = scalar_select %p371, %s22, 1
      %p373 = scmp.lt.s32.totalorder %s23, 0
      %s374 = scalar_select %p373, %s23, 0
      %s375 = smul.addr %s372, 2
      %s376 = sadd.s32 %s374, %s375
      %s377 = smul.addr %s376, 4
      %s378 = scalar_lea.vmem %s1, %s377
      %p379 = scmp.lt.s32.totalorder %s22, 1
      %s380 = scalar_select %p379, %s22, 1
      %p381 = scmp.lt.s32.totalorder %s24, 0
      %s382 = scalar_select %p381, %s24, 0
      %s383 = smul.addr %s380, 2
      %s384 = sadd.s32 %s382, %s383
      %s385 = smul.addr %s384, 4
      %s386 = scalar_lea.vmem %s2, %s385
      %p387 = scmp.lt.s32.totalorder %s22, 1
      %s388 = scalar_select %p387, %s22, 1
      %p389 = scmp.lt.s32.totalorder %s24, 0
      %s390 = scalar_select %p389, %s24, 0
      %s391 = smul.addr %s388, 2
      %s392 = sadd.s32 %s390, %s391
      %s393 = smul.addr %s392, 4
      %s394 = scalar_lea.vmem %s3, %s393
      %p395 = scmp.lt.s32.totalorder %s23, 0
      %s396 = scalar_select %p395, %s23, 0
      %s397 = smul.addr %s396, 8
      %s398 = scalar_lea.vmem %s4, %s397
      %p399 = scmp.lt.s32.totalorder %s23, 0
      %s400 = scalar_select %p399, %s23, 0
      %s401 = smul.addr %s400, 8
      %s402 = scalar_lea.vmem %s5, %s401
      %p403 = scmp.lt.s32.totalorder %s22, 1
      %s404 = scalar_select %p403, %s22, 1
      %p405 = scmp.lt.s32.totalorder %s23, 0
      %s406 = scalar_select %p405, %s23, 0
      %s407 = smul.addr %s404, 2
      %s408 = sadd.s32 %s406, %s407
      %s409 = smul.addr %s408, 4
      %s410 = scalar_lea.vmem %s6, %s409
      %p412 = scmp.eq.s32.totalorder %s24, 0
      // Predicated region
      $region45: #{forward.13} parent=43 // pred_check
        %p413 = pneg %p412
      $region46: #{forward.13} parent=43 // pred_check_branch
        %415 = sbr.rel (%p413) target = $region48
      $region47: #{forward.13} parent=43 // pred_region
        %vm416 = vcmask 7168
        %417 = vst.msk [vmem:[#allocation3] sm:$0xff] %vm416, -1e+30
        %418 = vst.msk [vmem:[#allocation3 + $0x8] sm:$0xff] %vm416, -1e+30
        %419 = vst.msk [vmem:[#allocation4] sm:$0xff] %vm416, 0.0
        %420 = vst.msk [vmem:[#allocation4 + $0x8] sm:$0xff] %vm416, 0.0
        %421 = vst [vmem:[#allocation5] sm:$0xff] 0.0
        %422 = vst [vmem:[#allocation5 + $0x8] sm:$0xff] 0.0
        %v423 = vld [vmem:[%s378] sm:$0xf]
        %v424 = vld [vmem:[%s378 + $0x4] sm:$0xf]
        %v425 = vunpack.c.l.bf16 %v423
        %v426 = vunpack.c.l.bf16 %v424
        %v427 = vlaneseq
        %v428 = vand.u32 %v427, 127
        %vm429 = vcmp.lt.s32.totalorder %v428, 64
        %v430 = vsel %vm429, -1.0, 1.0
        %431 = vrot.lane.b32.xlu0 %v425, 64
        %v432 = vpop.permute.xlu0 %431
        %433 = vrot.lane.b32.xlu0 %v426, 64
        %v434 = vpop.permute.xlu0 %433
        %v435 = vmul.f32 %v432, %v430
        %v436 = vmul.f32 %v434, %v430
        %v437 = vld [vmem:[%s398] sm:$0xff]
        %v438 = vmul.f32 %v425, %v437
        %v439 = vmul.f32 %v426, %v437
        %v440 = vld [vmem:[%s402] sm:$0xff]
        %v441 = vmul.f32 %v435, %v440
        %v442 = vmul.f32 %v436, %v440
        %v443 = vadd.f32 %v438, %v441
        %v444 = vadd.f32 %v439, %v442
        %v445 = vmul.f32 %v443, 0.088388346
        %v446 = vmul.f32 %v444, 0.088388346
        %v447 = vpack.c.bf16 %v445, %v445
        %v448 = vpack.c.bf16 %v446, %v446
        %449 = vst [vmem:[#allocation2] sm:$0xf] %v447
        %450 = vst [vmem:[#allocation2 + $0x4] sm:$0xf] %v448
      $region48: #{forward.13} parent=43 // pred_fallthru
        _
      %s451 = smul.u32 %s24, 8
      %s452 = smul.u32 %s23, 8
      %s453 = sadd.s32 %s452, 7
      %p454 = scmp.le.s32.totalorder %s451, %s453
      // Predicated region
      $region49: #{forward.13} parent=43 // pred_check
        %p455 = pneg %p454
      $region50: #{forward.13} parent=43 // pred_check_branch
        %457 = sbr.rel (%p455) target = $region52
      $region51: #{forward.13} parent=43 // pred_region
        %v458 = vld [vmem:[%s386] sm:$0xf]
        %v459 = vld [vmem:[%s386 + $0x4] sm:$0xf]
        %v460 = vld [vmem:[%s394] sm:$0xf]
        %v461 = vld [vmem:[%s394 + $0x4] sm:$0xf]
        %v462 = vld [vmem:[#allocation2] sm:$0xf]
        %v463 = vld [vmem:[#allocation2 + $0x4] sm:$0xf]
        %464 = vmatprep.subr.bf16.mxu0 0
        %465 = vmatpush1.bf16.xpose.msra.mxu0 %v458
        %466 = vmatprep.subr.bf16.mxu0 0
        %467 = vmatpush1.bf16.xpose.msra.mxu0 0
        %468 = vmatprep.subr.bf16.mxu0 0
        %469 = vmatpush1.bf16.xpose.msra.mxu0 0
        %470 = vmatprep.subr.bf16.mxu0 0
        %471 = vmatpush1.bf16.xpose.msra.mxu0 0
        %472 = vmatprep.subr.bf16.mxu0 0
        %473 = vmatpush1.bf16.xpose.msra.mxu0 0
        %474 = vmatprep.subr.bf16.mxu0 0
        %475 = vmatpush1.bf16.xpose.msra.mxu0 0
        %476 = vmatprep.subr.bf16.mxu0 0
        %477 = vmatpush1.bf16.xpose.msra.mxu0 0
        %478 = vmatprep.subr.bf16.mxu0 0
        %479 = vmatpush1.bf16.xpose.msra.mxu0 0
        %480 = vmatprep.subr.bf16.mxu0 0
        %481 = vmatpush1.bf16.xpose.msra.mxu0 0
        %482 = vmatprep.subr.bf16.mxu0 0
        %483 = vmatpush1.bf16.xpose.msra.mxu0 0
        %484 = vmatprep.subr.bf16.mxu0 0
        %485 = vmatpush1.bf16.xpose.msra.mxu0 0
        %486 = vmatprep.subr.bf16.mxu0 0
        %487 = vmatpush1.bf16.xpose.msra.mxu0 0
        %488 = vmatprep.subr.bf16.mxu0 0
        %489 = vmatpush1.bf16.xpose.msra.mxu0 0
        %490 = vmatprep.subr.bf16.mxu0 0
        %491 = vmatpush1.bf16.xpose.msra.mxu0 0
        %492 = vmatprep.subr.bf16.mxu0 0
        %493 = vmatpush1.bf16.xpose.msra.mxu0 0
        %494 = vmatprep.subr.bf16.mxu0 0
        %495 = vmatpush1.bf16.xpose.msra.mxu0 0
        %496 = vmatprep.mubr.bf16.mxu0 0
        %497 = vmatmul.mubr.bf16.gmra.mrb[0].mxu0 %v462
        %v498 = vpop.f32.mrb[0].mxu0
        %v499 = vadd.f32 0.0, %v498
        %v500 = vpop.f32.mrb[0].mxu0
        %v501 = vpop.f32.mrb[0].mxu0
        %v502 = vpop.f32.mrb[0].mxu0
        %503 = vdwg.mxu0
        %504 = vmatprep.subr.bf16.mxu0 0
        %505 = vmatpush1.bf16.xpose.msra.mxu0 %v459
        %506 = vmatprep.subr.bf16.mxu0 0
        %507 = vmatpush1.bf16.xpose.msra.mxu0 0
        %508 = vmatprep.subr.bf16.mxu0 0
        %509 = vmatpush1.bf16.xpose.msra.mxu0 0
        %510 = vmatprep.subr.bf16.mxu0 0
        %511 = vmatpush1.bf16.xpose.msra.mxu0 0
        %512 = vmatprep.subr.bf16.mxu0 0
        %513 = vmatpush1.bf16.xpose.msra.mxu0 0
        %514 = vmatprep.subr.bf16.mxu0 0
        %515 = vmatpush1.bf16.xpose.msra.mxu0 0
        %516 = vmatprep.subr.bf16.mxu0 0
        %517 = vmatpush1.bf16.xpose.msra.mxu0 0
        %518 = vmatprep.subr.bf16.mxu0 0
        %519 = vmatpush1.bf16.xpose.msra.mxu0 0
        %520 = vmatprep.subr.bf16.mxu0 0
        %521 = vmatpush1.bf16.xpose.msra.mxu0 0
        %522 = vmatprep.subr.bf16.mxu0 0
        %523 = vmatpush1.bf16.xpose.msra.mxu0 0
        %524 = vmatprep.subr.bf16.mxu0 0
        %525 = vmatpush1.bf16.xpose.msra.mxu0 0
        %526 = vmatprep.subr.bf16.mxu0 0
        %527 = vmatpush1.bf16.xpose.msra.mxu0 0
        %528 = vmatprep.subr.bf16.mxu0 0
        %529 = vmatpush1.bf16.xpose.msra.mxu0 0
        %530 = vmatprep.subr.bf16.mxu0 0
        %531 = vmatpush1.bf16.xpose.msra.mxu0 0
        %532 = vmatprep.subr.bf16.mxu0 0
        %533 = vmatpush1.bf16.xpose.msra.mxu0 0
        %534 = vmatprep.subr.bf16.mxu0 0
        %535 = vmatpush1.bf16.xpose.msra.mxu0 0
        %536 = vmatprep.mubr.bf16.mxu0 0
        %537 = vmatmul.mubr.bf16.gmra.mrb[0].mxu0 %v463
        %v538 = vpop.f32.mrb[0].mxu0
        %v539 = vadd.f32 0.0, %v538
        %v540 = vpop.f32.mrb[0].mxu0
        %v541 = vpop.f32.mrb[0].mxu0
        %v542 = vpop.f32.mrb[0].mxu0
        %543 = vdwg.mxu0
        %v544 = vlaneseq
        %v545 = vshrl.u32 %v544, 7
        %v546 = vstv %s452
        %v547 = vadd.s32 %v546, %v545
        %v548 = vlaneseq
        %v549 = vand.u32 %v548, 127
        %v550 = vstv %s451
        %v551 = vadd.s32 %v550, %v549
        %vm552 = vcmp.le.s32.totalorder %v551, %v547
        %v553 = vld [vmem:[%s370] sm:$0x1]
        %vm554 = vcmp.gt.f32.partialorder %v553, 0.0
        %v555 = vsel %vm554, 1, 0
        %v556 = vlaneseq
        %v557 = vshrl.u32 %v556, 7
        %v558 = vsub.s32 0, %v557
        %v559 = vrot.slane %v555, %v558
        %vm560 = vcmp.eq.s32.totalorder %v559, 1
        %vm561 = vmand %vm552, %vm560
        %v562 = vsel %vm561, 1, 0
        %vm563 = vcmp.eq.s32.totalorder %v562, 1
        %v564 = vsel %vm563, %v499, -1e+30
        %v565 = vsel %vm563, %v539, -1e+30
        %v566 = vld [vmem:[#allocation3] sm:$0xff]
        %v567 = vld [vmem:[#allocation3 + $0x8] sm:$0xff]
        %vm568 = vcmask 64512
        %v569 = vsel %vm568, %v564, -inf
        %570 = vmax.xlane.f32.xlu0 %v569
        %v571 = vpop.xlane.xlu0 %570
        %v572 = vsel %vm568, %v565, -inf
        %573 = vmax.xlane.f32.xlu0 %v572
        %v574 = vpop.xlane.xlu0 %573
        %v575 = vmax.f32 %v566, %v571
        %v576 = vmax.f32 %v567, %v574
        %v577 = vsub.f32 %v566, %v575
        %v578 = vsub.f32 %v567, %v576
        %v579 = vmul.f32 %v577, 1.442695
        %v580 = vpow.pop %v579
        %v581 = vmul.f32 %v578, 1.442695
        %v582 = vpow.pop %v581
        %584 = vset.pattern.permute.xlu0 0
        %585 = vperm.xlu0 %584, %v575
        %v586 = vpop.permute.xlu0 %585
        %589 = vset.pattern.permute.xlu0 0
        %590 = vperm.xlu0 %589, %v576
        %v591 = vpop.permute.xlu0 %590
        %v593 = vsub.f32 %v564, %v586
        %v594 = vsub.f32 %v565, %v591
        %v595 = vmul.f32 %v593, 1.442695
        %v596 = vpow.pop %v595
        %v597 = vmul.f32 %v594, 1.442695
        %v598 = vpow.pop %v597
        %v599 = vld [vmem:[#allocation4] sm:$0xff]
        %v600 = vld [vmem:[#allocation4 + $0x8] sm:$0xff]
        %v601 = vmul.f32 %v580, %v599
        %v602 = vmul.f32 %v582, %v600
        %v603 = vsel %vm568, %v596, 0.0
        %604 = vadd.xlane.f32.xlu0 %v603
        %v605 = vpop.xlane.xlu0 %604
        %v606 = vsel %vm568, %v598, 0.0
        %607 = vadd.xlane.f32.xlu0 %v606
        %v608 = vpop.xlane.xlu0 %607
        %v609 = vadd.f32 %v601, %v605
        %v610 = vadd.f32 %v602, %v608
        %vm611 = vcmask 7168
        %612 = vst.msk [vmem:[#allocation4] sm:$0xff] %vm611, %v609
        %613 = vst.msk [vmem:[#allocation4 + $0x8] sm:$0xff] %vm611, %v610
        %v614 = vld [vmem:[#allocation5] sm:$0xff]
        %v615 = vld [vmem:[#allocation5 + $0x8] sm:$0xff]
        %617 = vset.pattern.permute.xlu0 0
        %618 = vperm.xlu0 %617, %v580
        %v619 = vpop.permute.xlu0 %618
        %622 = vset.pattern.permute.xlu0 0
        %623 = vperm.xlu0 %622, %v582
        %v624 = vpop.permute.xlu0 %623
        %v626 = vmul.f32 %v619, %v614
        %v627 = vmul.f32 %v624, %v615
        %v628 = vpack.c.bf16 %v596, %v596
        %v629 = vpack.c.bf16 %v598, %v598
        %v631 = vsel %vm568, %v628, 0
        %vm633 = vcmask 1043456
        %v635 = vsel %vm633, %v460, 0
        %637 = vmatprep.subr.bf16.mxu0 0
        %638 = vmatpush1.bf16.msra.mxu0 %v635
        %639 = vmatprep.subr.bf16.mxu0 0
        %640 = vmatpush1.bf16.msra.mxu0 0
        %641 = vmatprep.subr.bf16.mxu0 0
        %642 = vmatpush1.bf16.msra.mxu0 0
        %643 = vmatprep.subr.bf16.mxu0 0
        %644 = vmatpush1.bf16.msra.mxu0 0
        %645 = vmatprep.subr.bf16.mxu0 0
        %646 = vmatpush1.bf16.msra.mxu0 0
        %647 = vmatprep.subr.bf16.mxu0 0
        %648 = vmatpush1.bf16.msra.mxu0 0
        %649 = vmatprep.subr.bf16.mxu0 0
        %650 = vmatpush1.bf16.msra.mxu0 0
        %651 = vmatprep.subr.bf16.mxu0 0
        %652 = vmatpush1.bf16.msra.mxu0 0
        %653 = vmatprep.subr.bf16.mxu0 0
        %654 = vmatpush1.bf16.msra.mxu0 0
        %655 = vmatprep.subr.bf16.mxu0 0
        %656 = vmatpush1.bf16.msra.mxu0 0
        %657 = vmatprep.subr.bf16.mxu0 0
        %658 = vmatpush1.bf16.msra.mxu0 0
        %659 = vmatprep.subr.bf16.mxu0 0
        %660 = vmatpush1.bf16.msra.mxu0 0
        %661 = vmatprep.subr.bf16.mxu0 0
        %662 = vmatpush1.bf16.msra.mxu0 0
        %663 = vmatprep.subr.bf16.mxu0 0
        %664 = vmatpush1.bf16.msra.mxu0 0
        %665 = vmatprep.subr.bf16.mxu0 0
        %666 = vmatpush1.bf16.msra.mxu0 0
        %667 = vmatprep.subr.bf16.mxu0 0
        %668 = vmatpush1.bf16.msra.mxu0 0
        %669 = vmatprep.mubr.bf16.mxu0 0
        %670 = vmatmul.mubr.bf16.gmra.mrb[0].mxu0 %v631
        %v671 = vpop.f32.mrb[0].mxu0
        %v672 = vadd.f32 0.0, %v671
        %v673 = vpop.f32.mrb[0].mxu0
        %v674 = vpop.f32.mrb[0].mxu0
        %v675 = vpop.f32.mrb[0].mxu0
        %676 = vdwg.mxu0
        %v678 = vsel %vm568, %v629, 0
        %v681 = vsel %vm633, %v461, 0
        %683 = vmatprep.subr.bf16.mxu0 0
        %684 = vmatpush1.bf16.msra.mxu0 %v681
        %685 = vmatprep.subr.bf16.mxu0 0
        %686 = vmatpush1.bf16.msra.mxu0 0
        %687 = vmatprep.subr.bf16.mxu0 0
        %688 = vmatpush1.bf16.msra.mxu0 0
        %689 = vmatprep.subr.bf16.mxu0 0
        %690 = vmatpush1.bf16.msra.mxu0 0
        %691 = vmatprep.subr.bf16.mxu0 0
        %692 = vmatpush1.bf16.msra.mxu0 0
        %693 = vmatprep.subr.bf16.mxu0 0
        %694 = vmatpush1.bf16.msra.mxu0 0
        %695 = vmatprep.subr.bf16.mxu0 0
        %696 = vmatpush1.bf16.msra.mxu0 0
        %697 = vmatprep.subr.bf16.mxu0 0
        %698 = vmatpush1.bf16.msra.mxu0 0
        %699 = vmatprep.subr.bf16.mxu0 0
        %700 = vmatpush1.bf16.msra.mxu0 0
        %701 = vmatprep.subr.bf16.mxu0 0
        %702 = vmatpush1.bf16.msra.mxu0 0
        %703 = vmatprep.subr.bf16.mxu0 0
        %704 = vmatpush1.bf16.msra.mxu0 0
        %705 = vmatprep.subr.bf16.mxu0 0
        %706 = vmatpush1.bf16.msra.mxu0 0
        %707 = vmatprep.subr.bf16.mxu0 0
        %708 = vmatpush1.bf16.msra.mxu0 0
        %709 = vmatprep.subr.bf16.mxu0 0
        %710 = vmatpush1.bf16.msra.mxu0 0
        %711 = vmatprep.subr.bf16.mxu0 0
        %712 = vmatpush1.bf16.msra.mxu0 0
        %713 = vmatprep.subr.bf16.mxu0 0
        %714 = vmatpush1.bf16.msra.mxu0 0
        %715 = vmatprep.mubr.bf16.mxu0 0
        %716 = vmatmul.mubr.bf16.gmra.mrb[0].mxu0 %v678
        %v717 = vpop.f32.mrb[0].mxu0
        %v718 = vadd.f32 0.0, %v717
        %v719 = vpop.f32.mrb[0].mxu0
        %v720 = vpop.f32.mrb[0].mxu0
        %v721 = vpop.f32.mrb[0].mxu0
        %722 = vdwg.mxu0
        %v723 = vadd.f32 %v626, %v672
        %v724 = vadd.f32 %v627, %v718
        %725 = vst [vmem:[#allocation5] sm:$0xff] %v723
        %726 = vst [vmem:[#allocation5 + $0x8] sm:$0xff] %v724
        %727 = vst.msk [vmem:[#allocation3] sm:$0xff] %vm611, %v575
        %728 = vst.msk [vmem:[#allocation3 + $0x8] sm:$0xff] %vm611, %v576
      $region52: #{forward.13} parent=43 // pred_fallthru
        _
      // Predicated region
      $region53: #{forward.13} parent=43 // pred_check
        %p729 = pneg %p412
      $region54: #{forward.13} parent=43 // pred_check_branch
        %731 = sbr.rel (%p729) target = $region56
      $region55: #{forward.13} parent=43 // pred_region
        %v732 = vld [vmem:[#allocation5] sm:$0xff]
        %v733 = vld [vmem:[#allocation5 + $0x8] sm:$0xff]
        %v734 = vld [vmem:[#allocation4] sm:$0xff]
        %v735 = vld [vmem:[#allocation4 + $0x8] sm:$0xff]
        %v736 = vrcp.pop %v734
        %v737 = vrcp.pop %v735
        %739 = vset.pattern.permute.xlu0 0
        %740 = vperm.xlu0 %739, %v736
        %v741 = vpop.permute.xlu0 %740
        %744 = vset.pattern.permute.xlu0 0
        %745 = vperm.xlu0 %744, %v737
        %v746 = vpop.permute.xlu0 %745
        %v748 = vmul.f32 %v732, %v741
        %v749 = vmul.f32 %v733, %v746
        %v750 = vpack.c.bf16 %v748, %v748
        %v751 = vpack.c.bf16 %v749, %v749
        %752 = vst [vmem:[%s410] sm:$0xf] %v750
        %753 = vst [vmem:[%s410 + $0x4] sm:$0xf] %v751
      $region56: #{forward.13} parent=43 // pred_fallthru
        _
      %p754 = scmp.lt.s32.totalorder %s22, 1
      %s755 = scalar_select %p754, %s22, 1
      %p756 = scmp.lt.s32.totalorder %s23, 0
      %s757 = scalar_select %p756, %s23, 0
      %s758 = smul.addr %s755, 2
      %s759 = sadd.s32 %s757, %s758
      %s760 = smul.addr %s759, 4
      %s761 = scalar_lea.vmem %s6, %s760
      // Predicated region
      $region57: #{forward.13} parent=43 // pred_check
        %p762 = pneg %p220
      $region58: #{forward.13} parent=43 // pred_check_branch
        %764 = sbr.rel (%p762) target = $region60
      $region59: #{forward.13} parent=43 // pred_region
        _
      $region60: #{forward.13} parent=43 // pred_fallthru
        _
    $region44: #{forward.13} parent=5 // pred_fallthru
      _
    %p765 = scmp.le.s32.totalorder 2, %s12
    // Predicated region
    $region61: #{forward.13} parent=5 // pred_check
      %p766 = pneg %p765
    $region62: #{forward.13} parent=5 // pred_check_branch
      %768 = sbr.rel (%p766) target = $region64
    $region63: #{forward.13} parent=5 // pred_region
      %s769 = ssub.s32 %s12, 2
      // Predicated region
      $region65: #{forward.13} parent=63 // pred_check
        %p770 = pneg %p226
      $region66: #{forward.13} parent=63 // pred_check_branch
        %772 = sbr.rel (%p770) target = $region68
      $region67: #{forward.13} parent=63 // pred_region
        %p773 = scmp.lt.s32.totalorder %s25, 1
        %s774 = scalar_select %p773, %s25, 1
        %p775 = scmp.lt.s32.totalorder %s26, 0
        %s776 = scalar_select %p775, %s26, 0
        %s777 = smul.addr %s774, 2
        %s778 = sadd.s32 %s776, %s777
        %s779 = smul.addr %s778, 4
        %s780 = scalar_lea.vmem %s6, %s779
      $region68: #{forward.13} parent=63 // pred_fallthru
        _
    $region64: #{forward.13} parent=5 // pred_fallthru
      _
  $region6: #{forward.13} parent=0 // loop_footer
    %s16 = sadd.s32 1, %s12
  $region7: #{forward.13} parent=0 // loop_footer_branch
    %11 = sbr.rel target = $region3
  $region8: #{forward.13} parent=0 // loop_exit
    _

// kernel: forward.16
$region0: #{forward.16}
  #allocation0 [shape = 'u32[]', space=smem, size = 0x4, offset = 0x4, fixed_abs, tag = 'smem constant byte address 0x4 - core index']
  #allocation1 [shape = 'u32[144,128]{1,0:T(1,128)}', space=vmem, size = 0x12000, scoped, tag = 'internal scratch']
  #allocation2 [shape = 'bf16[16,256]{1,0:T(16,128)(2,1)}', space=vmem, size = 0x2000, scoped, tag = 'scratch operand']
  %s0 = inlined_call_operand.vmem [shape: bf16[16,256], index: 0, kind: input, shape index: {}]
  %s1 = inlined_call_operand.vmem [shape: f32[1,256], index: 1, kind: input, shape index: {}]
  %s2 = inlined_call_operand.vmem [shape: bf16[256,768], index: 2, kind: input, shape index: {}]
  %s3 = inlined_call_operand.vmem [shape: bf16[16,768], index: 3, kind: output, shape index: {}]
  %s4 = sld [smem:[#allocation0]]
  $region97: #{forward.16} parent=0
    _
  %s6 = ssub.s32 1, %s4
  %s7 = scalar_select 0, %s6, %s4
  $region1: #{forward.16} parent=0
    #allocation3 [shape = 'u8[393216]{0}', space=vmem, size = 0x60000, scoped, tag = 'input window, operand 2']
    #allocation4 [shape = 'u8[24576]{0}', space=vmem, size = 0x6000, scoped, tag = 'output window, operand 0']
    loop: start=0, step=1, limit=4
    $region2: #{forward.16} parent=1 // loop_pre_header
      _
    $region3: #{forward.16} parent=1 // loop_header
      %s9 = sphi 0, %s13
      %p10 = scmp.ge.s32.totalorder %s9, 4
      %s16 = sphi 0, %s28
      %s17 = sphi 0, %s24
      %s18 = sphi 0, %s16
      %s19 = sphi 0, %s17
      %s20 = sphi 0, %s18
      %s21 = sphi 0, %s19
      %s31 = sphi 0, %s33
      %s34 = sphi 0, %s31
      %s35 = sphi 0, %s34
      %s51 = sphi 0, %s35
      %s55 = sphi 0, %s55
      %s57 = sphi 0, %s55
      %s58 = sphi 0, %s57
      %s72 = sphi 0, %s58
      %s78 = sphi 0, %s80
      %s81 = sphi 0, %s78
      %s82 = sphi 0, %s81
      %s98 = sphi 0, %s82
      %s106 = sphi 0, %s108
      %s109 = sphi 0, %s106
      %s110 = sphi 0, %s109
      %s126 = sphi 0, %s110
    $region4: #{forward.16} parent=1 // loop_header_branch
      %12 = sbr.rel (%p10) target = $region8
    $region5: #{forward.16} parent=1 // loop_body
      %s14 = ssub.s32 %s9, 1
      %s15 = ssub.s32 %s9, 2
      %s22 = sadd.s32 1, %s17
      %p23 = scmp.ge.s32.totalorder %s22, 2
      %s24 = scalar_select %p23, 0, %s22
      %s25 = sadd.s32 1, %s16
      %s26 = scalar_select %p23, %s25, %s16
      %p27 = scmp.ge.s32.totalorder %s26, 1
      %s28 = scalar_select %p27, 0, %s26
      %s29 = ssub.s32 %s16, %s28
      %p30 = scmp.eq.s32.totalorder %s29, 0
      %s32 = sadd.s32 %s31, 1
      %s33 = scalar_select %p30, %s31, %s32
      %p36 = pneg %p30
      %p37 = scmp.eq.s32.totalorder %s9, 1
      %p38 = por %p36, %p37
      %p39 = scmp.ne.s32.totalorder %s31, %s34
      %p40 = scmp.eq.s32.totalorder %s9, 0
      %p41 = por %p39, %p40
      %p42 = scmp.ne.s32.totalorder %s31, %s34
      %p43 = scmp.eq.s32.totalorder %s14, 1
      %p44 = por %p42, %p43
      %p45 = scmp.ne.s32.totalorder %s34, %s35
      %p46 = scmp.eq.s32.totalorder %s14, 0
      %p47 = por %p45, %p46
      %p48 = scmp.ne.s32.totalorder %s34, %s35
      %p49 = scmp.eq.s32.totalorder %s15, 1
      %p50 = por %p48, %p49
      %p52 = scmp.ne.s32.totalorder %s35, %s51
      %p53 = scmp.eq.s32.totalorder %s15, 0
      %p54 = por %p52, %p53
      %s56 = sadd.s32 %s55, 1
      %p59 = scmp.eq.s32.totalorder %s9, 1
      %p60 = scmp.ne.s32.totalorder %s55, %s57
      %p61 = scmp.eq.s32.totalorder %s9, 0
      %p62 = por %p60, %p61
      %p63 = scmp.ne.s32.totalorder %s55, %s57
      %p64 = scmp.eq.s32.totalorder %s14, 1
      %p65 = por %p63, %p64
      %p66 = scmp.ne.s32.totalorder %s57, %s58
      %p67 = scmp.eq.s32.totalorder %s14, 0
      %p68 = por %p66, %p67
      %p69 = scmp.ne.s32.totalorder %s57, %s58
      %p70 = scmp.eq.s32.totalorder %s15, 1
      %p71 = por %p69, %p70
      %p73 = scmp.ne.s32.totalorder %s58, %s72
      %p74 = scmp.eq.s32.totalorder %s15, 0
      %p75 = por %p73, %p74
      %s76 = ssub.s32 %s17, %s24
      %p77 = scmp.eq.s32.totalorder %s76, 0
      %s79 = sadd.s32 %s78, 1
      %s80 = scalar_select %p77, %s78, %s79
      %p83 = pneg %p77
      %p84 = scmp.eq.s32.totalorder %s9, 1
      %p85 = por %p83, %p84
      %p86 = scmp.ne.s32.totalorder %s78, %s81
      %p87 = scmp.eq.s32.totalorder %s9, 0
      %p88 = por %p86, %p87
      %p89 = scmp.ne.s32.totalorder %s78, %s81
      %p90 = scmp.eq.s32.totalorder %s14, 1
      %p91 = por %p89, %p90
      %p92 = scmp.ne.s32.totalorder %s81, %s82
      %p93 = scmp.eq.s32.totalorder %s14, 0
      %p94 = por %p92, %p93
      %p95 = scmp.ne.s32.totalorder %s81, %s82
      %p96 = scmp.eq.s32.totalorder %s15, 1
      %p97 = por %p95, %p96
      %p99 = scmp.ne.s32.totalorder %s82, %s98
      %p100 = scmp.eq.s32.totalorder %s15, 0
      %p101 = por %p99, %p100
      %s102 = ssub.s32 %s16, %s28
      %s103 = ssub.s32 %s17, %s24
      %s104 = sor.u32 %s102, %s103
      %p105 = scmp.eq.s32.totalorder %s104, 0
      %s107 = sadd.s32 %s106, 1
      %s108 = scalar_select %p105, %s106, %s107
      %p111 = pneg %p105
      %p112 = scmp.eq.s32.totalorder %s9, 1
      %p113 = por %p111, %p112
      %p114 = scmp.ne.s32.totalorder %s106, %s109
      %p115 = scmp.eq.s32.totalorder %s9, 0
      %p116 = por %p114, %p115
      %p117 = scmp.ne.s32.totalorder %s106, %s109
      %p118 = scmp.eq.s32.totalorder %s14, 1
      %p119 = por %p117, %p118
      %p120 = scmp.ne.s32.totalorder %s109, %s110
      %p121 = scmp.eq.s32.totalorder %s14, 0
      %p122 = por %p120, %p121
      %p123 = scmp.ne.s32.totalorder %s109, %s110
      %p124 = scmp.eq.s32.totalorder %s15, 1
      %p125 = por %p123, %p124
      %p127 = scmp.ne.s32.totalorder %s110, %s126
      %p128 = scmp.eq.s32.totalorder %s15, 0
      %p129 = por %p127, %p128
      %p130 = scmp.le.s32.totalorder 1, %s9
      %p131 = scmp.lt.s32.totalorder %s9, 3
      %p132 = pnand %p130, %p131
      %p133 = pneg %p132
      // Predicated region
      $region9: #{forward.16} parent=5 // pred_check
        _
      $region10: #{forward.16} parent=5 // pred_check_branch
        %135 = sbr.rel (%p132) target = $region12
      $region11: #{forward.16} parent=5 // pred_region
        %s136 = ssub.s32 %s9, 1
        // Predicated region
        $region13: #{forward.16} parent=11 // pred_check
          %p137 = pneg %p47
        $region14: #{forward.16} parent=11 // pred_check_branch
          %139 = sbr.rel (%p137) target = $region16
        $region15: #{forward.16} parent=11 // pred_region
          %s140 = smul.u32 2, %s18
          %p141 = scmp.lt.s32.totalorder %s140, 1
          %s142 = scalar_select %p141, %s140, 1
          %s143 = smul.addr %s142, 2
          %s144 = smul.addr %s143, 4
          %s145 = scalar_lea.vmem %s0, %s144
          %s146 = smul.u32 2, %s18
        $region16: #{forward.16} parent=11 // pred_fallthru
          _
        // Predicated region
        $region17: #{forward.16} parent=11 // pred_check
          %p147 = pneg %p68
        $region18: #{forward.16} parent=11 // pred_check_branch
          %149 = sbr.rel (%p147) target = $region20
        $region19: #{forward.16} parent=11 // pred_region
          _
        $region20: #{forward.16} parent=11 // pred_fallthru
          _
      $region12: #{forward.16} parent=5 // pred_fallthru
        _
      %p150 = scmp.lt.s32.totalorder %s9, 2
      // Predicated region
      $region21: #{forward.16} parent=5 // pred_check
        %p151 = pneg %p150
      $region22: #{forward.16} parent=5 // pred_check_branch
        %153 = sbr.rel (%p151) target = $region24
      $region23: #{forward.16} parent=5 // pred_region
        // Predicated region
        $region25: #{forward.16} parent=23 // pred_check
          %p154 = pneg %p88
        $region26: #{forward.16} parent=23 // pred_check_branch
          %156 = sbr.rel (%p154) target = $region28
        $region27: #{forward.16} parent=23 // pred_region
          %s157 = sand.u32 %s78, 1
          %s158 = sand.u32 %s78, 1
          %s159 = smul.addr %s158, 384
          %s160 = scalar_lea.vmem [#allocation3], %s159
          %s161 = smul.u32 3, %s17
          %s162 = smul.addr %s161, 4
          %s163 = scalar_lea.vmem %s2, %s162
          // Predicated region
          $region29: #{forward.16} parent=27 // pred_check
            _
          $region30: #{forward.16} parent=27 // pred_check_branch
            %165 = sbr.rel (0) target = $region32
          $region31: #{forward.16} parent=27 // pred_region
            // Predicated region
            $region33: #{forward.16} parent=31 // pred_check
              _
            $region34: #{forward.16} parent=31 // pred_check_branch
              %167 = sbr.rel (0) target = $region36
            $region35: #{forward.16} parent=31 // pred_region
              %s168 = scalar_lea.vmem %s163, 8
              %s169 = scalar_lea.vmem %s160, 8 [#allocation3]
              loop: start=0, step=1, limit=1
              $region37: #{forward.16} parent=35 // loop_pre_header
                _
              $region38: #{forward.16} parent=35 // loop_header
                %s171 = sphi 0, %s175
                %p172 = scmp.ge.s32.totalorder %s171, 1
                %s176 = sphi %s163, %s163
                %s177 = sphi %s160, %s160
              $region39: #{forward.16} parent=35 // loop_header_branch
                %174 = sbr.rel (%p172) target = $region43
              $region40: #{forward.16} parent=35 // loop_body
                %v178 = vld [vmem:[%s176] sm:$0xff]
                %179 = vst [vmem:[%s177] sm:$0xff] %v178
                %v180 = vld [vmem:[%s176 + $0x18] sm:$0xff]
                %181 = vst [vmem:[%s177 + $0xc] sm:$0xff] %v180
                %v182 = vld [vmem:[%s176 + $0x30] sm:$0xff]
                %183 = vst [vmem:[%s177 + $0x18] sm:$0xff] %v182
                %v184 = vld [vmem:[%s176 + $0x48] sm:$0xff]
                %185 = vst [vmem:[%s177 + $0x24] sm:$0xff] %v184
                %v186 = vld [vmem:[%s176 + $0x60] sm:$0xff]
                %187 = vst [vmem:[%s177 + $0x30] sm:$0xff] %v186
                %v188 = vld [vmem:[%s176 + $0x78] sm:$0xff]
                %189 = vst [vmem:[%s177 + $0x3c] sm:$0xff] %v188
                %v190 = vld [vmem:[%s176 + $0x90] sm:$0xff]
                %191 = vst [vmem:[%s177 + $0x48] sm:$0xff] %v190
                %v192 = vld [vmem:[%s176 + $0xa8] sm:$0xff]
                %193 = vst [vmem:[%s177 + $0x54] sm:$0xff] %v192
                %v194 = vld [vmem:[%s176 + $0xc0] sm:$0xff]
                %195 = vst [vmem:[%s177 + $0x60] sm:$0xff] %v194
                %v196 = vld [vmem:[%s176 + $0xd8] sm:$0xff]
                %197 = vst [vmem:[%s177 + $0x6c] sm:$0xff] %v196
                %v198 = vld [vmem:[%s176 + $0xf0] sm:$0xff]
                %199 = vst [vmem:[%s177 + $0x78] sm:$0xff] %v198
                %v200 = vld [vmem:[%s176 + $0x108] sm:$0xff]
                %201 = vst [vmem:[%s177 + $0x84] sm:$0xff] %v200
                %v202 = vld [vmem:[%s176 + $0x120] sm:$0xff]
                %203 = vst [vmem:[%s177 + $0x90] sm:$0xff] %v202
                %v204 = vld [vmem:[%s176 + $0x138] sm:$0xff]
                %205 = vst [vmem:[%s177 + $0x9c] sm:$0xff] %v204
                %v206 = vld [vmem:[%s176 + $0x150] sm:$0xff]
                %207 = vst [vmem:[%s177 + $0xa8] sm:$0xff] %v206
                %v208 = vld [vmem:[%s176 + $0x168] sm:$0xff]
                %209 = vst [vmem:[%s177 + $0xb4] sm:$0xff] %v208
                %v210 = vld [vmem:[%s176 + $0x180] sm:$0xff]
                %211 = vst [vmem:[%s177 + $0xc0] sm:$0xff] %v210
                %v212 = vld [vmem:[%s176 + $0x198] sm:$0xff]
                %213 = vst [vmem:[%s177 + $0xcc] sm:$0xff] %v212
                %v214 = vld [vmem:[%s176 + $0x1b0] sm:$0xff]
                %215 = vst [vmem:[%s177 + $0xd8] sm:$0xff] %v214
                %v216 = vld [vmem:[%s176 + $0x1c8] sm:$0xff]
                %217 = vst [vmem:[%s177 + $0xe4] sm:$0xff] %v216
                %v218 = vld [vmem:[%s176 + $0x1e0] sm:$0xff]
                %219 = vst [vmem:[%s177 + $0xf0] sm:$0xff] %v218
                %v220 = vld [vmem:[%s176 + $0x1f8] sm:$0xff]
                %221 = vst [vmem:[%s177 + $0xfc] sm:$0xff] %v220
                %v222 = vld [vmem:[%s176 + $0x210] sm:$0xff]
                %223 = vst [vmem:[%s177 + $0x108] sm:$0xff] %v222
                %v224 = vld [vmem:[%s176 + $0x228] sm:$0xff]
                %225 = vst [vmem:[%s177 + $0x114] sm:$0xff] %v224
                %v226 = vld [vmem:[%s176 + $0x240] sm:$0xff]
                %227 = vst [vmem:[%s177 + $0x120] sm:$0xff] %v226
                %v228 = vld [vmem:[%s176 + $0x258] sm:$0xff]
                %229 = vst [vmem:[%s177 + $0x12c] sm:$0xff] %v228
                %v230 = vld [vmem:[%s176 + $0x270] sm:$0xff]
                %231 = vst [vmem:[%s177 + $0x138] sm:$0xff] %v230
                %v232 = vld [vmem:[%s176 + $0x288] sm:$0xff]
                %233 = vst [vmem:[%s177 + $0x144] sm:$0xff] %v232
                %v234 = vld [vmem:[%s176 + $0x2a0] sm:$0xff]
                %235 = vst [vmem:[%s177 + $0x150] sm:$0xff] %v234
                %v236 = vld [vmem:[%s176 + $0x2b8] sm:$0xff]
                %237 = vst [vmem:[%s177 + $0x15c] sm:$0xff] %v236
                %v238 = vld [vmem:[%s176 + $0x2d0] sm:$0xff]
                %239 = vst [vmem:[%s177 + $0x168] sm:$0xff] %v238
                %v240 = vld [vmem:[%s176 + $0x2e8] sm:$0xff]
                %241 = vst [vmem:[%s177 + $0x174] sm:$0xff] %v240
              $region41: #{forward.16} parent=35 // loop_footer
                %s175 = sadd.s32 1, %s171
              $region42: #{forward.16} parent=35 // loop_footer_branch
                %170 = sbr.rel target = $region38
              $region43: #{forward.16} parent=35 // loop_exit
                _
              loop: start=0, step=1, limit=1
              $region44: #{forward.16} parent=35 // loop_pre_header
                _
              $region45: #{forward.16} parent=35 // loop_header
                %s244 = sphi 0, %s248
                %p245 = scmp.ge.s32.totalorder %s244, 1
                %s249 = sphi %s168, %s168
                %s250 = sphi %s169, %s169
              $region46: #{forward.16} parent=35 // loop_header_branch
                %247 = sbr.rel (%p245) target = $region50
              $region47: #{forward.16} parent=35 // loop_body
                %v251 = vld [vmem:[%s249] sm:$0xf]
                %252 = vst [vmem:[%s250] sm:$0xf] %v251
                %v253 = vld [vmem:[%s249 + $0x18] sm:$0xf]
                %254 = vst [vmem:[%s250 + $0xc] sm:$0xf] %v253
                %v255 = vld [vmem:[%s249 + $0x30] sm:$0xf]
                %256 = vst [vmem:[%s250 + $0x18] sm:$0xf] %v255
                %v257 = vld [vmem:[%s249 + $0x48] sm:$0xf]
                %258 = vst [vmem:[%s250 + $0x24] sm:$0xf] %v257
                %v259 = vld [vmem:[%s249 + $0x60] sm:$0xf]
                %260 = vst [vmem:[%s250 + $0x30] sm:$0xf] %v259
                %v261 = vld [vmem:[%s249 + $0x78] sm:$0xf]
                %262 = vst [vmem:[%s250 + $0x3c] sm:$0xf] %v261
                %v263 = vld [vmem:[%s249 + $0x90] sm:$0xf]
                %264 = vst [vmem:[%s250 + $0x48] sm:$0xf] %v263
                %v265 = vld [vmem:[%s249 + $0xa8] sm:$0xf]
                %266 = vst [vmem:[%s250 + $0x54] sm:$0xf] %v265
                %v267 = vld [vmem:[%s249 + $0xc0] sm:$0xf]
                %268 = vst [vmem:[%s250 + $0x60] sm:$0xf] %v267
                %v269 = vld [vmem:[%s249 + $0xd8] sm:$0xf]
                %270 = vst [vmem:[%s250 + $0x6c] sm:$0xf] %v269
                %v271 = vld [vmem:[%s249 + $0xf0] sm:$0xf]
                %272 = vst [vmem:[%s250 + $0x78] sm:$0xf] %v271
                %v273 = vld [vmem:[%s249 + $0x108] sm:$0xf]
                %274 = vst [vmem:[%s250 + $0x84] sm:$0xf] %v273
                %v275 = vld [vmem:[%s249 + $0x120] sm:$0xf]
                %276 = vst [vmem:[%s250 + $0x90] sm:$0xf] %v275
                %v277 = vld [vmem:[%s249 + $0x138] sm:$0xf]
                %278 = vst [vmem:[%s250 + $0x9c] sm:$0xf] %v277
                %v279 = vld [vmem:[%s249 + $0x150] sm:$0xf]
                %280 = vst [vmem:[%s250 + $0xa8] sm:$0xf] %v279
                %v281 = vld [vmem:[%s249 + $0x168] sm:$0xf]
                %282 = vst [vmem:[%s250 + $0xb4] sm:$0xf] %v281
                %v283 = vld [vmem:[%s249 + $0x180] sm:$0xf]
                %284 = vst [vmem:[%s250 + $0xc0] sm:$0xf] %v283
                %v285 = vld [vmem:[%s249 + $0x198] sm:$0xf]
                %286 = vst [vmem:[%s250 + $0xcc] sm:$0xf] %v285
                %v287 = vld [vmem:[%s249 + $0x1b0] sm:$0xf]
                %288 = vst [vmem:[%s250 + $0xd8] sm:$0xf] %v287
                %v289 = vld [vmem:[%s249 + $0x1c8] sm:$0xf]
                %290 = vst [vmem:[%s250 + $0xe4] sm:$0xf] %v289
                %v291 = vld [vmem:[%s249 + $0x1e0] sm:$0xf]
                %292 = vst [vmem:[%s250 + $0xf0] sm:$0xf] %v291
                %v293 = vld [vmem:[%s249 + $0x1f8] sm:$0xf]
                %294 = vst [vmem:[%s250 + $0xfc] sm:$0xf] %v293
                %v295 = vld [vmem:[%s249 + $0x210] sm:$0xf]
                %296 = vst [vmem:[%s250 + $0x108] sm:$0xf] %v295
                %v297 = vld [vmem:[%s249 + $0x228] sm:$0xf]
                %298 = vst [vmem:[%s250 + $0x114] sm:$0xf] %v297
                %v299 = vld [vmem:[%s249 + $0x240] sm:$0xf]
                %300 = vst [vmem:[%s250 + $0x120] sm:$0xf] %v299
                %v301 = vld [vmem:[%s249 + $0x258] sm:$0xf]
                %302 = vst [vmem:[%s250 + $0x12c] sm:$0xf] %v301
                %v303 = vld [vmem:[%s249 + $0x270] sm:$0xf]
                %304 = vst [vmem:[%s250 + $0x138] sm:$0xf] %v303
                %v305 = vld [vmem:[%s249 + $0x288] sm:$0xf]
                %306 = vst [vmem:[%s250 + $0x144] sm:$0xf] %v305
                %v307 = vld [vmem:[%s249 + $0x2a0] sm:$0xf]
                %308 = vst [vmem:[%s250 + $0x150] sm:$0xf] %v307
                %v309 = vld [vmem:[%s249 + $0x2b8] sm:$0xf]
                %310 = vst [vmem:[%s250 + $0x15c] sm:$0xf] %v309
                %v311 = vld [vmem:[%s249 + $0x2d0] sm:$0xf]
                %312 = vst [vmem:[%s250 + $0x168] sm:$0xf] %v311
                %v313 = vld [vmem:[%s249 + $0x2e8] sm:$0xf]
                %314 = vst [vmem:[%s250 + $0x174] sm:$0xf] %v313
              $region48: #{forward.16} parent=35 // loop_footer
                %s248 = sadd.s32 1, %s244
              $region49: #{forward.16} parent=35 // loop_footer_branch
                %243 = sbr.rel target = $region45
              $region50: #{forward.16} parent=35 // loop_exit
                _
            $region36: #{forward.16} parent=31 // pred_fallthru
              _
          $region32: #{forward.16} parent=27 // pred_fallthru
            _
          %315 = vnop
        $region28: #{forward.16} parent=23 // pred_fallthru
          _
      $region24: #{forward.16} parent=5 // pred_fallthru
        _
      %p316 = scmp.le.s32.totalorder 1, %s9
      %p317 = scmp.lt.s32.totalorder %s9, 3
      %p318 = pnand %p316, %p317
      %p319 = pneg %p318
      // Predicated region
      $region51: #{forward.16} parent=5 // pred_check
        _
      $region52: #{forward.16} parent=5 // pred_check_branch
        %321 = sbr.rel (%p318) target = $region54
      $region53: #{forward.16} parent=5 // pred_region
        %s322 = ssub.s32 %s9, 1
        %s323 = sand.u32 %s81, 1
        %s324 = sand.u32 %s81, 1
        %s325 = smul.addr %s324, 384
        %s326 = scalar_lea.vmem [#allocation3], %s325
        // Predicated region
        $region55: #{forward.16} parent=53 // pred_check
          %p327 = pneg %p94
        $region56: #{forward.16} parent=53 // pred_check_branch
          %329 = sbr.rel (%p327) target = $region58
        $region57: #{forward.16} parent=53 // pred_region
          _
        $region58: #{forward.16} parent=53 // pred_fallthru
          _
        %s330 = smul.u32 2, %s18
        %p331 = scmp.lt.s32.totalorder %s330, 1
        %s332 = scalar_select %p331, %s330, 1
        %s333 = smul.addr %s332, 2
        %s334 = smul.addr %s333, 4
        %s335 = scalar_lea.vmem %s0, %s334
        %p336 = pneg %p47
        %p337 = pneg %p44
        %p338 = pneg %p68
        %p339 = pneg %p65
        %s340 = sand.u32 %s81, 1
        %s341 = sand.u32 %s81, 1
        %s342 = smul.addr %s341, 384
        %s343 = scalar_lea.vmem [#allocation3], %s342
        %p344 = pneg %p94
        %p345 = pneg %p91
        %p346 = pneg %p122
        %p347 = pneg %p119
        %s348 = sand.u32 %s109, 1
        %s349 = sand.u32 %s109, 1
        %s350 = smul.addr %s349, 24
        %s351 = scalar_lea.vmem [#allocation4], %s350
        %s352 = smul.u32 2, %s18
        %p353 = scmp.lt.s32.totalorder %s352, 1
        %s354 = scalar_select %p353, %s352, 1
        %s355 = smul.addr %s354, 2
        %s356 = smul.addr %s355, 4
        %s357 = scalar_lea.vmem %s0, %s356
        %s358 = smul.u32 2, %s18
        %s359 = smul.u32 3, %s19
        %s360 = smul.u32 2, %s18
        %s361 = smul.u32 3, %s19
        %p363 = scmp.eq.s32.totalorder %s19, 0
        // Predicated region
        $region59: #{forward.16} parent=53 // pred_check
          %p364 = pneg %p363
        $region60: #{forward.16} parent=53 // pred_check_branch
          %366 = sbr.rel (%p364) target = $region62
        $region61: #{forward.16} parent=53 // pred_region
          %v367 = vld [vmem:[%s357] sm:$0xff]
          %v368 = vld [vmem:[%s357 + $0x8] sm:$0xff]
          %v369 = vunpack.c.l.bf16 %v367
          %v370 = vunpack.c.h.bf16 %v367
          %v371 = vunpack.c.l.bf16 %v368
          %v372 = vunpack.c.h.bf16 %v368
          %v373 = vmul.f32 %v369, %v369
          %v374 = vmul.f32 %v370, %v370
          %v375 = vmul.f32 %v371, %v371
          %v376 = vmul.f32 %v372, %v372
          %v377 = vadd.f32 %v373, %v374
          %378 = vadd.xlane.f32.xlu0 %v377
          %v379 = vpop.xlane.xlu0 %378
          %v380 = vadd.f32 %v375, %v376
          %381 = vadd.xlane.f32.xlu0 %v380
          %v382 = vpop.xlane.xlu0 %381
          %v383 = vrcp.pop 256.0
          %v384 = vmul.f32 %v379, %v383
          %v385 = vmul.f32 %v382, %v383
          %v386 = vadd.f32 %v384, 1e-06
          %v387 = vadd.f32 %v385, 1e-06
          %v388 = vrsqrt.pop %v386
          %v389 = vrsqrt.pop %v387
          %v390 = vmul.f32 %v369, %v388
          %v391 = vmul.f32 %v370, %v388
          %v392 = vmul.f32 %v371, %v389
          %v393 = vmul.f32 %v372, %v389
          %v394 = vld [vmem:[%s1] sm:$0x3]
          %v396 = vlaneseq
          %v397 = vshrl.u32 %v396, 7
          %v398 = vsub.s32 0, %v397
          %v399 = vrot.slane %v394, %v398
          %v400 = vlaneseq
          %v401 = vshrl.u32 %v400, 7
          %v402 = vsub.s32 1, %v401
          %v403 = vrot.slane %v394, %v402
          %v406 = vmul.f32 %v390, %v399
          %v407 = vmul.f32 %v391, %v403
          %v408 = vmul.f32 %v392, %v399
          %v409 = vmul.f32 %v393, %v403
          %v410 = vpack.c.bf16 %v408, %v406
          %v411 = vpack.c.bf16 %v409, %v407
          %412 = vst [vmem:[#allocation2] sm:$0xff] %v410
          %413 = vst [vmem:[#allocation2 + $0x8] sm:$0xff] %v411
        $region62: #{forward.16} parent=53 // pred_fallthru
          _
        %v414 = vld [vmem:[#allocation2] sm:$0xff]
        %v415 = vld [vmem:[#allocation2 + $0x8] sm:$0xff]
        %v416 = vld [vmem:[%s326] sm:$0xff]
        %v417 = vld [vmem:[%s326 + $0x8] sm:$0xf]
        %v418 = vld [vmem:[%s326 + $0xc] sm:$0xff]
        %v419 = vld [vmem:[%s326 + $0x14] sm:$0xf]
        %v420 = vld [vmem:[%s326 + $0x18] sm:$0xff]
        %v421 = vld [vmem:[%s326 + $0x20] sm:$0xf]
        %v422 = vld [vmem:[%s326 + $0x24] sm:$0xff]
        %v423 = vld [vmem:[%s326 + $0x2c] sm:$0xf]
        %v424 = vld [vmem:[%s326 + $0x30] sm:$0xff]
        %v425 = vld [vmem:[%s326 + $0x38] sm:$0xf]
        %v426 = vld [vmem:[%s326 + $0x3c] sm:$0xff]
        %v427 = vld [vmem:[%s326 + $0x44] sm:$0xf]
        %v428 = vld [vmem:[%s326 + $0x48] sm:$0xff]
        %v429 = vld [vmem:[%s326 + $0x50] sm:$0xf]
        %v430 = vld [vmem:[%s326 + $0x54] sm:$0xff]
        %v431 = vld [vmem:[%s326 + $0x5c] sm:$0xf]
        %v432 = vld [vmem:[%s326 + $0x60] sm:$0xff]
        %v433 = vld [vmem:[%s326 + $0x68] sm:$0xf]
        %v434 = vld [vmem:[%s326 + $0x6c] sm:$0xff]
        %v435 = vld [vmem:[%s326 + $0x74] sm:$0xf]
        %v436 = vld [vmem:[%s326 + $0x78] sm:$0xff]
        %v437 = vld [vmem:[%s326 + $0x80] sm:$0xf]
        %v438 = vld [vmem:[%s326 + $0x84] sm:$0xff]
        %v439 = vld [vmem:[%s326 + $0x8c] sm:$0xf]
        %v440 = vld [vmem:[%s326 + $0x90] sm:$0xff]
        %v441 = vld [vmem:[%s326 + $0x98] sm:$0xf]
        %v442 = vld [vmem:[%s326 + $0x9c] sm:$0xff]
        %v443 = vld [vmem:[%s326 + $0xa4] sm:$0xf]
        %v444 = vld [vmem:[%s326 + $0xa8] sm:$0xff]
        %v445 = vld [vmem:[%s326 + $0xb0] sm:$0xf]
        %v446 = vld [vmem:[%s326 + $0xb4] sm:$0xff]
        %v447 = vld [vmem:[%s326 + $0xbc] sm:$0xf]
        %v448 = vld [vmem:[%s326 + $0xc0] sm:$0xff]
        %v449 = vld [vmem:[%s326 + $0xc8] sm:$0xf]
        %v450 = vld [vmem:[%s326 + $0xcc] sm:$0xff]
        %v451 = vld [vmem:[%s326 + $0xd4] sm:$0xf]
        %v452 = vld [vmem:[%s326 + $0xd8] sm:$0xff]
        %v453 = vld [vmem:[%s326 + $0xe0] sm:$0xf]
        %v454 = vld [vmem:[%s326 + $0xe4] sm:$0xff]
        %v455 = vld [vmem:[%s326 + $0xec] sm:$0xf]
        %v456 = vld [vmem:[%s326 + $0xf0] sm:$0xff]
        %v457 = vld [vmem:[%s326 + $0xf8] sm:$0xf]
        %v458 = vld [vmem:[%s326 + $0xfc] sm:$0xff]
        %v459 = vld [vmem:[%s326 + $0x104] sm:$0xf]
        %v460 = vld [vmem:[%s326 + $0x108] sm:$0xff]
        %v461 = vld [vmem:[%s326 + $0x110] sm:$0xf]
        %v462 = vld [vmem:[%s326 + $0x114] sm:$0xff]
        %v463 = vld [vmem:[%s326 + $0x11c] sm:$0xf]
        %v464 = vld [vmem:[%s326 + $0x120] sm:$0xff]
        %v465 = vld [vmem:[%s326 + $0x128] sm:$0xf]
        %v466 = vld [vmem:[%s326 + $0x12c] sm:$0xff]
        %v467 = vld [vmem:[%s326 + $0x134] sm:$0xf]
        %v468 = vld [vmem:[%s326 + $0x138] sm:$0xff]
        %v469 = vld [vmem:[%s326 + $0x140] sm:$0xf]
        %v470 = vld [vmem:[%s326 + $0x144] sm:$0xff]
        %v471 = vld [vmem:[%s326 + $0x14c] sm:$0xf]
        %v472 = vld [vmem:[%s326 + $0x150] sm:$0xff]
        %v473 = vld [vmem:[%s326 + $0x158] sm:$0xf]
        %v474 = vld [vmem:[%s326 + $0x15c] sm:$0xff]
        %v475 = vld [vmem:[%s326 + $0x164] sm:$0xf]
        %v476 = vld [vmem:[%s326 + $0x168] sm:$0xff]
        %v477 = vld [vmem:[%s326 + $0x170] sm:$0xf]
        %v478 = vld [vmem:[%s326 + $0x174] sm:$0xff]
        %v479 = vld [vmem:[%s326 + $0x17c] sm:$0xf]
        %v544 = vunpack.c.l.b16 %v416
        %v545 = vunpack.c.h.b16 %v416
        %v546 = vunpack.c.l.b16 %v417
        %v547 = vunpack.c.l.b16 %v418
        %v548 = vunpack.c.h.b16 %v418
        %v549 = vunpack.c.l.b16 %v419
        %v550 = vunpack.c.l.b16 %v420
        %v551 = vunpack.c.h.b16 %v420
        %v552 = vunpack.c.l.b16 %v421
        %v553 = vunpack.c.l.b16 %v422
        %v554 = vunpack.c.h.b16 %v422
        %v555 = vunpack.c.l.b16 %v423
        %v556 = vunpack.c.l.b16 %v424
        %v557 = vunpack.c.h.b16 %v424
        %v558 = vunpack.c.l.b16 %v425
        %v559 = vunpack.c.l.b16 %v426
        %v560 = vunpack.c.h.b16 %v426
        %v561 = vunpack.c.l.b16 %v427
        %v562 = vunpack.c.l.b16 %v428
        %v563 = vunpack.c.h.b16 %v428
        %v564 = vunpack.c.l.b16 %v429
        %v565 = vunpack.c.l.b16 %v430
        %v566 = vunpack.c.h.b16 %v430
        %v567 = vunpack.c.l.b16 %v431
        %v568 = vunpack.c.l.b16 %v432
        %v569 = vunpack.c.h.b16 %v432
        %v570 = vunpack.c.l.b16 %v433
        %v571 = vunpack.c.l.b16 %v434
        %v572 = vunpack.c.h.b16 %v434
        %v573 = vunpack.c.l.b16 %v435
        %v574 = vunpack.c.l.b16 %v436
        %v575 = vunpack.c.h.b16 %v436
        %v576 = vunpack.c.l.b16 %v437
        %v577 = vunpack.c.l.b16 %v438
        %v578 = vunpack.c.h.b16 %v438
        %v579 = vunpack.c.l.b16 %v439
        %v580 = vunpack.c.l.b16 %v440
        %v581 = vunpack.c.h.b16 %v440
        %v582 = vunpack.c.l.b16 %v441
        %v583 = vunpack.c.l.b16 %v442
        %v584 = vunpack.c.h.b16 %v442
        %v585 = vunpack.c.l.b16 %v443
        %v586 = vunpack.c.l.b16 %v444
        %v587 = vunpack.c.h.b16 %v444
        %v588 = vunpack.c.l.b16 %v445
        %v589 = vunpack.c.l.b16 %v446
        %v590 = vunpack.c.h.b16 %v446
        %v591 = vunpack.c.l.b16 %v447
        %v592 = vunpack.c.l.b16 %v448
        %v593 = vunpack.c.h.b16 %v448
        %v594 = vunpack.c.l.b16 %v449
        %v595 = vunpack.c.l.b16 %v450
        %v596 = vunpack.c.h.b16 %v450
        %v597 = vunpack.c.l.b16 %v451
        %v598 = vunpack.c.l.b16 %v452
        %v599 = vunpack.c.h.b16 %v452
        %v600 = vunpack.c.l.b16 %v453
        %v601 = vunpack.c.l.b16 %v454
        %v602 = vunpack.c.h.b16 %v454
        %v603 = vunpack.c.l.b16 %v455
        %v604 = vunpack.c.l.b16 %v456
        %v605 = vunpack.c.h.b16 %v456
        %v606 = vunpack.c.l.b16 %v457
        %v607 = vunpack.c.l.b16 %v458
        %v608 = vunpack.c.h.b16 %v458
        %v609 = vunpack.c.l.b16 %v459
        %v610 = vunpack.c.l.b16 %v460
        %v611 = vunpack.c.h.b16 %v460
        %v612 = vunpack.c.l.b16 %v461
        %v613 = vunpack.c.l.b16 %v462
        %v614 = vunpack.c.h.b16 %v462
        %v615 = vunpack.c.l.b16 %v463
        %v616 = vunpack.c.l.b16 %v464
        %v617 = vunpack.c.h.b16 %v464
        %v618 = vunpack.c.l.b16 %v465
        %v619 = vunpack.c.l.b16 %v466
        %v620 = vunpack.c.h.b16 %v466
        %v621 = vunpack.c.l.b16 %v467
        %v622 = vunpack.c.l.b16 %v468
        %v623 = vunpack.c.h.b16 %v468
        %v624 = vunpack.c.l.b16 %v469
        %v625 = vunpack.c.l.b16 %v470
        %v626 = vunpack.c.h.b16 %v470
        %v627 = vunpack.c.l.b16 %v471
        %v628 = vunpack.c.l.b16 %v472
        %v629 = vunpack.c.h.b16 %v472
        %v630 = vunpack.c.l.b16 %v473
        %v631 = vunpack.c.l.b16 %v474
        %v632 = vunpack.c.h.b16 %v474
        %v633 = vunpack.c.l.b16 %v475
        %v634 = vunpack.c.l.b16 %v476
        %v635 = vunpack.c.h.b16 %v476
        %v636 = vunpack.c.l.b16 %v477
        %v637 = vunpack.c.l.b16 %v478
        %v638 = vunpack.c.h.b16 %v478
        %v639 = vunpack.c.l.b16 %v479
        %v640 = vpack.c.b16 %v547, %v544
        %v641 = vpack.c.b16 %v548, %v545
        %v642 = vpack.c.b16 %v549, %v546
        %v643 = vpack.c.b16 %v553, %v550
        %v644 = vpack.c.b16 %v554, %v551
        %v645 = vpack.c.b16 %v555, %v552
        %v646 = vpack.c.b16 %v559, %v556
        %v647 = vpack.c.b16 %v560, %v557
        %v648 = vpack.c.b16 %v561, %v558
        %v649 = vpack.c.b16 %v565, %v562
        %v650 = vpack.c.b16 %v566, %v563
        %v651 = vpack.c.b16 %v567, %v564
        %v652 = vpack.c.b16 %v571, %v568
        %v653 = vpack.c.b16 %v572, %v569
        %v654 = vpack.c.b16 %v573, %v570
        %v655 = vpack.c.b16 %v577, %v574
        %v656 = vpack.c.b16 %v578, %v575
        %v657 = vpack.c.b16 %v579, %v576
        %v658 = vpack.c.b16 %v583, %v580
        %v659 = vpack.c.b16 %v584, %v581
        %v660 = vpack.c.b16 %v585, %v582
        %v661 = vpack.c.b16 %v589, %v586
        %v662 = vpack.c.b16 %v590, %v587
        %v663 = vpack.c.b16 %v591, %v588
        %v664 = vpack.c.b16 %v595, %v592
        %v665 = vpack.c.b16 %v596, %v593
        %v666 = vpack.c.b16 %v597, %v594
        %v667 = vpack.c.b16 %v601, %v598
        %v668 = vpack.c.b16 %v602, %v599
        %v669 = vpack.c.b16 %v603, %v600
        %v670 = vpack.c.b16 %v607, %v604
        %v671 = vpack.c.b16 %v608, %v605
        %v672 = vpack.c.b16 %v609, %v606
        %v673 = vpack.c.b16 %v613, %v610
        %v674 = vpack.c.b16 %v614, %v611
        %v675 = vpack.c.b16 %v615, %v612
        %v676 = vpack.c.b16 %v619, %v616
        %v677 = vpack.c.b16 %v620, %v617
        %v678 = vpack.c.b16 %v621, %v618
        %v679 = vpack.c.b16 %v625, %v622
        %v680 = vpack.c.b16 %v626, %v623
        %v681 = vpack.c.b16 %v627, %v624
        %v682 = vpack.c.b16 %v631, %v628
        %v683 = vpack.c.b16 %v632, %v629
        %v684 = vpack.c.b16 %v633, %v630
        %v685 = vpack.c.b16 %v637, %v634
        %v686 = vpack.c.b16 %v638, %v635
        %v687 = vpack.c.b16 %v639, %v636
        %736 = vmatprep.subr.bf16.mxu0 %v641
        %737 = vmatpush1.bf16.msra.mxu0 %v640
        %738 = vmatprep.subr.bf16.mxu0 %v644
        %739 = vmatpush1.bf16.msra.mxu0 %v643
        %740 = vmatprep.subr.bf16.mxu0 %v647
        %741 = vmatpush1.bf16.msra.mxu0 %v646
        %742 = vmatprep.subr.bf16.mxu0 %v650
        %743 = vmatpush1.bf16.msra.mxu0 %v649
        %744 = vmatprep.subr.bf16.mxu0 %v653
        %745 = vmatpush1.bf16.msra.mxu0 %v652
        %746 = vmatprep.subr.bf16.mxu0 %v656
        %747 = vmatpush1.bf16.msra.mxu0 %v655
        %748 = vmatprep.subr.bf16.mxu0 %v659
        %749 = vmatpush1.bf16.msra.mxu0 %v658
        %750 = vmatprep.subr.bf16.mxu0 %v662
        %751 = vmatpush1.bf16.msra.mxu0 %v661
        %752 = vmatprep.subr.bf16.mxu0 %v665
        %753 = vmatpush1.bf16.msra.mxu0 %v664
        %754 = vmatprep.subr.bf16.mxu0 %v668
        %755 = vmatpush1.bf16.msra.mxu0 %v667
        %756 = vmatprep.subr.bf16.mxu0 %v671
        %757 = vmatpush1.bf16.msra.mxu0 %v670
        %758 = vmatprep.subr.bf16.mxu0 %v674
        %759 = vmatpush1.bf16.msra.mxu0 %v673
        %760 = vmatprep.subr.bf16.mxu0 %v677
        %761 = vmatpush1.bf16.msra.mxu0 %v676
        %762 = vmatprep.subr.bf16.mxu0 %v680
        %763 = vmatpush1.bf16.msra.mxu0 %v679
        %764 = vmatprep.subr.bf16.mxu0 %v683
        %765 = vmatpush1.bf16.msra.mxu0 %v682
        %766 = vmatprep.subr.bf16.mxu0 %v686
        %767 = vmatpush1.bf16.msra.mxu0 %v685
        %768 = vmatprep.mubr.bf16.mxu0 %v415
        %769 = vmatmul.mubr.bf16.gmra.mrb[0].mxu0 %v414
        %v770 = vpop.f32.mrb[0].mxu0
        %v771 = vadd.f32 0.0, %v770
        %v772 = vpop.f32.mrb[0].mxu0
        %v773 = vadd.f32 0.0, %v772
        %v774 = vpop.f32.mrb[0].mxu0
        %v775 = vadd.f32 0.0, %v774
        %v776 = vpop.f32.mrb[0].mxu0
        %v777 = vadd.f32 0.0, %v776
        %778 = vdwg.mxu0
        %779 = vmatprep.subr.bf16.mxu0 0
        %780 = vmatpush1.bf16.msra.mxu0 %v642
        %781 = vmatprep.subr.bf16.mxu0 0
        %782 = vmatpush1.bf16.msra.mxu0 %v645
        %783 = vmatprep.subr.bf16.mxu0 0
        %784 = vmatpush1.bf16.msra.mxu0 %v648
        %785 = vmatprep.subr.bf16.mxu0 0
        %786 = vmatpush1.bf16.msra.mxu0 %v651
        %787 = vmatprep.subr.bf16.mxu0 0
        %788 = vmatpush1.bf16.msra.mxu0 %v654
        %789 = vmatprep.subr.bf16.mxu0 0
        %790 = vmatpush1.bf16.msra.mxu0 %v657
        %791 = vmatprep.subr.bf16.mxu0 0
        %792 = vmatpush1.bf16.msra.mxu0 %v660
        %793 = vmatprep.subr.bf16.mxu0 0
        %794 = vmatpush1.bf16.msra.mxu0 %v663
        %795 = vmatprep.subr.bf16.mxu0 0
        %796 = vmatpush1.bf16.msra.mxu0 %v666
        %797 = vmatprep.subr.bf16.mxu0 0
        %798 = vmatpush1.bf16.msra.mxu0 %v669
        %799 = vmatprep.subr.bf16.mxu0 0
        %800 = vmatpush1.bf16.msra.mxu0 %v672
        %801 = vmatprep.subr.bf16.mxu0 0
        %802 = vmatpush1.bf16.msra.mxu0 %v675
        %803 = vmatprep.subr.bf16.mxu0 0
        %804 = vmatpush1.bf16.msra.mxu0 %v678
        %805 = vmatprep.subr.bf16.mxu0 0
        %806 = vmatpush1.bf16.msra.mxu0 %v681
        %807 = vmatprep.subr.bf16.mxu0 0
        %808 = vmatpush1.bf16.msra.mxu0 %v684
        %809 = vmatprep.subr.bf16.mxu0 0
        %810 = vmatpush1.bf16.msra.mxu0 %v687
        %811 = vmatprep.mubr.bf16.mxu0 %v415
        %812 = vmatmul.mubr.bf16.gmra.mrb[0].mxu0 %v414
        %v813 = vpop.f32.mrb[0].mxu0
        %v814 = vadd.f32 0.0, %v813
        %v815 = vpop.f32.mrb[0].mxu0
        %v816 = vpop.f32.mrb[0].mxu0
        %v817 = vadd.f32 0.0, %v816
        %v818 = vpop.f32.mrb[0].mxu0
        %819 = vdwg.mxu0
        %v820 = vpack.c.bf16 %v775, %v771
        %v821 = vpack.c.bf16 %v777, %v773
        %v822 = vpack.c.bf16 %v817, %v814
        %v826 = vunpack.c.l.b16 %v820
        %v827 = vunpack.c.l.b16 %v821
        %v828 = vunpack.c.l.b16 %v822
        %v829 = vunpack.c.h.b16 %v820
        %v830 = vunpack.c.h.b16 %v821
        %v831 = vunpack.c.h.b16 %v822
        %v832 = vpack.c.b16 %v827, %v826
        %v833 = vpack.c.b16 %v828, %v828
        %v834 = vpack.c.b16 %v830, %v829
        %v835 = vpack.c.b16 %v831, %v831
        %840 = vst [vmem:[%s351] sm:$0xff] %v832
        %841 = vst [vmem:[%s351 + $0x8] sm:$0xf] %v833
        %842 = vst [vmem:[%s351 + $0xc] sm:$0xff] %v834
        %843 = vst [vmem:[%s351 + $0x14] sm:$0xf] %v835
        %s844 = sand.u32 %s109, 1
        %s845 = sand.u32 %s109, 1
        %s846 = smul.addr %s845, 24
        %s847 = scalar_lea.vmem [#allocation4], %s846
        // Predicated region
        $region63: #{forward.16} parent=53 // pred_check
          %p848 = pneg %p119
        $region64: #{forward.16} parent=53 // pred_check_branch
          %850 = sbr.rel (%p848) target = $region66
        $region65: #{forward.16} parent=53 // pred_region
          %s851 = smul.u32 2, %s18
          %s852 = smul.u32 3, %s19
          %s853 = smul.addr %s851, 6
          %s854 = sadd.s32 %s852, %s853
          %s855 = smul.addr %s854, 4
          %s856 = scalar_lea.vmem %s3, %s855
          // Predicated region
          $region67: #{forward.16} parent=65 // pred_check
            _
          $region68: #{forward.16} parent=65 // pred_check_branch
            %858 = sbr.rel (0) target = $region70
          $region69: #{forward.16} parent=65 // pred_region
            // Predicated region
            $region71: #{forward.16} parent=69 // pred_check
              _
            $region72: #{forward.16} parent=69 // pred_check_branch
              %860 = sbr.rel (0) target = $region74
            $region73: #{forward.16} parent=69 // pred_region
              %s861 = scalar_lea.vmem %s847, 8 [#allocation4]
              %s862 = scalar_lea.vmem %s856, 8
              loop: start=0, step=1, limit=1
              $region75: #{forward.16} parent=73 // loop_pre_header
                _
              $region76: #{forward.16} parent=73 // loop_header
                %s864 = sphi 0, %s868
                %p865 = scmp.ge.s32.totalorder %s864, 1
                %s869 = sphi %s847, %s847
                %s870 = sphi %s856, %s856
              $region77: #{forward.16} parent=73 // loop_header_branch
                %867 = sbr.rel (%p865) target = $region81
              $region78: #{forward.16} parent=73 // loop_body
                %v871 = vld [vmem:[%s869] sm:$0xff]
                %872 = vst [vmem:[%s870] sm:$0xff] %v871
                %v873 = vld [vmem:[%s869 + $0xc] sm:$0xff]
                %874 = vst [vmem:[%s870 + $0x18] sm:$0xff] %v873
              $region79: #{forward.16} parent=73 // loop_footer
                %s868 = sadd.s32 1, %s864
              $region80: #{forward.16} parent=73 // loop_footer_branch
                %863 = sbr.rel target = $region76
              $region81: #{forward.16} parent=73 // loop_exit
                _
              loop: start=0, step=1, limit=1
              $region82: #{forward.16} parent=73 // loop_pre_header
                _
              $region83: #{forward.16} parent=73 // loop_header
                %s877 = sphi 0, %s881
                %p878 = scmp.ge.s32.totalorder %s877, 1
                %s882 = sphi %s861, %s861
                %s883 = sphi %s862, %s862
              $region84: #{forward.16} parent=73 // loop_header_branch
                %880 = sbr.rel (%p878) target = $region88
              $region85: #{forward.16} parent=73 // loop_body
                %v884 = vld [vmem:[%s882] sm:$0xf]
                %885 = vst [vmem:[%s883] sm:$0xf] %v884
                %v886 = vld [vmem:[%s882 + $0xc] sm:$0xf]
                %887 = vst [vmem:[%s883 + $0x18] sm:$0xf] %v886
              $region86: #{forward.16} parent=73 // loop_footer
                %s881 = sadd.s32 1, %s877
              $region87: #{forward.16} parent=73 // loop_footer_branch
                %876 = sbr.rel target = $region83
              $region88: #{forward.16} parent=73 // loop_exit
                _
            $region74: #{forward.16} parent=69 // pred_fallthru
              _
          $region70: #{forward.16} parent=65 // pred_fallthru
            _
          %888 = vnop
        $region66: #{forward.16} parent=53 // pred_fallthru
          _
      $region54: #{forward.16} parent=5 // pred_fallthru
        _
      %p889 = scmp.le.s32.totalorder 2, %s9
      // Predicated region
      $region89: #{forward.16} parent=5 // pred_check
        %p890 = pneg %p889
      $region90: #{forward.16} parent=5 // pred_check_branch
        %892 = sbr.rel (%p890) target = $region92
      $region91: #{forward.16} parent=5 // pred_region
        %s893 = ssub.s32 %s9, 2
        // Predicated region
        $region93: #{forward.16} parent=91 // pred_check
          %p894 = pneg %p125
        $region94: #{forward.16} parent=91 // pred_check_branch
          %896 = sbr.rel (%p894) target = $region96
        $region95: #{forward.16} parent=91 // pred_region
          %s897 = sand.u32 %s110, 1
          %s898 = sand.u32 %s110, 1
          %s899 = smul.addr %s898, 24
          %s900 = scalar_lea.vmem [#allocation4], %s899
        $region96: #{forward.16} parent=91 // pred_fallthru
          _
      $region92: #{forward.16} parent=5 // pred_fallthru
        _
    $region6: #{forward.16} parent=1 // loop_footer
      %s13 = sadd.s32 1, %s9
    $region7: #{forward.16} parent=1 // loop_footer_branch
      %8 = sbr.rel target = $region3
    $region8: #{forward.16} parent=1 // loop_exit
      _

// kernel: forward.19
$region0: #{forward.19}
  #allocation0 [shape = 'u32[]', space=smem, size = 0x4, offset = 0x4, fixed_abs, tag = 'smem constant byte address 0x4 - core index']
  #allocation1 [shape = 'u32[144,128]{1,0:T(1,128)}', space=vmem, size = 0x12000, scoped, tag = 'internal scratch']
  %s0 = inlined_call_operand.vmem [shape: bf16[16,256], index: 0, kind: input, shape index: {}]
  %s1 = inlined_call_operand.vmem [shape: bf16[256,256], index: 1, kind: input, shape index: {}]
  %s2 = inlined_call_operand.vmem [shape: bf16[16,256], index: 2, kind: input, shape index: {}]
  %s3 = inlined_call_operand.vmem [shape: bf16[16,256], index: 3, kind: output, shape index: {}]
  %s4 = sld [smem:[#allocation0]]
  $region22: #{forward.19} parent=0
    _
  %s6 = ssub.s32 1, %s4
  %s7 = scalar_select 0, %s6, %s4
  // Predicated region
  $region2: #{forward.19} parent=0 // pred_check
    _
  $region3: #{forward.19} parent=0 // pred_check_branch
    %9 = sbr.rel (0) target = $region5
  $region4: #{forward.19} parent=0 // pred_region
    _
  $region5: #{forward.19} parent=0 // pred_fallthru
    _
  // Predicated region
  $region6: #{forward.19} parent=0 // pred_check
    _
  $region7: #{forward.19} parent=0 // pred_check_branch
    %11 = sbr.rel (0) target = $region9
  $region8: #{forward.19} parent=0 // pred_region
    _
  $region9: #{forward.19} parent=0 // pred_fallthru
    _
  // Predicated region
  $region10: #{forward.19} parent=0 // pred_check
    _
  $region11: #{forward.19} parent=0 // pred_check_branch
    %13 = sbr.rel (0) target = $region13
  $region12: #{forward.19} parent=0 // pred_region
    _
  $region13: #{forward.19} parent=0 // pred_fallthru
    _
  %v14 = vld [vmem:[%s0] sm:$0xff]
  %v15 = vld [vmem:[%s0 + $0x8] sm:$0xff]
  %v16 = vld [vmem:[%s1] sm:$0xff]
  %v17 = vld [vmem:[%s1 + $0x8] sm:$0xff]
  %v18 = vld [vmem:[%s1 + $0x10] sm:$0xff]
  %v19 = vld [vmem:[%s1 + $0x18] sm:$0xff]
  %v20 = vld [vmem:[%s1 + $0x20] sm:$0xff]
  %v21 = vld [vmem:[%s1 + $0x28] sm:$0xff]
  %v22 = vld [vmem:[%s1 + $0x30] sm:$0xff]
  %v23 = vld [vmem:[%s1 + $0x38] sm:$0xff]
  %v24 = vld [vmem:[%s1 + $0x40] sm:$0xff]
  %v25 = vld [vmem:[%s1 + $0x48] sm:$0xff]
  %v26 = vld [vmem:[%s1 + $0x50] sm:$0xff]
  %v27 = vld [vmem:[%s1 + $0x58] sm:$0xff]
  %v28 = vld [vmem:[%s1 + $0x60] sm:$0xff]
  %v29 = vld [vmem:[%s1 + $0x68] sm:$0xff]
  %v30 = vld [vmem:[%s1 + $0x70] sm:$0xff]
  %v31 = vld [vmem:[%s1 + $0x78] sm:$0xff]
  %v32 = vld [vmem:[%s1 + $0x80] sm:$0xff]
  %v33 = vld [vmem:[%s1 + $0x88] sm:$0xff]
  %v34 = vld [vmem:[%s1 + $0x90] sm:$0xff]
  %v35 = vld [vmem:[%s1 + $0x98] sm:$0xff]
  %v36 = vld [vmem:[%s1 + $0xa0] sm:$0xff]
  %v37 = vld [vmem:[%s1 + $0xa8] sm:$0xff]
  %v38 = vld [vmem:[%s1 + $0xb0] sm:$0xff]
  %v39 = vld [vmem:[%s1 + $0xb8] sm:$0xff]
  %v40 = vld [vmem:[%s1 + $0xc0] sm:$0xff]
  %v41 = vld [vmem:[%s1 + $0xc8] sm:$0xff]
  %v42 = vld [vmem:[%s1 + $0xd0] sm:$0xff]
  %v43 = vld [vmem:[%s1 + $0xd8] sm:$0xff]
  %v44 = vld [vmem:[%s1 + $0xe0] sm:$0xff]
  %v45 = vld [vmem:[%s1 + $0xe8] sm:$0xff]
  %v46 = vld [vmem:[%s1 + $0xf0] sm:$0xff]
  %v47 = vld [vmem:[%s1 + $0xf8] sm:$0xff]
  %v50 = vunpack.c.l.b16 %v14
  %v51 = vunpack.c.h.b16 %v14
  %v52 = vunpack.c.l.b16 %v15
  %v53 = vunpack.c.h.b16 %v15
  %v54 = vpack.c.b16 %v52, %v50
  %v55 = vpack.c.b16 %v53, %v51
  %v90 = vunpack.c.l.b16 %v16
  %v91 = vunpack.c.h.b16 %v16
  %v92 = vunpack.c.l.b16 %v17
  %v93 = vunpack.c.h.b16 %v17
  %v94 = vunpack.c.l.b16 %v18
  %v95 = vunpack.c.h.b16 %v18
  %v96 = vunpack.c.l.b16 %v19
  %v97 = vunpack.c.h.b16 %v19
  %v98 = vunpack.c.l.b16 %v20
  %v99 = vunpack.c.h.b16 %v20
  %v100 = vunpack.c.l.b16 %v21
  %v101 = vunpack.c.h.b16 %v21
  %v102 = vunpack.c.l.b16 %v22
  %v103 = vunpack.c.h.b16 %v22
  %v104 = vunpack.c.l.b16 %v23
  %v105 = vunpack.c.h.b16 %v23
  %v106 = vunpack.c.l.b16 %v24
  %v107 = vunpack.c.h.b16 %v24
  %v108 = vunpack.c.l.b16 %v25
  %v109 = vunpack.c.h.b16 %v25
  %v110 = vunpack.c.l.b16 %v26
  %v111 = vunpack.c.h.b16 %v26
  %v112 = vunpack.c.l.b16 %v27
  %v113 = vunpack.c.h.b16 %v27
  %v114 = vunpack.c.l.b16 %v28
  %v115 = vunpack.c.h.b16 %v28
  %v116 = vunpack.c.l.b16 %v29
  %v117 = vunpack.c.h.b16 %v29
  %v118 = vunpack.c.l.b16 %v30
  %v119 = vunpack.c.h.b16 %v30
  %v120 = vunpack.c.l.b16 %v31
  %v121 = vunpack.c.h.b16 %v31
  %v122 = vunpack.c.l.b16 %v32
  %v123 = vunpack.c.h.b16 %v32
  %v124 = vunpack.c.l.b16 %v33
  %v125 = vunpack.c.h.b16 %v33
  %v126 = vunpack.c.l.b16 %v34
  %v127 = vunpack.c.h.b16 %v34
  %v128 = vunpack.c.l.b16 %v35
  %v129 = vunpack.c.h.b16 %v35
  %v130 = vunpack.c.l.b16 %v36
  %v131 = vunpack.c.h.b16 %v36
  %v132 = vunpack.c.l.b16 %v37
  %v133 = vunpack.c.h.b16 %v37
  %v134 = vunpack.c.l.b16 %v38
  %v135 = vunpack.c.h.b16 %v38
  %v136 = vunpack.c.l.b16 %v39
  %v137 = vunpack.c.h.b16 %v39
  %v138 = vunpack.c.l.b16 %v40
  %v139 = vunpack.c.h.b16 %v40
  %v140 = vunpack.c.l.b16 %v41
  %v141 = vunpack.c.h.b16 %v41
  %v142 = vunpack.c.l.b16 %v42
  %v143 = vunpack.c.h.b16 %v42
  %v144 = vunpack.c.l.b16 %v43
  %v145 = vunpack.c.h.b16 %v43
  %v146 = vunpack.c.l.b16 %v44
  %v147 = vunpack.c.h.b16 %v44
  %v148 = vunpack.c.l.b16 %v45
  %v149 = vunpack.c.h.b16 %v45
  %v150 = vunpack.c.l.b16 %v46
  %v151 = vunpack.c.h.b16 %v46
  %v152 = vunpack.c.l.b16 %v47
  %v153 = vunpack.c.h.b16 %v47
  %v154 = vpack.c.b16 %v92, %v90
  %v155 = vpack.c.b16 %v93, %v91
  %v156 = vpack.c.b16 %v96, %v94
  %v157 = vpack.c.b16 %v97, %v95
  %v158 = vpack.c.b16 %v100, %v98
  %v159 = vpack.c.b16 %v101, %v99
  %v160 = vpack.c.b16 %v104, %v102
  %v161 = vpack.c.b16 %v105, %v103
  %v162 = vpack.c.b16 %v108, %v106
  %v163 = vpack.c.b16 %v109, %v107
  %v164 = vpack.c.b16 %v112, %v110
  %v165 = vpack.c.b16 %v113, %v111
  %v166 = vpack.c.b16 %v116, %v114
  %v167 = vpack.c.b16 %v117, %v115
  %v168 = vpack.c.b16 %v120, %v118
  %v169 = vpack.c.b16 %v121, %v119
  %v170 = vpack.c.b16 %v124, %v122
  %v171 = vpack.c.b16 %v125, %v123
  %v172 = vpack.c.b16 %v128, %v126
  %v173 = vpack.c.b16 %v129, %v127
  %v174 = vpack.c.b16 %v132, %v130
  %v175 = vpack.c.b16 %v133, %v131
  %v176 = vpack.c.b16 %v136, %v134
  %v177 = vpack.c.b16 %v137, %v135
  %v178 = vpack.c.b16 %v140, %v138
  %v179 = vpack.c.b16 %v141, %v139
  %v180 = vpack.c.b16 %v144, %v142
  %v181 = vpack.c.b16 %v145, %v143
  %v182 = vpack.c.b16 %v148, %v146
  %v183 = vpack.c.b16 %v149, %v147
  %v184 = vpack.c.b16 %v152, %v150
  %v185 = vpack.c.b16 %v153, %v151
  %218 = vmatprep.subr.bf16.mxu0 %v155
  %219 = vmatpush1.bf16.msra.mxu0 %v154
  %220 = vmatprep.subr.bf16.mxu0 %v157
  %221 = vmatpush1.bf16.msra.mxu0 %v156
  %222 = vmatprep.subr.bf16.mxu0 %v159
  %223 = vmatpush1.bf16.msra.mxu0 %v158
  %224 = vmatprep.subr.bf16.mxu0 %v161
  %225 = vmatpush1.bf16.msra.mxu0 %v160
  %226 = vmatprep.subr.bf16.mxu0 %v163
  %227 = vmatpush1.bf16.msra.mxu0 %v162
  %228 = vmatprep.subr.bf16.mxu0 %v165
  %229 = vmatpush1.bf16.msra.mxu0 %v164
  %230 = vmatprep.subr.bf16.mxu0 %v167
  %231 = vmatpush1.bf16.msra.mxu0 %v166
  %232 = vmatprep.subr.bf16.mxu0 %v169
  %233 = vmatpush1.bf16.msra.mxu0 %v168
  %234 = vmatprep.subr.bf16.mxu0 %v171
  %235 = vmatpush1.bf16.msra.mxu0 %v170
  %236 = vmatprep.subr.bf16.mxu0 %v173
  %237 = vmatpush1.bf16.msra.mxu0 %v172
  %238 = vmatprep.subr.bf16.mxu0 %v175
  %239 = vmatpush1.bf16.msra.mxu0 %v174
  %240 = vmatprep.subr.bf16.mxu0 %v177
  %241 = vmatpush1.bf16.msra.mxu0 %v176
  %242 = vmatprep.subr.bf16.mxu0 %v179
  %243 = vmatpush1.bf16.msra.mxu0 %v178
  %244 = vmatprep.subr.bf16.mxu0 %v181
  %245 = vmatpush1.bf16.msra.mxu0 %v180
  %246 = vmatprep.subr.bf16.mxu0 %v183
  %247 = vmatpush1.bf16.msra.mxu0 %v182
  %248 = vmatprep.subr.bf16.mxu0 %v185
  %249 = vmatpush1.bf16.msra.mxu0 %v184
  %250 = vmatprep.mubr.bf16.mxu0 %v55
  %251 = vmatmul.mubr.bf16.gmra.mrb[0].mxu0 %v54
  %v252 = vpop.f32.mrb[0].mxu0
  %v253 = vadd.f32 0.0, %v252
  %v254 = vpop.f32.mrb[0].mxu0
  %v255 = vadd.f32 0.0, %v254
  %v256 = vpop.f32.mrb[0].mxu0
  %v257 = vadd.f32 0.0, %v256
  %v258 = vpop.f32.mrb[0].mxu0
  %v259 = vadd.f32 0.0, %v258
  %260 = vdwg.mxu0
  %v261 = vld [vmem:[%s2] sm:$0xff]
  %v262 = vld [vmem:[%s2 + $0x8] sm:$0xff]
  %v263 = vunpack.c.l.bf16 %v261
  %v264 = vunpack.c.h.bf16 %v261
  %v265 = vunpack.c.l.bf16 %v262
  %v266 = vunpack.c.h.bf16 %v262
  %v267 = vadd.f32 %v263, %v253
  %v268 = vadd.f32 %v264, %v255
  %v269 = vadd.f32 %v265, %v257
  %v270 = vadd.f32 %v266, %v259
  %v271 = vpack.c.bf16 %v269, %v267
  %v272 = vpack.c.bf16 %v270, %v268
  %v275 = vunpack.c.l.b16 %v271
  %v276 = vunpack.c.l.b16 %v272
  %v277 = vunpack.c.h.b16 %v271
  %v278 = vunpack.c.h.b16 %v272
  %v279 = vpack.c.b16 %v276, %v275
  %v280 = vpack.c.b16 %v278, %v277
  %283 = vst [vmem:[%s3] sm:$0xff] %v279
  %284 = vst [vmem:[%s3 + $0x8] sm:$0xff] %v280
  // Predicated region
  $region14: #{forward.19} parent=0 // pred_check
    _
  $region15: #{forward.19} parent=0 // pred_check_branch
    %286 = sbr.rel (0) target = $region17
  $region16: #{forward.19} parent=0 // pred_region
    _
  $region17: #{forward.19} parent=0 // pred_fallthru
    _
  // Predicated region
  $region18: #{forward.19} parent=0 // pred_check
    _
  $region19: #{forward.19} parent=0 // pred_check_branch
    %288 = sbr.rel (0) target = $region21
  $region20: #{forward.19} parent=0 // pred_region
    _
  $region21: #{forward.19} parent=0 // pred_fallthru
    _

// kernel: forward.15
$region0: #{forward.15}
  #allocation0 [shape = 'u32[]', space=smem, size = 0x4, offset = 0x4, fixed_abs, tag = 'smem constant byte address 0x4 - core index']
  #allocation1 [shape = 'u32[144,128]{1,0:T(1,128)}', space=vmem, size = 0x12000, scoped, tag = 'internal scratch']
  #allocation2 [shape = 'f32[16,256]{1,0:T(8,128)}', space=vmem, size = 0x4000, scoped, tag = 'scratch operand']
  #allocation3 [shape = 'bf16[16,256]{1,0:T(16,128)(2,1)}', space=vmem, size = 0x2000, scoped, tag = 'scratch operand']
  %s0 = inlined_call_operand.vmem [shape: bf16[16,256], index: 0, kind: input, shape index: {}]
  %s1 = inlined_call_operand.vmem [shape: f32[1,256], index: 1, kind: input, shape index: {}]
  %s2 = inlined_call_operand.vmem [shape: bf16[256,512], index: 2, kind: input, shape index: {}]
  %s3 = inlined_call_operand.vmem [shape: bf16[256,512], index: 3, kind: input, shape index: {}]
  %s4 = inlined_call_operand.vmem [shape: bf16[512,256], index: 4, kind: input, shape index: {}]
  %s5 = inlined_call_operand.vmem [shape: bf16[16,256], index: 5, kind: output, shape index: {}]
  %s6 = sld [smem:[#allocation0]]
  $region137: #{forward.15} parent=0
    _
  %s8 = ssub.s32 1, %s6
  %s9 = scalar_select 0, %s8, %s6
  $region1: #{forward.15} parent=0
    #allocation4 [shape = 'u8[262144]{0}', space=vmem, size = 0x40000, scoped, tag = 'input window, operand 2']
    #allocation5 [shape = 'u8[262144]{0}', space=vmem, size = 0x40000, scoped, tag = 'input window, operand 3']
    loop: start=0, step=1, limit=4
    $region2: #{forward.15} parent=1 // loop_pre_header
      _
    $region3: #{forward.15} parent=1 // loop_header
      %s11 = sphi 0, %s15
      %p12 = scmp.ge.s32.totalorder %s11, 4
      %s18 = sphi 0, %s30
      %s19 = sphi 0, %s26
      %s20 = sphi 0, %s18
      %s21 = sphi 0, %s19
      %s22 = sphi 0, %s20
      %s23 = sphi 0, %s21
      %s33 = sphi 0, %s35
      %s36 = sphi 0, %s33
      %s37 = sphi 0, %s36
      %s53 = sphi 0, %s37
      %s57 = sphi 0, %s57
      %s59 = sphi 0, %s57
      %s60 = sphi 0, %s59
      %s74 = sphi 0, %s60
      %s80 = sphi 0, %s82
      %s83 = sphi 0, %s80
      %s84 = sphi 0, %s83
      %s100 = sphi 0, %s84
      %s106 = sphi 0, %s108
      %s109 = sphi 0, %s106
      %s110 = sphi 0, %s109
      %s126 = sphi 0, %s110
      %s132 = sphi 0, %s134
      %s135 = sphi 0, %s132
      %s136 = sphi 0, %s135
      %s152 = sphi 0, %s136
      %s158 = sphi 0, %s160
      %s161 = sphi 0, %s158
      %s162 = sphi 0, %s161
      %s178 = sphi 0, %s162
    $region4: #{forward.15} parent=1 // loop_header_branch
      %14 = sbr.rel (%p12) target = $region8
    $region5: #{forward.15} parent=1 // loop_body
      %s16 = ssub.s32 %s11, 1
      %s17 = ssub.s32 %s11, 2
      %s24 = sadd.s32 1, %s19
      %p25 = scmp.ge.s32.totalorder %s24, 2
      %s26 = scalar_select %p25, 0, %s24
      %s27 = sadd.s32 1, %s18
      %s28 = scalar_select %p25, %s27, %s18
      %p29 = scmp.ge.s32.totalorder %s28, 1
      %s30 = scalar_select %p29, 0, %s28
      %s31 = ssub.s32 %s18, %s30
      %p32 = scmp.eq.s32.totalorder %s31, 0
      %s34 = sadd.s32 %s33, 1
      %s35 = scalar_select %p32, %s33, %s34
      %p38 = pneg %p32
      %p39 = scmp.eq.s32.totalorder %s11, 1
      %p40 = por %p38, %p39
      %p41 = scmp.ne.s32.totalorder %s33, %s36
      %p42 = scmp.eq.s32.totalorder %s11, 0
      %p43 = por %p41, %p42
      %p44 = scmp.ne.s32.totalorder %s33, %s36
      %p45 = scmp.eq.s32.totalorder %s16, 1
      %p46 = por %p44, %p45
      %p47 = scmp.ne.s32.totalorder %s36, %s37
      %p48 = scmp.eq.s32.totalorder %s16, 0
      %p49 = por %p47, %p48
      %p50 = scmp.ne.s32.totalorder %s36, %s37
      %p51 = scmp.eq.s32.totalorder %s17, 1
      %p52 = por %p50, %p51
      %p54 = scmp.ne.s32.totalorder %s37, %s53
      %p55 = scmp.eq.s32.totalorder %s17, 0
      %p56 = por %p54, %p55
      %s58 = sadd.s32 %s57, 1
      %p61 = scmp.eq.s32.totalorder %s11, 1
      %p62 = scmp.ne.s32.totalorder %s57, %s59
      %p63 = scmp.eq.s32.totalorder %s11, 0
      %p64 = por %p62, %p63
      %p65 = scmp.ne.s32.totalorder %s57, %s59
      %p66 = scmp.eq.s32.totalorder %s16, 1
      %p67 = por %p65, %p66
      %p68 = scmp.ne.s32.totalorder %s59, %s60
      %p69 = scmp.eq.s32.totalorder %s16, 0
      %p70 = por %p68, %p69
      %p71 = scmp.ne.s32.totalorder %s59, %s60
      %p72 = scmp.eq.s32.totalorder %s17, 1
      %p73 = por %p71, %p72
      %p75 = scmp.ne.s32.totalorder %s60, %s74
      %p76 = scmp.eq.s32.totalorder %s17, 0
      %p77 = por %p75, %p76
      %s78 = ssub.s32 %s19, %s26
      %p79 = scmp.eq.s32.totalorder %s78, 0
      %s81 = sadd.s32 %s80, 1
      %s82 = scalar_select %p79, %s80, %s81
      %p85 = pneg %p79
      %p86 = scmp.eq.s32.totalorder %s11, 1
      %p87 = por %p85, %p86
      %p88 = scmp.ne.s32.totalorder %s80, %s83
      %p89 = scmp.eq.s32.totalorder %s11, 0
      %p90 = por %p88, %p89
      %p91 = scmp.ne.s32.totalorder %s80, %s83
      %p92 = scmp.eq.s32.totalorder %s16, 1
      %p93 = por %p91, %p92
      %p94 = scmp.ne.s32.totalorder %s83, %s84
      %p95 = scmp.eq.s32.totalorder %s16, 0
      %p96 = por %p94, %p95
      %p97 = scmp.ne.s32.totalorder %s83, %s84
      %p98 = scmp.eq.s32.totalorder %s17, 1
      %p99 = por %p97, %p98
      %p101 = scmp.ne.s32.totalorder %s84, %s100
      %p102 = scmp.eq.s32.totalorder %s17, 0
      %p103 = por %p101, %p102
      %s104 = ssub.s32 %s19, %s26
      %p105 = scmp.eq.s32.totalorder %s104, 0
      %s107 = sadd.s32 %s106, 1
      %s108 = scalar_select %p105, %s106, %s107
      %p111 = pneg %p105
      %p112 = scmp.eq.s32.totalorder %s11, 1
      %p113 = por %p111, %p112
      %p114 = scmp.ne.s32.totalorder %s106, %s109
      %p115 = scmp.eq.s32.totalorder %s11, 0
      %p116 = por %p114, %p115
      %p117 = scmp.ne.s32.totalorder %s106, %s109
      %p118 = scmp.eq.s32.totalorder %s16, 1
      %p119 = por %p117, %p118
      %p120 = scmp.ne.s32.totalorder %s109, %s110
      %p121 = scmp.eq.s32.totalorder %s16, 0
      %p122 = por %p120, %p121
      %p123 = scmp.ne.s32.totalorder %s109, %s110
      %p124 = scmp.eq.s32.totalorder %s17, 1
      %p125 = por %p123, %p124
      %p127 = scmp.ne.s32.totalorder %s110, %s126
      %p128 = scmp.eq.s32.totalorder %s17, 0
      %p129 = por %p127, %p128
      %s130 = ssub.s32 %s19, %s26
      %p131 = scmp.eq.s32.totalorder %s130, 0
      %s133 = sadd.s32 %s132, 1
      %s134 = scalar_select %p131, %s132, %s133
      %p137 = pneg %p131
      %p138 = scmp.eq.s32.totalorder %s11, 1
      %p139 = por %p137, %p138
      %p140 = scmp.ne.s32.totalorder %s132, %s135
      %p141 = scmp.eq.s32.totalorder %s11, 0
      %p142 = por %p140, %p141
      %p143 = scmp.ne.s32.totalorder %s132, %s135
      %p144 = scmp.eq.s32.totalorder %s16, 1
      %p145 = por %p143, %p144
      %p146 = scmp.ne.s32.totalorder %s135, %s136
      %p147 = scmp.eq.s32.totalorder %s16, 0
      %p148 = por %p146, %p147
      %p149 = scmp.ne.s32.totalorder %s135, %s136
      %p150 = scmp.eq.s32.totalorder %s17, 1
      %p151 = por %p149, %p150
      %p153 = scmp.ne.s32.totalorder %s136, %s152
      %p154 = scmp.eq.s32.totalorder %s17, 0
      %p155 = por %p153, %p154
      %s156 = ssub.s32 %s18, %s30
      %p157 = scmp.eq.s32.totalorder %s156, 0
      %s159 = sadd.s32 %s158, 1
      %s160 = scalar_select %p157, %s158, %s159
      %p163 = pneg %p157
      %p164 = scmp.eq.s32.totalorder %s11, 1
      %p165 = por %p163, %p164
      %p166 = scmp.ne.s32.totalorder %s158, %s161
      %p167 = scmp.eq.s32.totalorder %s11, 0
      %p168 = por %p166, %p167
      %p169 = scmp.ne.s32.totalorder %s158, %s161
      %p170 = scmp.eq.s32.totalorder %s16, 1
      %p171 = por %p169, %p170
      %p172 = scmp.ne.s32.totalorder %s161, %s162
      %p173 = scmp.eq.s32.totalorder %s16, 0
      %p174 = por %p172, %p173
      %p175 = scmp.ne.s32.totalorder %s161, %s162
      %p176 = scmp.eq.s32.totalorder %s17, 1
      %p177 = por %p175, %p176
      %p179 = scmp.ne.s32.totalorder %s162, %s178
      %p180 = scmp.eq.s32.totalorder %s17, 0
      %p181 = por %p179, %p180
      %p182 = scmp.le.s32.totalorder 1, %s11
      %p183 = scmp.lt.s32.totalorder %s11, 3
      %p184 = pnand %p182, %p183
      %p185 = pneg %p184
      // Predicated region
      $region9: #{forward.15} parent=5 // pred_check
        _
      $region10: #{forward.15} parent=5 // pred_check_branch
        %187 = sbr.rel (%p184) target = $region12
      $region11: #{forward.15} parent=5 // pred_region
        %s188 = ssub.s32 %s11, 1
        // Predicated region
        $region13: #{forward.15} parent=11 // pred_check
          %p189 = pneg %p49
        $region14: #{forward.15} parent=11 // pred_check_branch
          %191 = sbr.rel (%p189) target = $region16
        $region15: #{forward.15} parent=11 // pred_region
          %s192 = smul.u32 2, %s20
          %p193 = scmp.lt.s32.totalorder %s192, 1
          %s194 = scalar_select %p193, %s192, 1
          %s195 = smul.addr %s194, 2
          %s196 = smul.addr %s195, 4
          %s197 = scalar_lea.vmem %s0, %s196
          %s198 = smul.u32 2, %s20
        $region16: #{forward.15} parent=11 // pred_fallthru
          _
        // Predicated region
        $region17: #{forward.15} parent=11 // pred_check
          %p199 = pneg %p70
        $region18: #{forward.15} parent=11 // pred_check_branch
          %201 = sbr.rel (%p199) target = $region20
        $region19: #{forward.15} parent=11 // pred_region
          _
        $region20: #{forward.15} parent=11 // pred_fallthru
          _
      $region12: #{forward.15} parent=5 // pred_fallthru
        _
      %p202 = scmp.lt.s32.totalorder %s11, 2
      // Predicated region
      $region21: #{forward.15} parent=5 // pred_check
        %p203 = pneg %p202
      $region22: #{forward.15} parent=5 // pred_check_branch
        %205 = sbr.rel (%p203) target = $region24
      $region23: #{forward.15} parent=5 // pred_region
        // Predicated region
        $region25: #{forward.15} parent=23 // pred_check
          %p206 = pneg %p90
        $region26: #{forward.15} parent=23 // pred_check_branch
          %208 = sbr.rel (%p206) target = $region28
        $region27: #{forward.15} parent=23 // pred_region
          %s209 = sand.u32 %s80, 1
          %s210 = sand.u32 %s80, 1
          %s211 = smul.addr %s210, 256
          %s212 = scalar_lea.vmem [#allocation4], %s211
          %s213 = smul.u32 2, %s19
          %s214 = smul.addr %s213, 4
          %s215 = scalar_lea.vmem %s2, %s214
          // Predicated region
          $region29: #{forward.15} parent=27 // pred_check
            _
          $region30: #{forward.15} parent=27 // pred_check_branch
            %217 = sbr.rel (0) target = $region32
          $region31: #{forward.15} parent=27 // pred_region
            // Predicated region
            $region33: #{forward.15} parent=31 // pred_check
              _
            $region34: #{forward.15} parent=31 // pred_check_branch
              %219 = sbr.rel (0) target = $region36
            $region35: #{forward.15} parent=31 // pred_region
              // Predicated region
              $region48: #{forward.15} parent=35 // pred_check
                _
              $region49: #{forward.15} parent=35 // pred_check_branch
                %296 = sbr.rel (0) target = $region51
              $region50: #{forward.15} parent=35 // pred_region
                loop: start=0, step=1, limit=1
                $region52: #{forward.15} parent=50 // loop_pre_header
                  _
                $region53: #{forward.15} parent=50 // loop_header
                  %s298 = sphi 0, %s302
                  %p299 = scmp.ge.s32.totalorder %s298, 1
                  %s303 = sphi %s215, %s215
                  %s304 = sphi %s212, %s212
                $region54: #{forward.15} parent=50 // loop_header_branch
                  %301 = sbr.rel (%p299) target = $region58
                $region55: #{forward.15} parent=50 // loop_body
                  %v305 = vld [vmem:[%s303] sm:$0xff]
                  %306 = vst [vmem:[%s304] sm:$0xff] %v305
                  %v307 = vld [vmem:[%s303 + $0x10] sm:$0xff]
                  %308 = vst [vmem:[%s304 + $0x8] sm:$0xff] %v307
                  %v309 = vld [vmem:[%s303 + $0x20] sm:$0xff]
                  %310 = vst [vmem:[%s304 + $0x10] sm:$0xff] %v309
                  %v311 = vld [vmem:[%s303 + $0x30] sm:$0xff]
                  %312 = vst [vmem:[%s304 + $0x18] sm:$0xff] %v311
                  %v313 = vld [vmem:[%s303 + $0x40] sm:$0xff]
                  %314 = vst [vmem:[%s304 + $0x20] sm:$0xff] %v313
                  %v315 = vld [vmem:[%s303 + $0x50] sm:$0xff]
                  %316 = vst [vmem:[%s304 + $0x28] sm:$0xff] %v315
                  %v317 = vld [vmem:[%s303 + $0x60] sm:$0xff]
                  %318 = vst [vmem:[%s304 + $0x30] sm:$0xff] %v317
                  %v319 = vld [vmem:[%s303 + $0x70] sm:$0xff]
                  %320 = vst [vmem:[%s304 + $0x38] sm:$0xff] %v319
                  %v321 = vld [vmem:[%s303 + $0x80] sm:$0xff]
                  %322 = vst [vmem:[%s304 + $0x40] sm:$0xff] %v321
                  %v323 = vld [vmem:[%s303 + $0x90] sm:$0xff]
                  %324 = vst [vmem:[%s304 + $0x48] sm:$0xff] %v323
                  %v325 = vld [vmem:[%s303 + $0xa0] sm:$0xff]
                  %326 = vst [vmem:[%s304 + $0x50] sm:$0xff] %v325
                  %v327 = vld [vmem:[%s303 + $0xb0] sm:$0xff]
                  %328 = vst [vmem:[%s304 + $0x58] sm:$0xff] %v327
                  %v329 = vld [vmem:[%s303 + $0xc0] sm:$0xff]
                  %330 = vst [vmem:[%s304 + $0x60] sm:$0xff] %v329
                  %v331 = vld [vmem:[%s303 + $0xd0] sm:$0xff]
                  %332 = vst [vmem:[%s304 + $0x68] sm:$0xff] %v331
                  %v333 = vld [vmem:[%s303 + $0xe0] sm:$0xff]
                  %334 = vst [vmem:[%s304 + $0x70] sm:$0xff] %v333
                  %v335 = vld [vmem:[%s303 + $0xf0] sm:$0xff]
                  %336 = vst [vmem:[%s304 + $0x78] sm:$0xff] %v335
                  %v337 = vld [vmem:[%s303 + $0x100] sm:$0xff]
                  %338 = vst [vmem:[%s304 + $0x80] sm:$0xff] %v337
                  %v339 = vld [vmem:[%s303 + $0x110] sm:$0xff]
                  %340 = vst [vmem:[%s304 + $0x88] sm:$0xff] %v339
                  %v341 = vld [vmem:[%s303 + $0x120] sm:$0xff]
                  %342 = vst [vmem:[%s304 + $0x90] sm:$0xff] %v341
                  %v343 = vld [vmem:[%s303 + $0x130] sm:$0xff]
                  %344 = vst [vmem:[%s304 + $0x98] sm:$0xff] %v343
                  %v345 = vld [vmem:[%s303 + $0x140] sm:$0xff]
                  %346 = vst [vmem:[%s304 + $0xa0] sm:$0xff] %v345
                  %v347 = vld [vmem:[%s303 + $0x150] sm:$0xff]
                  %348 = vst [vmem:[%s304 + $0xa8] sm:$0xff] %v347
                  %v349 = vld [vmem:[%s303 + $0x160] sm:$0xff]
                  %350 = vst [vmem:[%s304 + $0xb0] sm:$0xff] %v349
                  %v351 = vld [vmem:[%s303 + $0x170] sm:$0xff]
                  %352 = vst [vmem:[%s304 + $0xb8] sm:$0xff] %v351
                  %v353 = vld [vmem:[%s303 + $0x180] sm:$0xff]
                  %354 = vst [vmem:[%s304 + $0xc0] sm:$0xff] %v353
                  %v355 = vld [vmem:[%s303 + $0x190] sm:$0xff]
                  %356 = vst [vmem:[%s304 + $0xc8] sm:$0xff] %v355
                  %v357 = vld [vmem:[%s303 + $0x1a0] sm:$0xff]
                  %358 = vst [vmem:[%s304 + $0xd0] sm:$0xff] %v357
                  %v359 = vld [vmem:[%s303 + $0x1b0] sm:$0xff]
                  %360 = vst [vmem:[%s304 + $0xd8] sm:$0xff] %v359
                  %v361 = vld [vmem:[%s303 + $0x1c0] sm:$0xff]
                  %362 = vst [vmem:[%s304 + $0xe0] sm:$0xff] %v361
                  %v363 = vld [vmem:[%s303 + $0x1d0] sm:$0xff]
                  %364 = vst [vmem:[%s304 + $0xe8] sm:$0xff] %v363
                  %v365 = vld [vmem:[%s303 + $0x1e0] sm:$0xff]
                  %366 = vst [vmem:[%s304 + $0xf0] sm:$0xff] %v365
                  %v367 = vld [vmem:[%s303 + $0x1f0] sm:$0xff]
                  %368 = vst [vmem:[%s304 + $0xf8] sm:$0xff] %v367
                $region56: #{forward.15} parent=50 // loop_footer
                  %s302 = sadd.s32 1, %s298
                $region57: #{forward.15} parent=50 // loop_footer_branch
                  %297 = sbr.rel target = $region53
                $region58: #{forward.15} parent=50 // loop_exit
                  _
              $region51: #{forward.15} parent=35 // pred_fallthru
                _
              // Predicated region
              $region59: #{forward.15} parent=35 // pred_check
                _
              $region60: #{forward.15} parent=35 // pred_check_branch
                %370 = sbr.rel target = $region62
              $region61: #{forward.15} parent=35 // pred_region
                _
              $region62: #{forward.15} parent=35 // pred_fallthru
                _
            $region36: #{forward.15} parent=31 // pred_fallthru
              _
            // Predicated region
            $region37: #{forward.15} parent=31 // pred_check
              _
            $region38: #{forward.15} parent=31 // pred_check_branch
              %221 = sbr.rel target = $region40
            $region39: #{forward.15} parent=31 // pred_region
              loop: start=0, step=1, limit=1
              $region41: #{forward.15} parent=39 // loop_pre_header
                _
              $region42: #{forward.15} parent=39 // loop_header
                %s224 = sphi 0, %s228
                %p225 = scmp.ge.s32.totalorder %s224, 1
                %s229 = sphi %s215, %s215
                %s230 = sphi %s212, %s212
              $region43: #{forward.15} parent=39 // loop_header_branch
                %227 = sbr.rel (%p225) target = $region47
              $region44: #{forward.15} parent=39 // loop_body
                %v231 = vld [vmem:[%s229] sm:$0xff]
                %232 = vst [vmem:[%s230] sm:$0xff] %v231
                %v233 = vld [vmem:[%s229 + $0x10] sm:$0xff]
                %234 = vst [vmem:[%s230 + $0x8] sm:$0xff] %v233
                %v235 = vld [vmem:[%s229 + $0x20] sm:$0xff]
                %236 = vst [vmem:[%s230 + $0x10] sm:$0xff] %v235
                %v237 = vld [vmem:[%s229 + $0x30] sm:$0xff]
                %238 = vst [vmem:[%s230 + $0x18] sm:$0xff] %v237
                %v239 = vld [vmem:[%s229 + $0x40] sm:$0xff]
                %240 = vst [vmem:[%s230 + $0x20] sm:$0xff] %v239
                %v241 = vld [vmem:[%s229 + $0x50] sm:$0xff]
                %242 = vst [vmem:[%s230 + $0x28] sm:$0xff] %v241
                %v243 = vld [vmem:[%s229 + $0x60] sm:$0xff]
                %244 = vst [vmem:[%s230 + $0x30] sm:$0xff] %v243
                %v245 = vld [vmem:[%s229 + $0x70] sm:$0xff]
                %246 = vst [vmem:[%s230 + $0x38] sm:$0xff] %v245
                %v247 = vld [vmem:[%s229 + $0x80] sm:$0xff]
                %248 = vst [vmem:[%s230 + $0x40] sm:$0xff] %v247
                %v249 = vld [vmem:[%s229 + $0x90] sm:$0xff]
                %250 = vst [vmem:[%s230 + $0x48] sm:$0xff] %v249
                %v251 = vld [vmem:[%s229 + $0xa0] sm:$0xff]
                %252 = vst [vmem:[%s230 + $0x50] sm:$0xff] %v251
                %v253 = vld [vmem:[%s229 + $0xb0] sm:$0xff]
                %254 = vst [vmem:[%s230 + $0x58] sm:$0xff] %v253
                %v255 = vld [vmem:[%s229 + $0xc0] sm:$0xff]
                %256 = vst [vmem:[%s230 + $0x60] sm:$0xff] %v255
                %v257 = vld [vmem:[%s229 + $0xd0] sm:$0xff]
                %258 = vst [vmem:[%s230 + $0x68] sm:$0xff] %v257
                %v259 = vld [vmem:[%s229 + $0xe0] sm:$0xff]
                %260 = vst [vmem:[%s230 + $0x70] sm:$0xff] %v259
                %v261 = vld [vmem:[%s229 + $0xf0] sm:$0xff]
                %262 = vst [vmem:[%s230 + $0x78] sm:$0xff] %v261
                %v263 = vld [vmem:[%s229 + $0x100] sm:$0xff]
                %264 = vst [vmem:[%s230 + $0x80] sm:$0xff] %v263
                %v265 = vld [vmem:[%s229 + $0x110] sm:$0xff]
                %266 = vst [vmem:[%s230 + $0x88] sm:$0xff] %v265
                %v267 = vld [vmem:[%s229 + $0x120] sm:$0xff]
                %268 = vst [vmem:[%s230 + $0x90] sm:$0xff] %v267
                %v269 = vld [vmem:[%s229 + $0x130] sm:$0xff]
                %270 = vst [vmem:[%s230 + $0x98] sm:$0xff] %v269
                %v271 = vld [vmem:[%s229 + $0x140] sm:$0xff]
                %272 = vst [vmem:[%s230 + $0xa0] sm:$0xff] %v271
                %v273 = vld [vmem:[%s229 + $0x150] sm:$0xff]
                %274 = vst [vmem:[%s230 + $0xa8] sm:$0xff] %v273
                %v275 = vld [vmem:[%s229 + $0x160] sm:$0xff]
                %276 = vst [vmem:[%s230 + $0xb0] sm:$0xff] %v275
                %v277 = vld [vmem:[%s229 + $0x170] sm:$0xff]
                %278 = vst [vmem:[%s230 + $0xb8] sm:$0xff] %v277
                %v279 = vld [vmem:[%s229 + $0x180] sm:$0xff]
                %280 = vst [vmem:[%s230 + $0xc0] sm:$0xff] %v279
                %v281 = vld [vmem:[%s229 + $0x190] sm:$0xff]
                %282 = vst [vmem:[%s230 + $0xc8] sm:$0xff] %v281
                %v283 = vld [vmem:[%s229 + $0x1a0] sm:$0xff]
                %284 = vst [vmem:[%s230 + $0xd0] sm:$0xff] %v283
                %v285 = vld [vmem:[%s229 + $0x1b0] sm:$0xff]
                %286 = vst [vmem:[%s230 + $0xd8] sm:$0xff] %v285
                %v287 = vld [vmem:[%s229 + $0x1c0] sm:$0xff]
                %288 = vst [vmem:[%s230 + $0xe0] sm:$0xff] %v287
                %v289 = vld [vmem:[%s229 + $0x1d0] sm:$0xff]
                %290 = vst [vmem:[%s230 + $0xe8] sm:$0xff] %v289
                %v291 = vld [vmem:[%s229 + $0x1e0] sm:$0xff]
                %292 = vst [vmem:[%s230 + $0xf0] sm:$0xff] %v291
                %v293 = vld [vmem:[%s229 + $0x1f0] sm:$0xff]
                %294 = vst [vmem:[%s230 + $0xf8] sm:$0xff] %v293
              $region45: #{forward.15} parent=39 // loop_footer
                %s228 = sadd.s32 1, %s224
              $region46: #{forward.15} parent=39 // loop_footer_branch
                %223 = sbr.rel target = $region42
              $region47: #{forward.15} parent=39 // loop_exit
                _
            $region40: #{forward.15} parent=31 // pred_fallthru
              _
          $region32: #{forward.15} parent=27 // pred_fallthru
            _
          %371 = vnop
        $region28: #{forward.15} parent=23 // pred_fallthru
          _
        // Predicated region
        $region63: #{forward.15} parent=23 // pred_check
          %p372 = pneg %p116
        $region64: #{forward.15} parent=23 // pred_check_branch
          %374 = sbr.rel (%p372) target = $region66
        $region65: #{forward.15} parent=23 // pred_region
          %s375 = sand.u32 %s106, 1
          %s376 = sand.u32 %s106, 1
          %s377 = smul.addr %s376, 256
          %s378 = scalar_lea.vmem [#allocation5], %s377
          %s379 = smul.u32 2, %s19
          %s380 = smul.addr %s379, 4
          %s381 = scalar_lea.vmem %s3, %s380
          // Predicated region
          $region67: #{forward.15} parent=65 // pred_check
            _
          $region68: #{forward.15} parent=65 // pred_check_branch
            %383 = sbr.rel (0) target = $region70
          $region69: #{forward.15} parent=65 // pred_region
            // Predicated region
            $region71: #{forward.15} parent=69 // pred_check
              _
            $region72: #{forward.15} parent=69 // pred_check_branch
              %385 = sbr.rel (0) target = $region74
            $region73: #{forward.15} parent=69 // pred_region
              // Predicated region
              $region86: #{forward.15} parent=73 // pred_check
                _
              $region87: #{forward.15} parent=73 // pred_check_branch
                %462 = sbr.rel (0) target = $region89
              $region88: #{forward.15} parent=73 // pred_region
                loop: start=0, step=1, limit=1
                $region90: #{forward.15} parent=88 // loop_pre_header
                  _
                $region91: #{forward.15} parent=88 // loop_header
                  %s464 = sphi 0, %s468
                  %p465 = scmp.ge.s32.totalorder %s464, 1
                  %s469 = sphi %s381, %s381
                  %s470 = sphi %s378, %s378
                $region92: #{forward.15} parent=88 // loop_header_branch
                  %467 = sbr.rel (%p465) target = $region96
                $region93: #{forward.15} parent=88 // loop_body
                  %v471 = vld [vmem:[%s469] sm:$0xff]
                  %472 = vst [vmem:[%s470] sm:$0xff] %v471
                  %v473 = vld [vmem:[%s469 + $0x10] sm:$0xff]
                  %474 = vst [vmem:[%s470 + $0x8] sm:$0xff] %v473
                  %v475 = vld [vmem:[%s469 + $0x20] sm:$0xff]
                  %476 = vst [vmem:[%s470 + $0x10] sm:$0xff] %v475
                  %v477 = vld [vmem:[%s469 + $0x30] sm:$0xff]
                  %478 = vst [vmem:[%s470 + $0x18] sm:$0xff] %v477
                  %v479 = vld [vmem:[%s469 + $0x40] sm:$0xff]
                  %480 = vst [vmem:[%s470 + $0x20] sm:$0xff] %v479
                  %v481 = vld [vmem:[%s469 + $0x50] sm:$0xff]
                  %482 = vst [vmem:[%s470 + $0x28] sm:$0xff] %v481
                  %v483 = vld [vmem:[%s469 + $0x60] sm:$0xff]
                  %484 = vst [vmem:[%s470 + $0x30] sm:$0xff] %v483
                  %v485 = vld [vmem:[%s469 + $0x70] sm:$0xff]
                  %486 = vst [vmem:[%s470 + $0x38] sm:$0xff] %v485
                  %v487 = vld [vmem:[%s469 + $0x80] sm:$0xff]
                  %488 = vst [vmem:[%s470 + $0x40] sm:$0xff] %v487
                  %v489 = vld [vmem:[%s469 + $0x90] sm:$0xff]
                  %490 = vst [vmem:[%s470 + $0x48] sm:$0xff] %v489
                  %v491 = vld [vmem:[%s469 + $0xa0] sm:$0xff]
                  %492 = vst [vmem:[%s470 + $0x50] sm:$0xff] %v491
                  %v493 = vld [vmem:[%s469 + $0xb0] sm:$0xff]
                  %494 = vst [vmem:[%s470 + $0x58] sm:$0xff] %v493
                  %v495 = vld [vmem:[%s469 + $0xc0] sm:$0xff]
                  %496 = vst [vmem:[%s470 + $0x60] sm:$0xff] %v495
                  %v497 = vld [vmem:[%s469 + $0xd0] sm:$0xff]
                  %498 = vst [vmem:[%s470 + $0x68] sm:$0xff] %v497
                  %v499 = vld [vmem:[%s469 + $0xe0] sm:$0xff]
                  %500 = vst [vmem:[%s470 + $0x70] sm:$0xff] %v499
                  %v501 = vld [vmem:[%s469 + $0xf0] sm:$0xff]
                  %502 = vst [vmem:[%s470 + $0x78] sm:$0xff] %v501
                  %v503 = vld [vmem:[%s469 + $0x100] sm:$0xff]
                  %504 = vst [vmem:[%s470 + $0x80] sm:$0xff] %v503
                  %v505 = vld [vmem:[%s469 + $0x110] sm:$0xff]
                  %506 = vst [vmem:[%s470 + $0x88] sm:$0xff] %v505
                  %v507 = vld [vmem:[%s469 + $0x120] sm:$0xff]
                  %508 = vst [vmem:[%s470 + $0x90] sm:$0xff] %v507
                  %v509 = vld [vmem:[%s469 + $0x130] sm:$0xff]
                  %510 = vst [vmem:[%s470 + $0x98] sm:$0xff] %v509
                  %v511 = vld [vmem:[%s469 + $0x140] sm:$0xff]
                  %512 = vst [vmem:[%s470 + $0xa0] sm:$0xff] %v511
                  %v513 = vld [vmem:[%s469 + $0x150] sm:$0xff]
                  %514 = vst [vmem:[%s470 + $0xa8] sm:$0xff] %v513
                  %v515 = vld [vmem:[%s469 + $0x160] sm:$0xff]
                  %516 = vst [vmem:[%s470 + $0xb0] sm:$0xff] %v515
                  %v517 = vld [vmem:[%s469 + $0x170] sm:$0xff]
                  %518 = vst [vmem:[%s470 + $0xb8] sm:$0xff] %v517
                  %v519 = vld [vmem:[%s469 + $0x180] sm:$0xff]
                  %520 = vst [vmem:[%s470 + $0xc0] sm:$0xff] %v519
                  %v521 = vld [vmem:[%s469 + $0x190] sm:$0xff]
                  %522 = vst [vmem:[%s470 + $0xc8] sm:$0xff] %v521
                  %v523 = vld [vmem:[%s469 + $0x1a0] sm:$0xff]
                  %524 = vst [vmem:[%s470 + $0xd0] sm:$0xff] %v523
                  %v525 = vld [vmem:[%s469 + $0x1b0] sm:$0xff]
                  %526 = vst [vmem:[%s470 + $0xd8] sm:$0xff] %v525
                  %v527 = vld [vmem:[%s469 + $0x1c0] sm:$0xff]
                  %528 = vst [vmem:[%s470 + $0xe0] sm:$0xff] %v527
                  %v529 = vld [vmem:[%s469 + $0x1d0] sm:$0xff]
                  %530 = vst [vmem:[%s470 + $0xe8] sm:$0xff] %v529
                  %v531 = vld [vmem:[%s469 + $0x1e0] sm:$0xff]
                  %532 = vst [vmem:[%s470 + $0xf0] sm:$0xff] %v531
                  %v533 = vld [vmem:[%s469 + $0x1f0] sm:$0xff]
                  %534 = vst [vmem:[%s470 + $0xf8] sm:$0xff] %v533
                $region94: #{forward.15} parent=88 // loop_footer
                  %s468 = sadd.s32 1, %s464
                $region95: #{forward.15} parent=88 // loop_footer_branch
                  %463 = sbr.rel target = $region91
                $region96: #{forward.15} parent=88 // loop_exit
                  _
              $region89: #{forward.15} parent=73 // pred_fallthru
                _
              // Predicated region
              $region97: #{forward.15} parent=73 // pred_check
                _
              $region98: #{forward.15} parent=73 // pred_check_branch
                %536 = sbr.rel target = $region100
              $region99: #{forward.15} parent=73 // pred_region
                _
              $region100: #{forward.15} parent=73 // pred_fallthru
                _
            $region74: #{forward.15} parent=69 // pred_fallthru
              _
            // Predicated region
            $region75: #{forward.15} parent=69 // pred_check
              _
            $region76: #{forward.15} parent=69 // pred_check_branch
              %387 = sbr.rel target = $region78
            $region77: #{forward.15} parent=69 // pred_region
              loop: start=0, step=1, limit=1
              $region79: #{forward.15} parent=77 // loop_pre_header
                _
              $region80: #{forward.15} parent=77 // loop_header
                %s390 = sphi 0, %s394
                %p391 = scmp.ge.s32.totalorder %s390, 1
                %s395 = sphi %s381, %s381
                %s396 = sphi %s378, %s378
              $region81: #{forward.15} parent=77 // loop_header_branch
                %393 = sbr.rel (%p391) target = $region85
              $region82: #{forward.15} parent=77 // loop_body
                %v397 = vld [vmem:[%s395] sm:$0xff]
                %398 = vst [vmem:[%s396] sm:$0xff] %v397
                %v399 = vld [vmem:[%s395 + $0x10] sm:$0xff]
                %400 = vst [vmem:[%s396 + $0x8] sm:$0xff] %v399
                %v401 = vld [vmem:[%s395 + $0x20] sm:$0xff]
                %402 = vst [vmem:[%s396 + $0x10] sm:$0xff] %v401
                %v403 = vld [vmem:[%s395 + $0x30] sm:$0xff]
                %404 = vst [vmem:[%s396 + $0x18] sm:$0xff] %v403
                %v405 = vld [vmem:[%s395 + $0x40] sm:$0xff]
                %406 = vst [vmem:[%s396 + $0x20] sm:$0xff] %v405
                %v407 = vld [vmem:[%s395 + $0x50] sm:$0xff]
                %408 = vst [vmem:[%s396 + $0x28] sm:$0xff] %v407
                %v409 = vld [vmem:[%s395 + $0x60] sm:$0xff]
                %410 = vst [vmem:[%s396 + $0x30] sm:$0xff] %v409
                %v411 = vld [vmem:[%s395 + $0x70] sm:$0xff]
                %412 = vst [vmem:[%s396 + $0x38] sm:$0xff] %v411
                %v413 = vld [vmem:[%s395 + $0x80] sm:$0xff]
                %414 = vst [vmem:[%s396 + $0x40] sm:$0xff] %v413
                %v415 = vld [vmem:[%s395 + $0x90] sm:$0xff]
                %416 = vst [vmem:[%s396 + $0x48] sm:$0xff] %v415
                %v417 = vld [vmem:[%s395 + $0xa0] sm:$0xff]
                %418 = vst [vmem:[%s396 + $0x50] sm:$0xff] %v417
                %v419 = vld [vmem:[%s395 + $0xb0] sm:$0xff]
                %420 = vst [vmem:[%s396 + $0x58] sm:$0xff] %v419
                %v421 = vld [vmem:[%s395 + $0xc0] sm:$0xff]
                %422 = vst [vmem:[%s396 + $0x60] sm:$0xff] %v421
                %v423 = vld [vmem:[%s395 + $0xd0] sm:$0xff]
                %424 = vst [vmem:[%s396 + $0x68] sm:$0xff] %v423
                %v425 = vld [vmem:[%s395 + $0xe0] sm:$0xff]
                %426 = vst [vmem:[%s396 + $0x70] sm:$0xff] %v425
                %v427 = vld [vmem:[%s395 + $0xf0] sm:$0xff]
                %428 = vst [vmem:[%s396 + $0x78] sm:$0xff] %v427
                %v429 = vld [vmem:[%s395 + $0x100] sm:$0xff]
                %430 = vst [vmem:[%s396 + $0x80] sm:$0xff] %v429
                %v431 = vld [vmem:[%s395 + $0x110] sm:$0xff]
                %432 = vst [vmem:[%s396 + $0x88] sm:$0xff] %v431
                %v433 = vld [vmem:[%s395 + $0x120] sm:$0xff]
                %434 = vst [vmem:[%s396 + $0x90] sm:$0xff] %v433
                %v435 = vld [vmem:[%s395 + $0x130] sm:$0xff]
                %436 = vst [vmem:[%s396 + $0x98] sm:$0xff] %v435
                %v437 = vld [vmem:[%s395 + $0x140] sm:$0xff]
                %438 = vst [vmem:[%s396 + $0xa0] sm:$0xff] %v437
                %v439 = vld [vmem:[%s395 + $0x150] sm:$0xff]
                %440 = vst [vmem:[%s396 + $0xa8] sm:$0xff] %v439
                %v441 = vld [vmem:[%s395 + $0x160] sm:$0xff]
                %442 = vst [vmem:[%s396 + $0xb0] sm:$0xff] %v441
                %v443 = vld [vmem:[%s395 + $0x170] sm:$0xff]
                %444 = vst [vmem:[%s396 + $0xb8] sm:$0xff] %v443
                %v445 = vld [vmem:[%s395 + $0x180] sm:$0xff]
                %446 = vst [vmem:[%s396 + $0xc0] sm:$0xff] %v445
                %v447 = vld [vmem:[%s395 + $0x190] sm:$0xff]
                %448 = vst [vmem:[%s396 + $0xc8] sm:$0xff] %v447
                %v449 = vld [vmem:[%s395 + $0x1a0] sm:$0xff]
                %450 = vst [vmem:[%s396 + $0xd0] sm:$0xff] %v449
                %v451 = vld [vmem:[%s395 + $0x1b0] sm:$0xff]
                %452 = vst [vmem:[%s396 + $0xd8] sm:$0xff] %v451
                %v453 = vld [vmem:[%s395 + $0x1c0] sm:$0xff]
                %454 = vst [vmem:[%s396 + $0xe0] sm:$0xff] %v453
                %v455 = vld [vmem:[%s395 + $0x1d0] sm:$0xff]
                %456 = vst [vmem:[%s396 + $0xe8] sm:$0xff] %v455
                %v457 = vld [vmem:[%s395 + $0x1e0] sm:$0xff]
                %458 = vst [vmem:[%s396 + $0xf0] sm:$0xff] %v457
                %v459 = vld [vmem:[%s395 + $0x1f0] sm:$0xff]
                %460 = vst [vmem:[%s396 + $0xf8] sm:$0xff] %v459
              $region83: #{forward.15} parent=77 // loop_footer
                %s394 = sadd.s32 1, %s390
              $region84: #{forward.15} parent=77 // loop_footer_branch
                %389 = sbr.rel target = $region80
              $region85: #{forward.15} parent=77 // loop_exit
                _
            $region78: #{forward.15} parent=69 // pred_fallthru
              _
          $region70: #{forward.15} parent=65 // pred_fallthru
            _
          %537 = vnop
        $region66: #{forward.15} parent=23 // pred_fallthru
          _
        // Predicated region
        $region101: #{forward.15} parent=23 // pred_check
          %p538 = pneg %p142
        $region102: #{forward.15} parent=23 // pred_check_branch
          %540 = sbr.rel (%p538) target = $region104
        $region103: #{forward.15} parent=23 // pred_region
          %s541 = smul.u32 32, %s19
          %p542 = scmp.lt.s32.totalorder %s541, 63
          %s543 = scalar_select %p542, %s541, 63
          %s544 = smul.addr %s543, 2
          %s545 = smul.addr %s544, 4
          %s546 = scalar_lea.vmem %s4, %s545
          %s547 = smul.u32 32, %s19
        $region104: #{forward.15} parent=23 // pred_fallthru
          _
      $region24: #{forward.15} parent=5 // pred_fallthru
        _
      %p548 = scmp.le.s32.totalorder 1, %s11
      %p549 = scmp.lt.s32.totalorder %s11, 3
      %p550 = pnand %p548, %p549
      %p551 = pneg %p550
      // Predicated region
      $region105: #{forward.15} parent=5 // pred_check
        _
      $region106: #{forward.15} parent=5 // pred_check_branch
        %553 = sbr.rel (%p550) target = $region108
      $region107: #{forward.15} parent=5 // pred_region
        %s554 = ssub.s32 %s11, 1
        %s555 = sand.u32 %s83, 1
        %s556 = sand.u32 %s83, 1
        %s557 = smul.addr %s556, 256
        %s558 = scalar_lea.vmem [#allocation4], %s557
        // Predicated region
        $region109: #{forward.15} parent=107 // pred_check
          %p559 = pneg %p96
        $region110: #{forward.15} parent=107 // pred_check_branch
          %561 = sbr.rel (%p559) target = $region112
        $region111: #{forward.15} parent=107 // pred_region
          _
        $region112: #{forward.15} parent=107 // pred_fallthru
          _
        %s562 = sand.u32 %s109, 1
        %s563 = sand.u32 %s109, 1
        %s564 = smul.addr %s563, 256
        %s565 = scalar_lea.vmem [#allocation5], %s564
        // Predicated region
        $region113: #{forward.15} parent=107 // pred_check
          %p566 = pneg %p122
        $region114: #{forward.15} parent=107 // pred_check_branch
          %568 = sbr.rel (%p566) target = $region116
        $region115: #{forward.15} parent=107 // pred_region
          _
        $region116: #{forward.15} parent=107 // pred_fallthru
          _
        %s569 = smul.u32 2, %s20
        %p570 = scmp.lt.s32.totalorder %s569, 1
        %s571 = scalar_select %p570, %s569, 1
        %s572 = smul.addr %s571, 2
        %s573 = smul.addr %s572, 4
        %s574 = scalar_lea.vmem %s0, %s573
        %p575 = pneg %p49
        %p576 = pneg %p46
        %p577 = pneg %p70
        %p578 = pneg %p67
        %s579 = sand.u32 %s83, 1
        %s580 = sand.u32 %s83, 1
        %s581 = smul.addr %s580, 256
        %s582 = scalar_lea.vmem [#allocation4], %s581
        %p583 = pneg %p96
        %p584 = pneg %p93
        %s585 = sand.u32 %s109, 1
        %s586 = sand.u32 %s109, 1
        %s587 = smul.addr %s586, 256
        %s588 = scalar_lea.vmem [#allocation5], %s587
        %p589 = pneg %p122
        %p590 = pneg %p119
        %s591 = smul.u32 32, %s21
        %p592 = scmp.lt.s32.totalorder %s591, 63
        %s593 = scalar_select %p592, %s591, 63
        %s594 = smul.addr %s593, 2
        %s595 = smul.addr %s594, 4
        %s596 = scalar_lea.vmem %s4, %s595
        %p597 = pneg %p148
        %p598 = pneg %p145
        %p599 = pneg %p174
        %p600 = pneg %p171
        %s601 = smul.u32 2, %s20
        %p602 = scmp.lt.s32.totalorder %s601, 1
        %s603 = scalar_select %p602, %s601, 1
        %s604 = smul.addr %s603, 2
        %s605 = smul.addr %s604, 4
        %s606 = scalar_lea.vmem %s5, %s605
        %s607 = smul.u32 2, %s20
        %p608 = scmp.lt.s32.totalorder %s607, 1
        %s609 = scalar_select %p608, %s607, 1
        %s610 = smul.addr %s609, 2
        %s611 = smul.addr %s610, 4
        %s612 = scalar_lea.vmem %s0, %s611
        %s613 = smul.u32 2, %s20
        %s614 = smul.u32 2, %s21
        %s615 = smul.u32 2, %s21
        %s616 = smul.u32 32, %s21
        %p617 = scmp.lt.s32.totalorder %s616, 63
        %s618 = scalar_select %p617, %s616, 63
        %s619 = smul.addr %s618, 2
        %s620 = smul.addr %s619, 4
        %s621 = scalar_lea.vmem %s4, %s620
        %s622 = smul.u32 32, %s21
        %s623 = smul.u32 2, %s20
        %p624 = scmp.lt.s32.totalorder %s623, 1
        %s625 = scalar_select %p624, %s623, 1
        %s626 = smul.addr %s625, 2
        %s627 = smul.addr %s626, 4
        %s628 = scalar_lea.vmem %s5, %s627
        %s629 = smul.u32 2, %s20
        %p630 = scmp.eq.s32.totalorder %s21, 0
        // Predicated region
        $region117: #{forward.15} parent=107 // pred_check
          %p631 = pneg %p630
        $region118: #{forward.15} parent=107 // pred_check_branch
          %633 = sbr.rel (%p631) target = $region120
        $region119: #{forward.15} parent=107 // pred_region
          %634 = vst [vmem:[#allocation2] sm:$0xff] 0.0
          %635 = vst [vmem:[#allocation2 + $0x8] sm:$0xff] 0.0
          %636 = vst [vmem:[#allocation2 + $0x10] sm:$0xff] 0.0
          %637 = vst [vmem:[#allocation2 + $0x18] sm:$0xff] 0.0
          %v638 = vld [vmem:[%s612] sm:$0xff]
          %v639 = vld [vmem:[%s612 + $0x8] sm:$0xff]
          %v640 = vunpack.c.l.bf16 %v638
          %v641 = vunpack.c.h.bf16 %v638
          %v642 = vunpack.c.l.bf16 %v639
          %v643 = vunpack.c.h.bf16 %v639
          %v644 = vmul.f32 %v640, %v640
          %v645 = vmul.f32 %v641, %v641
          %v646 = vmul.f32 %v642, %v642
          %v647 = vmul.f32 %v643, %v643
          %v648 = vadd.f32 %v644, %v645
          %649 = vadd.xlane.f32.xlu0 %v648
          %v650 = vpop.xlane.xlu0 %649
          %v651 = vadd.f32 %v646, %v647
          %652 = vadd.xlane.f32.xlu0 %v651
          %v653 = vpop.xlane.xlu0 %652
          %v654 = vrcp.pop 256.0
          %v655 = vmul.f32 %v650, %v654
          %v656 = vmul.f32 %v653, %v654
          %v657 = vadd.f32 %v655, 1e-06
          %v658 = vadd.f32 %v656, 1e-06
          %v659 = vrsqrt.pop %v657
          %v660 = vrsqrt.pop %v658
          %v661 = vmul.f32 %v640, %v659
          %v662 = vmul.f32 %v641, %v659
          %v663 = vmul.f32 %v642, %v660
          %v664 = vmul.f32 %v643, %v660
          %v665 = vld [vmem:[%s1] sm:$0x3]
          %v667 = vlaneseq
          %v668 = vshrl.u32 %v667, 7
          %v669 = vsub.s32 0, %v668
          %v670 = vrot.slane %v665, %v669
          %v671 = vlaneseq
          %v672 = vshrl.u32 %v671, 7
          %v673 = vsub.s32 1, %v672
          %v674 = vrot.slane %v665, %v673
          %v677 = vmul.f32 %v661, %v670
          %v678 = vmul.f32 %v662, %v674
          %v679 = vmul.f32 %v663, %v670
          %v680 = vmul.f32 %v664, %v674
          %v681 = vpack.c.bf16 %v679, %v677
          %v682 = vpack.c.bf16 %v680, %v678
          %683 = vst [vmem:[#allocation3] sm:$0xff] %v681
          %684 = vst [vmem:[#allocation3 + $0x8] sm:$0xff] %v682
        $region120: #{forward.15} parent=107 // pred_fallthru
          _
        %v685 = vld [vmem:[#allocation3] sm:$0xff]
        %v686 = vld [vmem:[#allocation3 + $0x8] sm:$0xff]
        %v687 = vld [vmem:[%s558] sm:$0xff]
        %v688 = vld [vmem:[%s558 + $0x8] sm:$0xff]
        %v689 = vld [vmem:[%s558 + $0x10] sm:$0xff]
        %v690 = vld [vmem:[%s558 + $0x18] sm:$0xff]
        %v691 = vld [vmem:[%s558 + $0x20] sm:$0xff]
        %v692 = vld [vmem:[%s558 + $0x28] sm:$0xff]
        %v693 = vld [vmem:[%s558 + $0x30] sm:$0xff]
        %v694 = vld [vmem:[%s558 + $0x38] sm:$0xff]
        %v695 = vld [vmem:[%s558 + $0x40] sm:$0xff]
        %v696 = vld [vmem:[%s558 + $0x48] sm:$0xff]
        %v697 = vld [vmem:[%s558 + $0x50] sm:$0xff]
        %v698 = vld [vmem:[%s558 + $0x58] sm:$0xff]
        %v699 = vld [vmem:[%s558 + $0x60] sm:$0xff]
        %v700 = vld [vmem:[%s558 + $0x68] sm:$0xff]
        %v701 = vld [vmem:[%s558 + $0x70] sm:$0xff]
        %v702 = vld [vmem:[%s558 + $0x78] sm:$0xff]
        %v703 = vld [vmem:[%s558 + $0x80] sm:$0xff]
        %v704 = vld [vmem:[%s558 + $0x88] sm:$0xff]
        %v705 = vld [vmem:[%s558 + $0x90] sm:$0xff]
        %v706 = vld [vmem:[%s558 + $0x98] sm:$0xff]
        %v707 = vld [vmem:[%s558 + $0xa0] sm:$0xff]
        %v708 = vld [vmem:[%s558 + $0xa8] sm:$0xff]
        %v709 = vld [vmem:[%s558 + $0xb0] sm:$0xff]
        %v710 = vld [vmem:[%s558 + $0xb8] sm:$0xff]
        %v711 = vld [vmem:[%s558 + $0xc0] sm:$0xff]
        %v712 = vld [vmem:[%s558 + $0xc8] sm:$0xff]
        %v713 = vld [vmem:[%s558 + $0xd0] sm:$0xff]
        %v714 = vld [vmem:[%s558 + $0xd8] sm:$0xff]
        %v715 = vld [vmem:[%s558 + $0xe0] sm:$0xff]
        %v716 = vld [vmem:[%s558 + $0xe8] sm:$0xff]
        %v717 = vld [vmem:[%s558 + $0xf0] sm:$0xff]
        %v718 = vld [vmem:[%s558 + $0xf8] sm:$0xff]
        %v751 = vunpack.c.l.b16 %v687
        %v752 = vunpack.c.h.b16 %v687
        %v753 = vunpack.c.l.b16 %v688
        %v754 = vunpack.c.h.b16 %v688
        %v755 = vunpack.c.l.b16 %v689
        %v756 = vunpack.c.h.b16 %v689
        %v757 = vunpack.c.l.b16 %v690
        %v758 = vunpack.c.h.b16 %v690
        %v759 = vunpack.c.l.b16 %v691
        %v760 = vunpack.c.h.b16 %v691
        %v761 = vunpack.c.l.b16 %v692
        %v762 = vunpack.c.h.b16 %v692
        %v763 = vunpack.c.l.b16 %v693
        %v764 = vunpack.c.h.b16 %v693
        %v765 = vunpack.c.l.b16 %v694
        %v766 = vunpack.c.h.b16 %v694
        %v767 = vunpack.c.l.b16 %v695
        %v768 = vunpack.c.h.b16 %v695
        %v769 = vunpack.c.l.b16 %v696
        %v770 = vunpack.c.h.b16 %v696
        %v771 = vunpack.c.l.b16 %v697
        %v772 = vunpack.c.h.b16 %v697
        %v773 = vunpack.c.l.b16 %v698
        %v774 = vunpack.c.h.b16 %v698
        %v775 = vunpack.c.l.b16 %v699
        %v776 = vunpack.c.h.b16 %v699
        %v777 = vunpack.c.l.b16 %v700
        %v778 = vunpack.c.h.b16 %v700
        %v779 = vunpack.c.l.b16 %v701
        %v780 = vunpack.c.h.b16 %v701
        %v781 = vunpack.c.l.b16 %v702
        %v782 = vunpack.c.h.b16 %v702
        %v783 = vunpack.c.l.b16 %v703
        %v784 = vunpack.c.h.b16 %v703
        %v785 = vunpack.c.l.b16 %v704
        %v786 = vunpack.c.h.b16 %v704
        %v787 = vunpack.c.l.b16 %v705
        %v788 = vunpack.c.h.b16 %v705
        %v789 = vunpack.c.l.b16 %v706
        %v790 = vunpack.c.h.b16 %v706
        %v791 = vunpack.c.l.b16 %v707
        %v792 = vunpack.c.h.b16 %v707
        %v793 = vunpack.c.l.b16 %v708
        %v794 = vunpack.c.h.b16 %v708
        %v795 = vunpack.c.l.b16 %v709
        %v796 = vunpack.c.h.b16 %v709
        %v797 = vunpack.c.l.b16 %v710
        %v798 = vunpack.c.h.b16 %v710
        %v799 = vunpack.c.l.b16 %v711
        %v800 = vunpack.c.h.b16 %v711
        %v801 = vunpack.c.l.b16 %v712
        %v802 = vunpack.c.h.b16 %v712
        %v803 = vunpack.c.l.b16 %v713
        %v804 = vunpack.c.h.b16 %v713
        %v805 = vunpack.c.l.b16 %v714
        %v806 = vunpack.c.h.b16 %v714
        %v807 = vunpack.c.l.b16 %v715
        %v808 = vunpack.c.h.b16 %v715
        %v809 = vunpack.c.l.b16 %v716
        %v810 = vunpack.c.h.b16 %v716
        %v811 = vunpack.c.l.b16 %v717
        %v812 = vunpack.c.h.b16 %v717
        %v813 = vunpack.c.l.b16 %v718
        %v814 = vunpack.c.h.b16 %v718
        %v815 = vpack.c.b16 %v753, %v751
        %v816 = vpack.c.b16 %v754, %v752
        %v817 = vpack.c.b16 %v757, %v755
        %v818 = vpack.c.b16 %v758, %v756
        %v819 = vpack.c.b16 %v761, %v759
        %v820 = vpack.c.b16 %v762, %v760
        %v821 = vpack.c.b16 %v765, %v763
        %v822 = vpack.c.b16 %v766, %v764
        %v823 = vpack.c.b16 %v769, %v767
        %v824 = vpack.c.b16 %v770, %v768
        %v825 = vpack.c.b16 %v773, %v771
        %v826 = vpack.c.b16 %v774, %v772
        %v827 = vpack.c.b16 %v777, %v775
        %v828 = vpack.c.b16 %v778, %v776
        %v829 = vpack.c.b16 %v781, %v779
        %v830 = vpack.c.b16 %v782, %v780
        %v831 = vpack.c.b16 %v785, %v783
        %v832 = vpack.c.b16 %v786, %v784
        %v833 = vpack.c.b16 %v789, %v787
        %v834 = vpack.c.b16 %v790, %v788
        %v835 = vpack.c.b16 %v793, %v791
        %v836 = vpack.c.b16 %v794, %v792
        %v837 = vpack.c.b16 %v797, %v795
        %v838 = vpack.c.b16 %v798, %v796
        %v839 = vpack.c.b16 %v801, %v799
        %v840 = vpack.c.b16 %v802, %v800
        %v841 = vpack.c.b16 %v805, %v803
        %v842 = vpack.c.b16 %v806, %v804
        %v843 = vpack.c.b16 %v809, %v807
        %v844 = vpack.c.b16 %v810, %v808
        %v845 = vpack.c.b16 %v813, %v811
        %v846 = vpack.c.b16 %v814, %v812
        %879 = vmatprep.subr.bf16.mxu0 %v816
        %880 = vmatpush1.bf16.msra.mxu0 %v815
        %881 = vmatprep.subr.bf16.mxu0 %v818
        %882 = vmatpush1.bf16.msra.mxu0 %v817
        %883 = vmatprep.subr.bf16.mxu0 %v820
        %884 = vmatpush1.bf16.msra.mxu0 %v819
        %885 = vmatprep.subr.bf16.mxu0 %v822
        %886 = vmatpush1.bf16.msra.mxu0 %v821
        %887 = vmatprep.subr.bf16.mxu0 %v824
        %888 = vmatpush1.bf16.msra.mxu0 %v823
        %889 = vmatprep.subr.bf16.mxu0 %v826
        %890 = vmatpush1.bf16.msra.mxu0 %v825
        %891 = vmatprep.subr.bf16.mxu0 %v828
        %892 = vmatpush1.bf16.msra.mxu0 %v827
        %893 = vmatprep.subr.bf16.mxu0 %v830
        %894 = vmatpush1.bf16.msra.mxu0 %v829
        %895 = vmatprep.subr.bf16.mxu0 %v832
        %896 = vmatpush1.bf16.msra.mxu0 %v831
        %897 = vmatprep.subr.bf16.mxu0 %v834
        %898 = vmatpush1.bf16.msra.mxu0 %v833
        %899 = vmatprep.subr.bf16.mxu0 %v836
        %900 = vmatpush1.bf16.msra.mxu0 %v835
        %901 = vmatprep.subr.bf16.mxu0 %v838
        %902 = vmatpush1.bf16.msra.mxu0 %v837
        %903 = vmatprep.subr.bf16.mxu0 %v840
        %904 = vmatpush1.bf16.msra.mxu0 %v839
        %905 = vmatprep.subr.bf16.mxu0 %v842
        %906 = vmatpush1.bf16.msra.mxu0 %v841
        %907 = vmatprep.subr.bf16.mxu0 %v844
        %908 = vmatpush1.bf16.msra.mxu0 %v843
        %909 = vmatprep.subr.bf16.mxu0 %v846
        %910 = vmatpush1.bf16.msra.mxu0 %v845
        %911 = vmatprep.mubr.bf16.mxu0 %v686
        %912 = vmatmul.mubr.bf16.gmra.mrb[0].mxu0 %v685
        %v913 = vpop.f32.mrb[0].mxu0
        %v914 = vadd.f32 0.0, %v913
        %v915 = vpop.f32.mrb[0].mxu0
        %v916 = vadd.f32 0.0, %v915
        %v917 = vpop.f32.mrb[0].mxu0
        %v918 = vadd.f32 0.0, %v917
        %v919 = vpop.f32.mrb[0].mxu0
        %v920 = vadd.f32 0.0, %v919
        %921 = vdwg.mxu0
        %v922 = vld [vmem:[%s565] sm:$0xff]
        %v923 = vld [vmem:[%s565 + $0x8] sm:$0xff]
        %v924 = vld [vmem:[%s565 + $0x10] sm:$0xff]
        %v925 = vld [vmem:[%s565 + $0x18] sm:$0xff]
        %v926 = vld [vmem:[%s565 + $0x20] sm:$0xff]
        %v927 = vld [vmem:[%s565 + $0x28] sm:$0xff]
        %v928 = vld [vmem:[%s565 + $0x30] sm:$0xff]
        %v929 = vld [vmem:[%s565 + $0x38] sm:$0xff]
        %v930 = vld [vmem:[%s565 + $0x40] sm:$0xff]
        %v931 = vld [vmem:[%s565 + $0x48] sm:$0xff]
        %v932 = vld [vmem:[%s565 + $0x50] sm:$0xff]
        %v933 = vld [vmem:[%s565 + $0x58] sm:$0xff]
        %v934 = vld [vmem:[%s565 + $0x60] sm:$0xff]
        %v935 = vld [vmem:[%s565 + $0x68] sm:$0xff]
        %v936 = vld [vmem:[%s565 + $0x70] sm:$0xff]
        %v937 = vld [vmem:[%s565 + $0x78] sm:$0xff]
        %v938 = vld [vmem:[%s565 + $0x80] sm:$0xff]
        %v939 = vld [vmem:[%s565 + $0x88] sm:$0xff]
        %v940 = vld [vmem:[%s565 + $0x90] sm:$0xff]
        %v941 = vld [vmem:[%s565 + $0x98] sm:$0xff]
        %v942 = vld [vmem:[%s565 + $0xa0] sm:$0xff]
        %v943 = vld [vmem:[%s565 + $0xa8] sm:$0xff]
        %v944 = vld [vmem:[%s565 + $0xb0] sm:$0xff]
        %v945 = vld [vmem:[%s565 + $0xb8] sm:$0xff]
        %v946 = vld [vmem:[%s565 + $0xc0] sm:$0xff]
        %v947 = vld [vmem:[%s565 + $0xc8] sm:$0xff]
        %v948 = vld [vmem:[%s565 + $0xd0] sm:$0xff]
        %v949 = vld [vmem:[%s565 + $0xd8] sm:$0xff]
        %v950 = vld [vmem:[%s565 + $0xe0] sm:$0xff]
        %v951 = vld [vmem:[%s565 + $0xe8] sm:$0xff]
        %v952 = vld [vmem:[%s565 + $0xf0] sm:$0xff]
        %v953 = vld [vmem:[%s565 + $0xf8] sm:$0xff]
        %v986 = vunpack.c.l.b16 %v922
        %v987 = vunpack.c.h.b16 %v922
        %v988 = vunpack.c.l.b16 %v923
        %v989 = vunpack.c.h.b16 %v923
        %v990 = vunpack.c.l.b16 %v924
        %v991 = vunpack.c.h.b16 %v924
        %v992 = vunpack.c.l.b16 %v925
        %v993 = vunpack.c.h.b16 %v925
        %v994 = vunpack.c.l.b16 %v926
        %v995 = vunpack.c.h.b16 %v926
        %v996 = vunpack.c.l.b16 %v927
        %v997 = vunpack.c.h.b16 %v927
        %v998 = vunpack.c.l.b16 %v928
        %v999 = vunpack.c.h.b16 %v928
        %v1000 = vunpack.c.l.b16 %v929
        %v1001 = vunpack.c.h.b16 %v929
        %v1002 = vunpack.c.l.b16 %v930
        %v1003 = vunpack.c.h.b16 %v930
        %v1004 = vunpack.c.l.b16 %v931
        %v1005 = vunpack.c.h.b16 %v931
        %v1006 = vunpack.c.l.b16 %v932
        %v1007 = vunpack.c.h.b16 %v932
        %v1008 = vunpack.c.l.b16 %v933
        %v1009 = vunpack.c.h.b16 %v933
        %v1010 = vunpack.c.l.b16 %v934
        %v1011 = vunpack.c.h.b16 %v934
        %v1012 = vunpack.c.l.b16 %v935
        %v1013 = vunpack.c.h.b16 %v935
        %v1014 = vunpack.c.l.b16 %v936
        %v1015 = vunpack.c.h.b16 %v936
        %v1016 = vunpack.c.l.b16 %v937
        %v1017 = vunpack.c.h.b16 %v937
        %v1018 = vunpack.c.l.b16 %v938
        %v1019 = vunpack.c.h.b16 %v938
        %v1020 = vunpack.c.l.b16 %v939
        %v1021 = vunpack.c.h.b16 %v939
        %v1022 = vunpack.c.l.b16 %v940
        %v1023 = vunpack.c.h.b16 %v940
        %v1024 = vunpack.c.l.b16 %v941
        %v1025 = vunpack.c.h.b16 %v941
        %v1026 = vunpack.c.l.b16 %v942
        %v1027 = vunpack.c.h.b16 %v942
        %v1028 = vunpack.c.l.b16 %v943
        %v1029 = vunpack.c.h.b16 %v943
        %v1030 = vunpack.c.l.b16 %v944
        %v1031 = vunpack.c.h.b16 %v944
        %v1032 = vunpack.c.l.b16 %v945
        %v1033 = vunpack.c.h.b16 %v945
        %v1034 = vunpack.c.l.b16 %v946
        %v1035 = vunpack.c.h.b16 %v946
        %v1036 = vunpack.c.l.b16 %v947
        %v1037 = vunpack.c.h.b16 %v947
        %v1038 = vunpack.c.l.b16 %v948
        %v1039 = vunpack.c.h.b16 %v948
        %v1040 = vunpack.c.l.b16 %v949
        %v1041 = vunpack.c.h.b16 %v949
        %v1042 = vunpack.c.l.b16 %v950
        %v1043 = vunpack.c.h.b16 %v950
        %v1044 = vunpack.c.l.b16 %v951
        %v1045 = vunpack.c.h.b16 %v951
        %v1046 = vunpack.c.l.b16 %v952
        %v1047 = vunpack.c.h.b16 %v952
        %v1048 = vunpack.c.l.b16 %v953
        %v1049 = vunpack.c.h.b16 %v953
        %v1050 = vpack.c.b16 %v988, %v986
        %v1051 = vpack.c.b16 %v989, %v987
        %v1052 = vpack.c.b16 %v992, %v990
        %v1053 = vpack.c.b16 %v993, %v991
        %v1054 = vpack.c.b16 %v996, %v994
        %v1055 = vpack.c.b16 %v997, %v995
        %v1056 = vpack.c.b16 %v1000, %v998
        %v1057 = vpack.c.b16 %v1001, %v999
        %v1058 = vpack.c.b16 %v1004, %v1002
        %v1059 = vpack.c.b16 %v1005, %v1003
        %v1060 = vpack.c.b16 %v1008, %v1006
        %v1061 = vpack.c.b16 %v1009, %v1007
        %v1062 = vpack.c.b16 %v1012, %v1010
        %v1063 = vpack.c.b16 %v1013, %v1011
        %v1064 = vpack.c.b16 %v1016, %v1014
        %v1065 = vpack.c.b16 %v1017, %v1015
        %v1066 = vpack.c.b16 %v1020, %v1018
        %v1067 = vpack.c.b16 %v1021, %v1019
        %v1068 = vpack.c.b16 %v1024, %v1022
        %v1069 = vpack.c.b16 %v1025, %v1023
        %v1070 = vpack.c.b16 %v1028, %v1026
        %v1071 = vpack.c.b16 %v1029, %v1027
        %v1072 = vpack.c.b16 %v1032, %v1030
        %v1073 = vpack.c.b16 %v1033, %v1031
        %v1074 = vpack.c.b16 %v1036, %v1034
        %v1075 = vpack.c.b16 %v1037, %v1035
        %v1076 = vpack.c.b16 %v1040, %v1038
        %v1077 = vpack.c.b16 %v1041, %v1039
        %v1078 = vpack.c.b16 %v1044, %v1042
        %v1079 = vpack.c.b16 %v1045, %v1043
        %v1080 = vpack.c.b16 %v1048, %v1046
        %v1081 = vpack.c.b16 %v1049, %v1047
        %1114 = vmatprep.subr.bf16.mxu0 %v1051
        %1115 = vmatpush1.bf16.msra.mxu0 %v1050
        %1116 = vmatprep.subr.bf16.mxu0 %v1053
        %1117 = vmatpush1.bf16.msra.mxu0 %v1052
        %1118 = vmatprep.subr.bf16.mxu0 %v1055
        %1119 = vmatpush1.bf16.msra.mxu0 %v1054
        %1120 = vmatprep.subr.bf16.mxu0 %v1057
        %1121 = vmatpush1.bf16.msra.mxu0 %v1056
        %1122 = vmatprep.subr.bf16.mxu0 %v1059
        %1123 = vmatpush1.bf16.msra.mxu0 %v1058
        %1124 = vmatprep.subr.bf16.mxu0 %v1061
        %1125 = vmatpush1.bf16.msra.mxu0 %v1060
        %1126 = vmatprep.subr.bf16.mxu0 %v1063
        %1127 = vmatpush1.bf16.msra.mxu0 %v1062
        %1128 = vmatprep.subr.bf16.mxu0 %v1065
        %1129 = vmatpush1.bf16.msra.mxu0 %v1064
        %1130 = vmatprep.subr.bf16.mxu0 %v1067
        %1131 = vmatpush1.bf16.msra.mxu0 %v1066
        %1132 = vmatprep.subr.bf16.mxu0 %v1069
        %1133 = vmatpush1.bf16.msra.mxu0 %v1068
        %1134 = vmatprep.subr.bf16.mxu0 %v1071
        %1135 = vmatpush1.bf16.msra.mxu0 %v1070
        %1136 = vmatprep.subr.bf16.mxu0 %v1073
        %1137 = vmatpush1.bf16.msra.mxu0 %v1072
        %1138 = vmatprep.subr.bf16.mxu0 %v1075
        %1139 = vmatpush1.bf16.msra.mxu0 %v1074
        %1140 = vmatprep.subr.bf16.mxu0 %v1077
        %1141 = vmatpush1.bf16.msra.mxu0 %v1076
        %1142 = vmatprep.subr.bf16.mxu0 %v1079
        %1143 = vmatpush1.bf16.msra.mxu0 %v1078
        %1144 = vmatprep.subr.bf16.mxu0 %v1081
        %1145 = vmatpush1.bf16.msra.mxu0 %v1080
        %1146 = vmatprep.mubr.bf16.mxu0 %v686
        %1147 = vmatmul.mubr.bf16.gmra.mrb[0].mxu0 %v685
        %v1148 = vpop.f32.mrb[0].mxu0
        %v1149 = vadd.f32 0.0, %v1148
        %v1150 = vpop.f32.mrb[0].mxu0
        %v1151 = vadd.f32 0.0, %v1150
        %v1152 = vpop.f32.mrb[0].mxu0
        %v1153 = vadd.f32 0.0, %v1152
        %v1154 = vpop.f32.mrb[0].mxu0
        %v1155 = vadd.f32 0.0, %v1154
        %1156 = vdwg.mxu0
        %v1157 = vxor.u32 %v914, 2147483648
        %v1158 = vxor.u32 %v916, 2147483648
        %v1159 = vxor.u32 %v918, 2147483648
        %v1160 = vxor.u32 %v920, 2147483648
        %v1161 = vmul.f32 %v1157, 1.442695
        %v1162 = vpow.pop %v1161
        %v1163 = vmul.f32 %v1158, 1.442695
        %v1164 = vpow.pop %v1163
        %v1165 = vmul.f32 %v1159, 1.442695
        %v1166 = vpow.pop %v1165
        %v1167 = vmul.f32 %v1160, 1.442695
        %v1168 = vpow.pop %v1167
        %v1169 = vadd.f32 %v1162, 1.0
        %v1170 = vadd.f32 %v1164, 1.0
        %v1171 = vadd.f32 %v1166, 1.0
        %v1172 = vadd.f32 %v1168, 1.0
        %v1173 = vrcp.pop %v1169
        %v1174 = vmul.f32 1.0, %v1173
        %v1175 = vrcp.pop %v1170
        %v1176 = vmul.f32 1.0, %v1175
        %v1177 = vrcp.pop %v1171
        %v1178 = vmul.f32 1.0, %v1177
        %v1179 = vrcp.pop %v1172
        %v1180 = vmul.f32 1.0, %v1179
        %v1181 = vmul.f32 %v914, %v1174
        %v1182 = vmul.f32 %v916, %v1176
        %v1183 = vmul.f32 %v918, %v1178
        %v1184 = vmul.f32 %v920, %v1180
        %v1185 = vmul.f32 %v1181, %v1149
        %v1186 = vmul.f32 %v1182, %v1151
        %v1187 = vmul.f32 %v1183, %v1153
        %v1188 = vmul.f32 %v1184, %v1155
        %v1189 = vld [vmem:[#allocation2] sm:$0xff]
        %v1190 = vld [vmem:[#allocation2 + $0x8] sm:$0xff]
        %v1191 = vld [vmem:[#allocation2 + $0x10] sm:$0xff]
        %v1192 = vld [vmem:[#allocation2 + $0x18] sm:$0xff]
        %v1193 = vpack.c.bf16 %v1187, %v1185
        %v1194 = vpack.c.bf16 %v1188, %v1186
        %v1195 = vld [vmem:[%s621] sm:$0xff]
        %v1196 = vld [vmem:[%s621 + $0x8] sm:$0xff]
        %v1197 = vld [vmem:[%s621 + $0x10] sm:$0xff]
        %v1198 = vld [vmem:[%s621 + $0x18] sm:$0xff]
        %v1199 = vld [vmem:[%s621 + $0x20] sm:$0xff]
        %v1200 = vld [vmem:[%s621 + $0x28] sm:$0xff]
        %v1201 = vld [vmem:[%s621 + $0x30] sm:$0xff]
        %v1202 = vld [vmem:[%s621 + $0x38] sm:$0xff]
        %v1203 = vld [vmem:[%s621 + $0x40] sm:$0xff]
        %v1204 = vld [vmem:[%s621 + $0x48] sm:$0xff]
        %v1205 = vld [vmem:[%s621 + $0x50] sm:$0xff]
        %v1206 = vld [vmem:[%s621 + $0x58] sm:$0xff]
        %v1207 = vld [vmem:[%s621 + $0x60] sm:$0xff]
        %v1208 = vld [vmem:[%s621 + $0x68] sm:$0xff]
        %v1209 = vld [vmem:[%s621 + $0x70] sm:$0xff]
        %v1210 = vld [vmem:[%s621 + $0x78] sm:$0xff]
        %v1211 = vld [vmem:[%s621 + $0x80] sm:$0xff]
        %v1212 = vld [vmem:[%s621 + $0x88] sm:$0xff]
        %v1213 = vld [vmem:[%s621 + $0x90] sm:$0xff]
        %v1214 = vld [vmem:[%s621 + $0x98] sm:$0xff]
        %v1215 = vld [vmem:[%s621 + $0xa0] sm:$0xff]
        %v1216 = vld [vmem:[%s621 + $0xa8] sm:$0xff]
        %v1217 = vld [vmem:[%s621 + $0xb0] sm:$0xff]
        %v1218 = vld [vmem:[%s621 + $0xb8] sm:$0xff]
        %v1219 = vld [vmem:[%s621 + $0xc0] sm:$0xff]
        %v1220 = vld [vmem:[%s621 + $0xc8] sm:$0xff]
        %v1221 = vld [vmem:[%s621 + $0xd0] sm:$0xff]
        %v1222 = vld [vmem:[%s621 + $0xd8] sm:$0xff]
        %v1223 = vld [vmem:[%s621 + $0xe0] sm:$0xff]
        %v1224 = vld [vmem:[%s621 + $0xe8] sm:$0xff]
        %v1225 = vld [vmem:[%s621 + $0xf0] sm:$0xff]
        %v1226 = vld [vmem:[%s621 + $0xf8] sm:$0xff]
        %v1259 = vunpack.c.l.b16 %v1195
        %v1260 = vunpack.c.h.b16 %v1195
        %v1261 = vunpack.c.l.b16 %v1196
        %v1262 = vunpack.c.h.b16 %v1196
        %v1263 = vunpack.c.l.b16 %v1197
        %v1264 = vunpack.c.h.b16 %v1197
        %v1265 = vunpack.c.l.b16 %v1198
        %v1266 = vunpack.c.h.b16 %v1198
        %v1267 = vunpack.c.l.b16 %v1199
        %v1268 = vunpack.c.h.b16 %v1199
        %v1269 = vunpack.c.l.b16 %v1200
        %v1270 = vunpack.c.h.b16 %v1200
        %v1271 = vunpack.c.l.b16 %v1201
        %v1272 = vunpack.c.h.b16 %v1201
        %v1273 = vunpack.c.l.b16 %v1202
        %v1274 = vunpack.c.h.b16 %v1202
        %v1275 = vunpack.c.l.b16 %v1203
        %v1276 = vunpack.c.h.b16 %v1203
        %v1277 = vunpack.c.l.b16 %v1204
        %v1278 = vunpack.c.h.b16 %v1204
        %v1279 = vunpack.c.l.b16 %v1205
        %v1280 = vunpack.c.h.b16 %v1205
        %v1281 = vunpack.c.l.b16 %v1206
        %v1282 = vunpack.c.h.b16 %v1206
        %v1283 = vunpack.c.l.b16 %v1207
        %v1284 = vunpack.c.h.b16 %v1207
        %v1285 = vunpack.c.l.b16 %v1208
        %v1286 = vunpack.c.h.b16 %v1208
        %v1287 = vunpack.c.l.b16 %v1209
        %v1288 = vunpack.c.h.b16 %v1209
        %v1289 = vunpack.c.l.b16 %v1210
        %v1290 = vunpack.c.h.b16 %v1210
        %v1291 = vunpack.c.l.b16 %v1211
        %v1292 = vunpack.c.h.b16 %v1211
        %v1293 = vunpack.c.l.b16 %v1212
        %v1294 = vunpack.c.h.b16 %v1212
        %v1295 = vunpack.c.l.b16 %v1213
        %v1296 = vunpack.c.h.b16 %v1213
        %v1297 = vunpack.c.l.b16 %v1214
        %v1298 = vunpack.c.h.b16 %v1214
        %v1299 = vunpack.c.l.b16 %v1215
        %v1300 = vunpack.c.h.b16 %v1215
        %v1301 = vunpack.c.l.b16 %v1216
        %v1302 = vunpack.c.h.b16 %v1216
        %v1303 = vunpack.c.l.b16 %v1217
        %v1304 = vunpack.c.h.b16 %v1217
        %v1305 = vunpack.c.l.b16 %v1218
        %v1306 = vunpack.c.h.b16 %v1218
        %v1307 = vunpack.c.l.b16 %v1219
        %v1308 = vunpack.c.h.b16 %v1219
        %v1309 = vunpack.c.l.b16 %v1220
        %v1310 = vunpack.c.h.b16 %v1220
        %v1311 = vunpack.c.l.b16 %v1221
        %v1312 = vunpack.c.h.b16 %v1221
        %v1313 = vunpack.c.l.b16 %v1222
        %v1314 = vunpack.c.h.b16 %v1222
        %v1315 = vunpack.c.l.b16 %v1223
        %v1316 = vunpack.c.h.b16 %v1223
        %v1317 = vunpack.c.l.b16 %v1224
        %v1318 = vunpack.c.h.b16 %v1224
        %v1319 = vunpack.c.l.b16 %v1225
        %v1320 = vunpack.c.h.b16 %v1225
        %v1321 = vunpack.c.l.b16 %v1226
        %v1322 = vunpack.c.h.b16 %v1226
        %v1323 = vpack.c.b16 %v1261, %v1259
        %v1324 = vpack.c.b16 %v1262, %v1260
        %v1325 = vpack.c.b16 %v1265, %v1263
        %v1326 = vpack.c.b16 %v1266, %v1264
        %v1327 = vpack.c.b16 %v1269, %v1267
        %v1328 = vpack.c.b16 %v1270, %v1268
        %v1329 = vpack.c.b16 %v1273, %v1271
        %v1330 = vpack.c.b16 %v1274, %v1272
        %v1331 = vpack.c.b16 %v1277, %v1275
        %v1332 = vpack.c.b16 %v1278, %v1276
        %v1333 = vpack.c.b16 %v1281, %v1279
        %v1334 = vpack.c.b16 %v1282, %v1280
        %v1335 = vpack.c.b16 %v1285, %v1283
        %v1336 = vpack.c.b16 %v1286, %v1284
        %v1337 = vpack.c.b16 %v1289, %v1287
        %v1338 = vpack.c.b16 %v1290, %v1288
        %v1339 = vpack.c.b16 %v1293, %v1291
        %v1340 = vpack.c.b16 %v1294, %v1292
        %v1341 = vpack.c.b16 %v1297, %v1295
        %v1342 = vpack.c.b16 %v1298, %v1296
        %v1343 = vpack.c.b16 %v1301, %v1299
        %v1344 = vpack.c.b16 %v1302, %v1300
        %v1345 = vpack.c.b16 %v1305, %v1303
        %v1346 = vpack.c.b16 %v1306, %v1304
        %v1347 = vpack.c.b16 %v1309, %v1307
        %v1348 = vpack.c.b16 %v1310, %v1308
        %v1349 = vpack.c.b16 %v1313, %v1311
        %v1350 = vpack.c.b16 %v1314, %v1312
        %v1351 = vpack.c.b16 %v1317, %v1315
        %v1352 = vpack.c.b16 %v1318, %v1316
        %v1353 = vpack.c.b16 %v1321, %v1319
        %v1354 = vpack.c.b16 %v1322, %v1320
        %1387 = vmatprep.subr.bf16.mxu0 %v1324
        %1388 = vmatpush1.bf16.msra.mxu0 %v1323
        %1389 = vmatprep.subr.bf16.mxu0 %v1326
        %1390 = vmatpush1.bf16.msra.mxu0 %v1325
        %1391 = vmatprep.subr.bf16.mxu0 %v1328
        %1392 = vmatpush1.bf16.msra.mxu0 %v1327
        %1393 = vmatprep.subr.bf16.mxu0 %v1330
        %1394 = vmatpush1.bf16.msra.mxu0 %v1329
        %1395 = vmatprep.subr.bf16.mxu0 %v1332
        %1396 = vmatpush1.bf16.msra.mxu0 %v1331
        %1397 = vmatprep.subr.bf16.mxu0 %v1334
        %1398 = vmatpush1.bf16.msra.mxu0 %v1333
        %1399 = vmatprep.subr.bf16.mxu0 %v1336
        %1400 = vmatpush1.bf16.msra.mxu0 %v1335
        %1401 = vmatprep.subr.bf16.mxu0 %v1338
        %1402 = vmatpush1.bf16.msra.mxu0 %v1337
        %1403 = vmatprep.subr.bf16.mxu0 %v1340
        %1404 = vmatpush1.bf16.msra.mxu0 %v1339
        %1405 = vmatprep.subr.bf16.mxu0 %v1342
        %1406 = vmatpush1.bf16.msra.mxu0 %v1341
        %1407 = vmatprep.subr.bf16.mxu0 %v1344
        %1408 = vmatpush1.bf16.msra.mxu0 %v1343
        %1409 = vmatprep.subr.bf16.mxu0 %v1346
        %1410 = vmatpush1.bf16.msra.mxu0 %v1345
        %1411 = vmatprep.subr.bf16.mxu0 %v1348
        %1412 = vmatpush1.bf16.msra.mxu0 %v1347
        %1413 = vmatprep.subr.bf16.mxu0 %v1350
        %1414 = vmatpush1.bf16.msra.mxu0 %v1349
        %1415 = vmatprep.subr.bf16.mxu0 %v1352
        %1416 = vmatpush1.bf16.msra.mxu0 %v1351
        %1417 = vmatprep.subr.bf16.mxu0 %v1354
        %1418 = vmatpush1.bf16.msra.mxu0 %v1353
        %1419 = vmatprep.mubr.bf16.mxu0 %v1194
        %1420 = vmatmul.mubr.bf16.gmra.mrb[0].mxu0 %v1193
        %v1421 = vpop.f32.mrb[0].mxu0
        %v1422 = vadd.f32 0.0, %v1421
        %v1423 = vpop.f32.mrb[0].mxu0
        %v1424 = vadd.f32 0.0, %v1423
        %v1425 = vpop.f32.mrb[0].mxu0
        %v1426 = vadd.f32 0.0, %v1425
        %v1427 = vpop.f32.mrb[0].mxu0
        %v1428 = vadd.f32 0.0, %v1427
        %1429 = vdwg.mxu0
        %v1430 = vadd.f32 %v1189, %v1422
        %v1431 = vadd.f32 %v1190, %v1424
        %v1432 = vadd.f32 %v1191, %v1426
        %v1433 = vadd.f32 %v1192, %v1428
        %1434 = vst [vmem:[#allocation2] sm:$0xff] %v1430
        %1435 = vst [vmem:[#allocation2 + $0x8] sm:$0xff] %v1431
        %1436 = vst [vmem:[#allocation2 + $0x10] sm:$0xff] %v1432
        %1437 = vst [vmem:[#allocation2 + $0x18] sm:$0xff] %v1433
        %p1438 = scmp.eq.s32.totalorder %s21, 1
        // Predicated region
        $region121: #{forward.15} parent=107 // pred_check
          %p1439 = pneg %p1438
        $region122: #{forward.15} parent=107 // pred_check_branch
          %1441 = sbr.rel (%p1439) target = $region124
        $region123: #{forward.15} parent=107 // pred_region
          %v1442 = vld [vmem:[%s612] sm:$0xff]
          %v1443 = vld [vmem:[%s612 + $0x8] sm:$0xff]
          %v1444 = vunpack.c.l.bf16 %v1442
          %v1445 = vunpack.c.h.bf16 %v1442
          %v1446 = vunpack.c.l.bf16 %v1443
          %v1447 = vunpack.c.h.bf16 %v1443
          %v1448 = vld [vmem:[#allocation2] sm:$0xff]
          %v1449 = vld [vmem:[#allocation2 + $0x8] sm:$0xff]
          %v1450 = vld [vmem:[#allocation2 + $0x10] sm:$0xff]
          %v1451 = vld [vmem:[#allocation2 + $0x18] sm:$0xff]
          %v1452 = vadd.f32 %v1444, %v1448
          %v1453 = vadd.f32 %v1445, %v1449
          %v1454 = vadd.f32 %v1446, %v1450
          %v1455 = vadd.f32 %v1447, %v1451
          %v1456 = vpack.c.bf16 %v1454, %v1452
          %v1457 = vpack.c.bf16 %v1455, %v1453
          %v1460 = vunpack.c.l.b16 %v1456
          %v1461 = vunpack.c.l.b16 %v1457
          %v1462 = vunpack.c.h.b16 %v1456
          %v1463 = vunpack.c.h.b16 %v1457
          %v1464 = vpack.c.b16 %v1461, %v1460
          %v1465 = vpack.c.b16 %v1463, %v1462
          %1468 = vst [vmem:[%s628] sm:$0xff] %v1464
          %1469 = vst [vmem:[%s628 + $0x8] sm:$0xff] %v1465
        $region124: #{forward.15} parent=107 // pred_fallthru
          _
        %s1470 = smul.u32 2, %s20
        %p1471 = scmp.lt.s32.totalorder %s1470, 1
        %s1472 = scalar_select %p1471, %s1470, 1
        %s1473 = smul.addr %s1472, 2
        %s1474 = smul.addr %s1473, 4
        %s1475 = scalar_lea.vmem %s5, %s1474
        // Predicated region
        $region125: #{forward.15} parent=107 // pred_check
          %p1476 = pneg %p171
        $region126: #{forward.15} parent=107 // pred_check_branch
          %1478 = sbr.rel (%p1476) target = $region128
        $region127: #{forward.15} parent=107 // pred_region
          %s1479 = smul.u32 2, %s20
        $region128: #{forward.15} parent=107 // pred_fallthru
          _
        // Predicated region
        $region129: #{forward.15} parent=107 // pred_check
          %p1480 = pneg %p171
        $region130: #{forward.15} parent=107 // pred_check_branch
          %1482 = sbr.rel (%p1480) target = $region132
        $region131: #{forward.15} parent=107 // pred_region
          %s1483 = smul.u32 2, %s20
          %p1484 = scmp.lt.s32.totalorder %s1483, 1
          %s1485 = scalar_select %p1484, %s1483, 1
          %s1486 = smul.addr %s1485, 2
          %s1487 = smul.addr %s1486, 4
          %s1488 = scalar_lea.vmem %s5, %s1487
        $region132: #{forward.15} parent=107 // pred_fallthru
          _
      $region108: #{forward.15} parent=5 // pred_fallthru
        _
      %p1489 = scmp.le.s32.totalorder 2, %s11
      // Predicated region
      $region133: #{forward.15} parent=5 // pred_check
        %p1490 = pneg %p1489
      $region134: #{forward.15} parent=5 // pred_check_branch
        %1492 = sbr.rel (%p1490) target = $region136
      $region135: #{forward.15} parent=5 // pred_region
        %s1493 = ssub.s32 %s11, 2
      $region136: #{forward.15} parent=5 // pred_fallthru
        _
    $region6: #{forward.15} parent=1 // loop_footer
      %s15 = sadd.s32 1, %s11
    $region7: #{forward.15} parent=1 // loop_footer_branch
      %10 = sbr.rel target = $region3
    $region8: #{forward.15} parent=1 // loop_exit
      _

// kernel: forward.21
$region0: #{forward.21}
  #allocation0 [shape = 'u32[]', space=smem, size = 0x4, offset = 0x4, fixed_abs, tag = 'smem constant byte address 0x4 - core index']
  #allocation1 [shape = 'u32[144,128]{1,0:T(1,128)}', space=vmem, size = 0x12000, scoped, tag = 'internal scratch']
  #allocation2 [shape = 'bf16[16,256]{1,0:T(16,128)(2,1)}', space=vmem, size = 0x2000, scoped, tag = 'scratch operand']
  %s0 = inlined_call_operand.vmem [shape: bf16[16,256], index: 0, kind: input, shape index: {}]
  %s1 = inlined_call_operand.vmem [shape: f32[1,256], index: 1, kind: input, shape index: {}]
  %s2 = inlined_call_operand.vmem [shape: bf16[256,512], index: 2, kind: input, shape index: {}]
  %s3 = inlined_call_operand.hbm [shape: f32[16,512], index: 3, kind: output, shape index: {}]
  %s4 = sld [smem:[#allocation0]]
  $region26: #{forward.21} parent=0
    _
  %s6 = ssub.s32 1, %s4
  %s7 = scalar_select 0, %s6, %s4
  $region1: #{forward.21} parent=0
    #allocation3 [shape = 'u8[32768]{0}', space=vmem, size = 0x8000, scoped, tag = 'output window, operand 0, single buffered']
    #allocation4 [shape = 's32[1]{0}', space=sflag, size = 0x4, scoped, tag = 'scoped memory for forward.21']
    %8 = vsyncpa [#allocation4], 0
    // Predicated region
    $region2: #{forward.21} parent=1 // pred_check
      _
    $region3: #{forward.21} parent=1 // pred_check_branch
      %10 = sbr.rel (0) target = $region5
    $region4: #{forward.21} parent=1 // pred_region
      _
    $region5: #{forward.21} parent=1 // pred_fallthru
      _
    // Predicated region
    $region6: #{forward.21} parent=1 // pred_check
      _
    $region7: #{forward.21} parent=1 // pred_check_branch
      %12 = sbr.rel (0) target = $region9
    $region8: #{forward.21} parent=1 // pred_region
      _
    $region9: #{forward.21} parent=1 // pred_fallthru
      _
    // Predicated region
    $region10: #{forward.21} parent=1 // pred_check
      _
    $region11: #{forward.21} parent=1 // pred_check_branch
      %14 = sbr.rel (0) target = $region13
    $region12: #{forward.21} parent=1 // pred_region
      _
    $region13: #{forward.21} parent=1 // pred_fallthru
      _
    %p15 = scmp.eq.s32.totalorder 0, 0
    // Predicated region
    $region14: #{forward.21} parent=1 // pred_check
      %p16 = pneg %p15
    $region15: #{forward.21} parent=1 // pred_check_branch
      %18 = sbr.rel (%p16) target = $region17
    $region16: #{forward.21} parent=1 // pred_region
      %v19 = vld [vmem:[%s0] sm:$0xff]
      %v20 = vld [vmem:[%s0 + $0x8] sm:$0xff]
      %v21 = vunpack.c.l.bf16 %v19
      %v22 = vunpack.c.h.bf16 %v19
      %v23 = vunpack.c.l.bf16 %v20
      %v24 = vunpack.c.h.bf16 %v20
      %v25 = vmul.f32 %v21, %v21
      %v26 = vmul.f32 %v22, %v22
      %v27 = vmul.f32 %v23, %v23
      %v28 = vmul.f32 %v24, %v24
      %v29 = vadd.f32 %v25, %v26
      %30 = vadd.xlane.f32.xlu0 %v29
      %v31 = vpop.xlane.xlu0 %30
      %v32 = vadd.f32 %v27, %v28
      %33 = vadd.xlane.f32.xlu0 %v32
      %v34 = vpop.xlane.xlu0 %33
      %v35 = vrcp.pop 256.0
      %v36 = vmul.f32 %v31, %v35
      %v37 = vmul.f32 %v34, %v35
      %v38 = vadd.f32 %v36, 1e-06
      %v39 = vadd.f32 %v37, 1e-06
      %v40 = vrsqrt.pop %v38
      %v41 = vrsqrt.pop %v39
      %v42 = vmul.f32 %v21, %v40
      %v43 = vmul.f32 %v22, %v40
      %v44 = vmul.f32 %v23, %v41
      %v45 = vmul.f32 %v24, %v41
      %v46 = vld [vmem:[%s1] sm:$0x3]
      %v48 = vlaneseq
      %v49 = vshrl.u32 %v48, 7
      %v50 = vsub.s32 0, %v49
      %v51 = vrot.slane %v46, %v50
      %v52 = vlaneseq
      %v53 = vshrl.u32 %v52, 7
      %v54 = vsub.s32 1, %v53
      %v55 = vrot.slane %v46, %v54
      %v58 = vmul.f32 %v42, %v51
      %v59 = vmul.f32 %v43, %v55
      %v60 = vmul.f32 %v44, %v51
      %v61 = vmul.f32 %v45, %v55
      %v62 = vpack.c.bf16 %v60, %v58
      %v63 = vpack.c.bf16 %v61, %v59
      %64 = vst [vmem:[#allocation2] sm:$0xff] %v62
      %65 = vst [vmem:[#allocation2 + $0x8] sm:$0xff] %v63
    $region17: #{forward.21} parent=1 // pred_fallthru
      _
    %v66 = vld [vmem:[#allocation2] sm:$0xff]
    %v67 = vld [vmem:[#allocation2 + $0x8] sm:$0xff]
    %v68 = vld [vmem:[%s2] sm:$0xff]
    %v69 = vld [vmem:[%s2 + $0x8] sm:$0xff]
    %v70 = vld [vmem:[%s2 + $0x10] sm:$0xff]
    %v71 = vld [vmem:[%s2 + $0x18] sm:$0xff]
    %v72 = vld [vmem:[%s2 + $0x20] sm:$0xff]
    %v73 = vld [vmem:[%s2 + $0x28] sm:$0xff]
    %v74 = vld [vmem:[%s2 + $0x30] sm:$0xff]
    %v75 = vld [vmem:[%s2 + $0x38] sm:$0xff]
    %v76 = vld [vmem:[%s2 + $0x40] sm:$0xff]
    %v77 = vld [vmem:[%s2 + $0x48] sm:$0xff]
    %v78 = vld [vmem:[%s2 + $0x50] sm:$0xff]
    %v79 = vld [vmem:[%s2 + $0x58] sm:$0xff]
    %v80 = vld [vmem:[%s2 + $0x60] sm:$0xff]
    %v81 = vld [vmem:[%s2 + $0x68] sm:$0xff]
    %v82 = vld [vmem:[%s2 + $0x70] sm:$0xff]
    %v83 = vld [vmem:[%s2 + $0x78] sm:$0xff]
    %v84 = vld [vmem:[%s2 + $0x80] sm:$0xff]
    %v85 = vld [vmem:[%s2 + $0x88] sm:$0xff]
    %v86 = vld [vmem:[%s2 + $0x90] sm:$0xff]
    %v87 = vld [vmem:[%s2 + $0x98] sm:$0xff]
    %v88 = vld [vmem:[%s2 + $0xa0] sm:$0xff]
    %v89 = vld [vmem:[%s2 + $0xa8] sm:$0xff]
    %v90 = vld [vmem:[%s2 + $0xb0] sm:$0xff]
    %v91 = vld [vmem:[%s2 + $0xb8] sm:$0xff]
    %v92 = vld [vmem:[%s2 + $0xc0] sm:$0xff]
    %v93 = vld [vmem:[%s2 + $0xc8] sm:$0xff]
    %v94 = vld [vmem:[%s2 + $0xd0] sm:$0xff]
    %v95 = vld [vmem:[%s2 + $0xd8] sm:$0xff]
    %v96 = vld [vmem:[%s2 + $0xe0] sm:$0xff]
    %v97 = vld [vmem:[%s2 + $0xe8] sm:$0xff]
    %v98 = vld [vmem:[%s2 + $0xf0] sm:$0xff]
    %v99 = vld [vmem:[%s2 + $0xf8] sm:$0xff]
    %v100 = vld [vmem:[%s2 + $0x100] sm:$0xff]
    %v101 = vld [vmem:[%s2 + $0x108] sm:$0xff]
    %v102 = vld [vmem:[%s2 + $0x110] sm:$0xff]
    %v103 = vld [vmem:[%s2 + $0x118] sm:$0xff]
    %v104 = vld [vmem:[%s2 + $0x120] sm:$0xff]
    %v105 = vld [vmem:[%s2 + $0x128] sm:$0xff]
    %v106 = vld [vmem:[%s2 + $0x130] sm:$0xff]
    %v107 = vld [vmem:[%s2 + $0x138] sm:$0xff]
    %v108 = vld [vmem:[%s2 + $0x140] sm:$0xff]
    %v109 = vld [vmem:[%s2 + $0x148] sm:$0xff]
    %v110 = vld [vmem:[%s2 + $0x150] sm:$0xff]
    %v111 = vld [vmem:[%s2 + $0x158] sm:$0xff]
    %v112 = vld [vmem:[%s2 + $0x160] sm:$0xff]
    %v113 = vld [vmem:[%s2 + $0x168] sm:$0xff]
    %v114 = vld [vmem:[%s2 + $0x170] sm:$0xff]
    %v115 = vld [vmem:[%s2 + $0x178] sm:$0xff]
    %v116 = vld [vmem:[%s2 + $0x180] sm:$0xff]
    %v117 = vld [vmem:[%s2 + $0x188] sm:$0xff]
    %v118 = vld [vmem:[%s2 + $0x190] sm:$0xff]
    %v119 = vld [vmem:[%s2 + $0x198] sm:$0xff]
    %v120 = vld [vmem:[%s2 + $0x1a0] sm:$0xff]
    %v121 = vld [vmem:[%s2 + $0x1a8] sm:$0xff]
    %v122 = vld [vmem:[%s2 + $0x1b0] sm:$0xff]
    %v123 = vld [vmem:[%s2 + $0x1b8] sm:$0xff]
    %v124 = vld [vmem:[%s2 + $0x1c0] sm:$0xff]
    %v125 = vld [vmem:[%s2 + $0x1c8] sm:$0xff]
    %v126 = vld [vmem:[%s2 + $0x1d0] sm:$0xff]
    %v127 = vld [vmem:[%s2 + $0x1d8] sm:$0xff]
    %v128 = vld [vmem:[%s2 + $0x1e0] sm:$0xff]
    %v129 = vld [vmem:[%s2 + $0x1e8] sm:$0xff]
    %v130 = vld [vmem:[%s2 + $0x1f0] sm:$0xff]
    %v131 = vld [vmem:[%s2 + $0x1f8] sm:$0xff]
    %v196 = vunpack.c.l.b16 %v68
    %v197 = vunpack.c.h.b16 %v68
    %v198 = vunpack.c.l.b16 %v69
    %v199 = vunpack.c.h.b16 %v69
    %v200 = vunpack.c.l.b16 %v70
    %v201 = vunpack.c.h.b16 %v70
    %v202 = vunpack.c.l.b16 %v71
    %v203 = vunpack.c.h.b16 %v71
    %v204 = vunpack.c.l.b16 %v72
    %v205 = vunpack.c.h.b16 %v72
    %v206 = vunpack.c.l.b16 %v73
    %v207 = vunpack.c.h.b16 %v73
    %v208 = vunpack.c.l.b16 %v74
    %v209 = vunpack.c.h.b16 %v74
    %v210 = vunpack.c.l.b16 %v75
    %v211 = vunpack.c.h.b16 %v75
    %v212 = vunpack.c.l.b16 %v76
    %v213 = vunpack.c.h.b16 %v76
    %v214 = vunpack.c.l.b16 %v77
    %v215 = vunpack.c.h.b16 %v77
    %v216 = vunpack.c.l.b16 %v78
    %v217 = vunpack.c.h.b16 %v78
    %v218 = vunpack.c.l.b16 %v79
    %v219 = vunpack.c.h.b16 %v79
    %v220 = vunpack.c.l.b16 %v80
    %v221 = vunpack.c.h.b16 %v80
    %v222 = vunpack.c.l.b16 %v81
    %v223 = vunpack.c.h.b16 %v81
    %v224 = vunpack.c.l.b16 %v82
    %v225 = vunpack.c.h.b16 %v82
    %v226 = vunpack.c.l.b16 %v83
    %v227 = vunpack.c.h.b16 %v83
    %v228 = vunpack.c.l.b16 %v84
    %v229 = vunpack.c.h.b16 %v84
    %v230 = vunpack.c.l.b16 %v85
    %v231 = vunpack.c.h.b16 %v85
    %v232 = vunpack.c.l.b16 %v86
    %v233 = vunpack.c.h.b16 %v86
    %v234 = vunpack.c.l.b16 %v87
    %v235 = vunpack.c.h.b16 %v87
    %v236 = vunpack.c.l.b16 %v88
    %v237 = vunpack.c.h.b16 %v88
    %v238 = vunpack.c.l.b16 %v89
    %v239 = vunpack.c.h.b16 %v89
    %v240 = vunpack.c.l.b16 %v90
    %v241 = vunpack.c.h.b16 %v90
    %v242 = vunpack.c.l.b16 %v91
    %v243 = vunpack.c.h.b16 %v91
    %v244 = vunpack.c.l.b16 %v92
    %v245 = vunpack.c.h.b16 %v92
    %v246 = vunpack.c.l.b16 %v93
    %v247 = vunpack.c.h.b16 %v93
    %v248 = vunpack.c.l.b16 %v94
    %v249 = vunpack.c.h.b16 %v94
    %v250 = vunpack.c.l.b16 %v95
    %v251 = vunpack.c.h.b16 %v95
    %v252 = vunpack.c.l.b16 %v96
    %v253 = vunpack.c.h.b16 %v96
    %v254 = vunpack.c.l.b16 %v97
    %v255 = vunpack.c.h.b16 %v97
    %v256 = vunpack.c.l.b16 %v98
    %v257 = vunpack.c.h.b16 %v98
    %v258 = vunpack.c.l.b16 %v99
    %v259 = vunpack.c.h.b16 %v99
    %v260 = vunpack.c.l.b16 %v100
    %v261 = vunpack.c.h.b16 %v100
    %v262 = vunpack.c.l.b16 %v101
    %v263 = vunpack.c.h.b16 %v101
    %v264 = vunpack.c.l.b16 %v102
    %v265 = vunpack.c.h.b16 %v102
    %v266 = vunpack.c.l.b16 %v103
    %v267 = vunpack.c.h.b16 %v103
    %v268 = vunpack.c.l.b16 %v104
    %v269 = vunpack.c.h.b16 %v104
    %v270 = vunpack.c.l.b16 %v105
    %v271 = vunpack.c.h.b16 %v105
    %v272 = vunpack.c.l.b16 %v106
    %v273 = vunpack.c.h.b16 %v106
    %v274 = vunpack.c.l.b16 %v107
    %v275 = vunpack.c.h.b16 %v107
    %v276 = vunpack.c.l.b16 %v108
    %v277 = vunpack.c.h.b16 %v108
    %v278 = vunpack.c.l.b16 %v109
    %v279 = vunpack.c.h.b16 %v109
    %v280 = vunpack.c.l.b16 %v110
    %v281 = vunpack.c.h.b16 %v110
    %v282 = vunpack.c.l.b16 %v111
    %v283 = vunpack.c.h.b16 %v111
    %v284 = vunpack.c.l.b16 %v112
    %v285 = vunpack.c.h.b16 %v112
    %v286 = vunpack.c.l.b16 %v113
    %v287 = vunpack.c.h.b16 %v113
    %v288 = vunpack.c.l.b16 %v114
    %v289 = vunpack.c.h.b16 %v114
    %v290 = vunpack.c.l.b16 %v115
    %v291 = vunpack.c.h.b16 %v115
    %v292 = vunpack.c.l.b16 %v116
    %v293 = vunpack.c.h.b16 %v116
    %v294 = vunpack.c.l.b16 %v117
    %v295 = vunpack.c.h.b16 %v117
    %v296 = vunpack.c.l.b16 %v118
    %v297 = vunpack.c.h.b16 %v118
    %v298 = vunpack.c.l.b16 %v119
    %v299 = vunpack.c.h.b16 %v119
    %v300 = vunpack.c.l.b16 %v120
    %v301 = vunpack.c.h.b16 %v120
    %v302 = vunpack.c.l.b16 %v121
    %v303 = vunpack.c.h.b16 %v121
    %v304 = vunpack.c.l.b16 %v122
    %v305 = vunpack.c.h.b16 %v122
    %v306 = vunpack.c.l.b16 %v123
    %v307 = vunpack.c.h.b16 %v123
    %v308 = vunpack.c.l.b16 %v124
    %v309 = vunpack.c.h.b16 %v124
    %v310 = vunpack.c.l.b16 %v125
    %v311 = vunpack.c.h.b16 %v125
    %v312 = vunpack.c.l.b16 %v126
    %v313 = vunpack.c.h.b16 %v126
    %v314 = vunpack.c.l.b16 %v127
    %v315 = vunpack.c.h.b16 %v127
    %v316 = vunpack.c.l.b16 %v128
    %v317 = vunpack.c.h.b16 %v128
    %v318 = vunpack.c.l.b16 %v129
    %v319 = vunpack.c.h.b16 %v129
    %v320 = vunpack.c.l.b16 %v130
    %v321 = vunpack.c.h.b16 %v130
    %v322 = vunpack.c.l.b16 %v131
    %v323 = vunpack.c.h.b16 %v131
    %v324 = vpack.c.b16 %v200, %v196
    %v325 = vpack.c.b16 %v201, %v197
    %v326 = vpack.c.b16 %v202, %v198
    %v327 = vpack.c.b16 %v203, %v199
    %v328 = vpack.c.b16 %v208, %v204
    %v329 = vpack.c.b16 %v209, %v205
    %v330 = vpack.c.b16 %v210, %v206
    %v331 = vpack.c.b16 %v211, %v207
    %v332 = vpack.c.b16 %v216, %v212
    %v333 = vpack.c.b16 %v217, %v213
    %v334 = vpack.c.b16 %v218, %v214
    %v335 = vpack.c.b16 %v219, %v215
    %v336 = vpack.c.b16 %v224, %v220
    %v337 = vpack.c.b16 %v225, %v221
    %v338 = vpack.c.b16 %v226, %v222
    %v339 = vpack.c.b16 %v227, %v223
    %v340 = vpack.c.b16 %v232, %v228
    %v341 = vpack.c.b16 %v233, %v229
    %v342 = vpack.c.b16 %v234, %v230
    %v343 = vpack.c.b16 %v235, %v231
    %v344 = vpack.c.b16 %v240, %v236
    %v345 = vpack.c.b16 %v241, %v237
    %v346 = vpack.c.b16 %v242, %v238
    %v347 = vpack.c.b16 %v243, %v239
    %v348 = vpack.c.b16 %v248, %v244
    %v349 = vpack.c.b16 %v249, %v245
    %v350 = vpack.c.b16 %v250, %v246
    %v351 = vpack.c.b16 %v251, %v247
    %v352 = vpack.c.b16 %v256, %v252
    %v353 = vpack.c.b16 %v257, %v253
    %v354 = vpack.c.b16 %v258, %v254
    %v355 = vpack.c.b16 %v259, %v255
    %v356 = vpack.c.b16 %v264, %v260
    %v357 = vpack.c.b16 %v265, %v261
    %v358 = vpack.c.b16 %v266, %v262
    %v359 = vpack.c.b16 %v267, %v263
    %v360 = vpack.c.b16 %v272, %v268
    %v361 = vpack.c.b16 %v273, %v269
    %v362 = vpack.c.b16 %v274, %v270
    %v363 = vpack.c.b16 %v275, %v271
    %v364 = vpack.c.b16 %v280, %v276
    %v365 = vpack.c.b16 %v281, %v277
    %v366 = vpack.c.b16 %v282, %v278
    %v367 = vpack.c.b16 %v283, %v279
    %v368 = vpack.c.b16 %v288, %v284
    %v369 = vpack.c.b16 %v289, %v285
    %v370 = vpack.c.b16 %v290, %v286
    %v371 = vpack.c.b16 %v291, %v287
    %v372 = vpack.c.b16 %v296, %v292
    %v373 = vpack.c.b16 %v297, %v293
    %v374 = vpack.c.b16 %v298, %v294
    %v375 = vpack.c.b16 %v299, %v295
    %v376 = vpack.c.b16 %v304, %v300
    %v377 = vpack.c.b16 %v305, %v301
    %v378 = vpack.c.b16 %v306, %v302
    %v379 = vpack.c.b16 %v307, %v303
    %v380 = vpack.c.b16 %v312, %v308
    %v381 = vpack.c.b16 %v313, %v309
    %v382 = vpack.c.b16 %v314, %v310
    %v383 = vpack.c.b16 %v315, %v311
    %v384 = vpack.c.b16 %v320, %v316
    %v385 = vpack.c.b16 %v321, %v317
    %v386 = vpack.c.b16 %v322, %v318
    %v387 = vpack.c.b16 %v323, %v319
    %452 = vmatprep.subr.bf16.mxu0 %v325
    %453 = vmatpush1.bf16.msra.mxu0 %v324
    %454 = vmatprep.subr.bf16.mxu0 %v329
    %455 = vmatpush1.bf16.msra.mxu0 %v328
    %456 = vmatprep.subr.bf16.mxu0 %v333
    %457 = vmatpush1.bf16.msra.mxu0 %v332
    %458 = vmatprep.subr.bf16.mxu0 %v337
    %459 = vmatpush1.bf16.msra.mxu0 %v336
    %460 = vmatprep.subr.bf16.mxu0 %v341
    %461 = vmatpush1.bf16.msra.mxu0 %v340
    %462 = vmatprep.subr.bf16.mxu0 %v345
    %463 = vmatpush1.bf16.msra.mxu0 %v344
    %464 = vmatprep.subr.bf16.mxu0 %v349
    %465 = vmatpush1.bf16.msra.mxu0 %v348
    %466 = vmatprep.subr.bf16.mxu0 %v353
    %467 = vmatpush1.bf16.msra.mxu0 %v352
    %468 = vmatprep.subr.bf16.mxu0 %v357
    %469 = vmatpush1.bf16.msra.mxu0 %v356
    %470 = vmatprep.subr.bf16.mxu0 %v361
    %471 = vmatpush1.bf16.msra.mxu0 %v360
    %472 = vmatprep.subr.bf16.mxu0 %v365
    %473 = vmatpush1.bf16.msra.mxu0 %v364
    %474 = vmatprep.subr.bf16.mxu0 %v369
    %475 = vmatpush1.bf16.msra.mxu0 %v368
    %476 = vmatprep.subr.bf16.mxu0 %v373
    %477 = vmatpush1.bf16.msra.mxu0 %v372
    %478 = vmatprep.subr.bf16.mxu0 %v377
    %479 = vmatpush1.bf16.msra.mxu0 %v376
    %480 = vmatprep.subr.bf16.mxu0 %v381
    %481 = vmatpush1.bf16.msra.mxu0 %v380
    %482 = vmatprep.subr.bf16.mxu0 %v385
    %483 = vmatpush1.bf16.msra.mxu0 %v384
    %484 = vmatprep.mubr.bf16.mxu0 %v67
    %485 = vmatmul.mubr.bf16.gmra.mrb[0].mxu0 %v66
    %v486 = vpop.f32.mrb[0].mxu0
    %v487 = vadd.f32 0.0, %v486
    %v488 = vpop.f32.mrb[0].mxu0
    %v489 = vadd.f32 0.0, %v488
    %v490 = vpop.f32.mrb[0].mxu0
    %v491 = vadd.f32 0.0, %v490
    %v492 = vpop.f32.mrb[0].mxu0
    %v493 = vadd.f32 0.0, %v492
    %494 = vdwg.mxu0
    %495 = vmatprep.subr.bf16.mxu0 %v327
    %496 = vmatpush1.bf16.msra.mxu0 %v326
    %497 = vmatprep.subr.bf16.mxu0 %v331
    %498 = vmatpush1.bf16.msra.mxu0 %v330
    %499 = vmatprep.subr.bf16.mxu0 %v335
    %500 = vmatpush1.bf16.msra.mxu0 %v334
    %501 = vmatprep.subr.bf16.mxu0 %v339
    %502 = vmatpush1.bf16.msra.mxu0 %v338
    %503 = vmatprep.subr.bf16.mxu0 %v343
    %504 = vmatpush1.bf16.msra.mxu0 %v342
    %505 = vmatprep.subr.bf16.mxu0 %v347
    %506 = vmatpush1.bf16.msra.mxu0 %v346
    %507 = vmatprep.subr.bf16.mxu0 %v351
    %508 = vmatpush1.bf16.msra.mxu0 %v350
    %509 = vmatprep.subr.bf16.mxu0 %v355
    %510 = vmatpush1.bf16.msra.mxu0 %v354
    %511 = vmatprep.subr.bf16.mxu0 %v359
    %512 = vmatpush1.bf16.msra.mxu0 %v358
    %513 = vmatprep.subr.bf16.mxu0 %v363
    %514 = vmatpush1.bf16.msra.mxu0 %v362
    %515 = vmatprep.subr.bf16.mxu0 %v367
    %516 = vmatpush1.bf16.msra.mxu0 %v366
    %517 = vmatprep.subr.bf16.mxu0 %v371
    %518 = vmatpush1.bf16.msra.mxu0 %v370
    %519 = vmatprep.subr.bf16.mxu0 %v375
    %520 = vmatpush1.bf16.msra.mxu0 %v374
    %521 = vmatprep.subr.bf16.mxu0 %v379
    %522 = vmatpush1.bf16.msra.mxu0 %v378
    %523 = vmatprep.subr.bf16.mxu0 %v383
    %524 = vmatpush1.bf16.msra.mxu0 %v382
    %525 = vmatprep.subr.bf16.mxu0 %v387
    %526 = vmatpush1.bf16.msra.mxu0 %v386
    %527 = vmatprep.mubr.bf16.mxu0 %v67
    %528 = vmatmul.mubr.bf16.gmra.mrb[0].mxu0 %v66
    %v529 = vpop.f32.mrb[0].mxu0
    %v530 = vadd.f32 0.0, %v529
    %v531 = vpop.f32.mrb[0].mxu0
    %v532 = vadd.f32 0.0, %v531
    %v533 = vpop.f32.mrb[0].mxu0
    %v534 = vadd.f32 0.0, %v533
    %v535 = vpop.f32.mrb[0].mxu0
    %v536 = vadd.f32 0.0, %v535
    %537 = vdwg.mxu0
    %538 = vst [vmem:[#allocation3] sm:$0xff] %v487
    %539 = vst [vmem:[#allocation3 + $0x8] sm:$0xff] %v489
    %540 = vst [vmem:[#allocation3 + $0x10] sm:$0xff] %v530
    %541 = vst [vmem:[#allocation3 + $0x18] sm:$0xff] %v532
    %542 = vst [vmem:[#allocation3 + $0x20] sm:$0xff] %v491
    %543 = vst [vmem:[#allocation3 + $0x28] sm:$0xff] %v493
    %544 = vst [vmem:[#allocation3 + $0x30] sm:$0xff] %v534
    %545 = vst [vmem:[#allocation3 + $0x38] sm:$0xff] %v536
    // Predicated region
    $region18: #{forward.21} parent=1 // pred_check
      _
    $region19: #{forward.21} parent=1 // pred_check_branch
      %547 = sbr.rel (0) target = $region21
    $region20: #{forward.21} parent=1 // pred_region
      %s549 = ssub.s32 1024, 1024
      %550 = vsyncadd [#allocation4], %s549
      %s551 = sshll.u32 [#allocation3], 4
      %s552 = int_to_ptr.vmem [resolvable:$true] %s551
      %557 = dma.vmem_to_hbm [thread:$0]  %s552, 1024, %s3, [#allocation4], 512, 512, 32
    $region21: #{forward.21} parent=1 // pred_fallthru
      _
    // Predicated region
    $region22: #{forward.21} parent=1 // pred_check
      _
    $region23: #{forward.21} parent=1 // pred_check_branch
      %559 = sbr.rel (0) target = $region25
    $region24: #{forward.21} parent=1 // pred_region
      %560 = dma.done [#allocation4], 1024
    $region25: #{forward.21} parent=1 // pred_fallthru
      _
    %561 = vsyncpa [#allocation4], 1

</llo_original>
